<compile_context>
chip_gen: v7x
topology: tpu7x:2x2x1
jax: 0.10.0
libtpu: 0.0.40
codegen_flags: <defaults>
</compile_context>

<pallas_src>
import jax
import jax.numpy as jnp
from jax import lax
from jax.experimental import pallas as pl
from jax.experimental.pallas import tpu as pltpu


def _round_up(x, m):
    return ((x + m - 1) // m) * m


def _silu(x):
    # sigmoid(x) = 0.5*(tanh(x/2)+1): one EUP op per lane instead of exp+recip.
    return x * 0.5 * (jnp.tanh(x * 0.5) + 1.0)


def _vmem_capacity_bytes():
    try:
        return int(pltpu.get_tpu_info().vmem_capacity_bytes)
    except Exception:
        return 64 * 1024 * 1024        # conservative (v7x per-core VMEM)


def _elementwise_dtype():
    # v5e and older have no bf16 VPU/EUP; keep the elementwise path in f32 there.
    try:
        kind = jax.devices()[0].device_kind.lower()
    except Exception:
        kind = ""
    if any(v in kind for v in ("v2", "v3", "v4", "v5")):
        return jnp.float32
    return jnp.bfloat16


# --------------------------------------------------------------------------- #
# Kernel
# --------------------------------------------------------------------------- #
def _make_kernel(elem_dtype, n_real, n_pad):
    pad_j = (n_pad != n_real)

    def kernel(feats_i_ref, coors_i_ref, feats_j_ref, coors_j_ref,
               wi_ref, wj_ref, wd_ref, eb1_ref,
               ew2_ref, eb2_ref,
               cw1_ref, cb1_ref, cw2_ref, cb2_ref,
               nw1f_ref, nw1m_ref, nb1_ref, nw2_ref, nb2_ref,
               feats_out_ref, coors_out_ref,
               pi_scr, mi_acc, wsum_acc, cdelta_acc):
        j = pl.program_id(2)
        nj = pl.num_programs(2)
        ti = feats_i_ref.shape[1]
        tj = feats_j_ref.shape[1]

        # ---- per-(batch, i-block) init: cache pi = f_i @ W_i + b1, zero accumulators
        @pl.when(j == 0)
        def _():
            fi = feats_i_ref[0].astype(jnp.bfloat16)
            pi = jnp.dot(fi, wi_ref[...],
                         preferred_element_type=jnp.float32) + eb1_ref[...]
            pi_scr[...] = pi.astype(elem_dtype)
            mi_acc[...] = jnp.zeros_like(mi_acc)
            wsum_acc[...] = jnp.zeros_like(wsum_acc)
            cdelta_acc[...] = jnp.zeros_like(cdelta_acc)

        feats_j = feats_j_ref[0]                      # (tj, DP)  bf16 stream
        coors_i = coors_i_ref[0]                      # (ti, CP)  f32
        coors_j = coors_j_ref[0]                      # (tj, CP)  f32

        # ---- decomposed first edge linear, j-side projection
        pj = jnp.dot(feats_j, wj_ref[...],
                     preferred_element_type=jnp.float32).astype(elem_dtype)   # (tj, H1P)

        # ---- squared pairwise distances via the Gram identity (no (ti,tj,3) tensor)
        ci2 = jnp.sum(coors_i * coors_i, axis=-1, keepdims=True)              # (ti, 1)
        cj2 = jnp.sum(coors_j * coors_j, axis=-1, keepdims=True)              # (tj, 1)
        gram = lax.dot_general(coors_i, coors_j, (((1,), (1,)), ((), ())),
                               preferred_element_type=jnp.float32)            # (ti, tj)
        rel_dist = jnp.maximum(ci2 + cj2.T - 2.0 * gram, 0.0).astype(elem_dtype)

        # ---- edge MLP (elementwise path in elem_dtype: bf16 on v6e/v7x, f32 on v5e)
        # TODO(synk): rel_dist[:, :, None] implies one lanes->sublanes relayout of
        #             (ti,tj) scalars per step; tiny vs the (ti*tj,H1P) elementwise work.
        pre1 = (pi_scr[...][:, None, :] + pj[None, :, :]
                + rel_dist[:, :, None] * wd_ref[...][None, :, :])             # (ti,tj,H1P)
        h = _silu(pre1).reshape(ti * tj, -1)
        m_pre = jnp.dot(h.astype(jnp.bfloat16), ew2_ref[...],
                        preferred_element_type=jnp.float32) + eb2_ref[...]
        m_ij = _silu(m_pre.astype(elem_dtype))                                # (ti*tj, MP)

        # ---- coordinate weights (width-1 output via VPU lane-reduce, not the MXU)
        c_pre = jnp.dot(m_ij.astype(jnp.bfloat16), cw1_ref[...],
                        preferred_element_type=jnp.float32) + cb1_ref[...]
        ch = _silu(c_pre.astype(elem_dtype))                                  # (ti*tj, HCP)
        coor_w = (jnp.sum((ch * cw2_ref[...]).astype(jnp.float32), axis=-1)
                  .reshape(ti, tj) + cb2_ref[...])                            # (ti, tj) f32

        m3 = m_ij.reshape(ti, tj, -1)
        if pad_j:
            # Zero the contribution of zero-padded j rows (they are not real nodes).
            j_idx = j * tj + lax.broadcasted_iota(jnp.int32, (1, tj), 1)
            valid = (j_idx < n_real)                                          # (1, tj)
            coor_w = coor_w * valid.astype(coor_w.dtype)
            m3 = m3 * valid.astype(m3.dtype)[:, :, None]

        # ---- accumulate over j blocks (f32 accumulators)
        mi_acc[...] += jnp.sum(m3.astype(jnp.float32), axis=1)                # (ti, MP)
        wsum_acc[...] += jnp.sum(coor_w, axis=-1, keepdims=True)              # (ti, 1)
        cdelta_acc[...] += jnp.dot(coor_w, coors_j,
                                   preferred_element_type=jnp.float32)        # (ti, CP)

        # ---- finalize on the last j block
        @pl.when(j == nj - 1)
        def _():
            feats_i = feats_i_ref[0]                                          # (ti, DP) f32
            coors_out_ref[0] = (coors_i + wsum_acc[...] * coors_i
                                - cdelta_acc[...]).astype(coors_out_ref.dtype)
            nh = _silu(jnp.dot(feats_i.astype(jnp.bfloat16), nw1f_ref[...],
                               preferred_element_type=jnp.float32)
                       + jnp.dot(mi_acc[...].astype(jnp.bfloat16), nw1m_ref[...],
                                 preferred_element_type=jnp.float32)
                       + nb1_ref[...])                                        # (ti, HNP)
            node_out = jnp.dot(nh.astype(jnp.bfloat16), nw2_ref[...],
                               preferred_element_type=jnp.float32) + nb2_ref[...]
            feats_out_ref[0] = (node_out + feats_i).astype(feats_out_ref.dtype)

    return kernel


# --------------------------------------------------------------------------- #
# Parameters
# --------------------------------------------------------------------------- #
def make_egnn_params(key, dim, m_dim):
    """Logical EGNN weights (nn.Linear layout: (in, out)), point_vs default config."""
    edge_in = 2 * dim + 1
    edge_hidden = edge_in * 2
    coors_hidden = m_dim * 4
    node_hidden = dim * 2
    ks = jax.random.split(key, 12)

    def lin(kw, kb, fan_in, fan_out):
        s = 1.0 / jnp.sqrt(fan_in)
        w = jax.random.uniform(kw, (fan_in, fan_out), jnp.float32, -s, s)
        b = jax.random.uniform(kb, (1, fan_out), jnp.float32, -s, s)
        return w, b

    ew1, eb1 = lin(ks[0], ks[1], edge_in, edge_hidden)
    ew2, eb2 = lin(ks[2], ks[3], edge_hidden, m_dim)
    cw1, cb1 = lin(ks[4], ks[5], m_dim, coors_hidden)
    cw2, cb2 = lin(ks[6], ks[7], coors_hidden, 1)
    nw1, nb1 = lin(ks[8], ks[9], dim + m_dim, node_hidden)
    nw2, nb2 = lin(ks[10], ks[11], node_hidden, dim)
    return (ew1, eb1, ew2, eb2, cw1, cb1, cw2, cb2, nw1, nb1, nw2, nb2)


def _pad2(a, rows, cols, dtype):
    out = jnp.zeros((rows, cols), dtype)
    return out.at[:a.shape[0], :a.shape[1]].set(a.astype(dtype))


def prepare_padded_params(params, dim, m_dim, elem_dtype, coor_pad=8, lane=128):
    """Split / zero-pad weights to lane-multiple, MXU-friendly shapes.

    Zero padding keeps the math exact: padded activation lanes stay exactly 0
    through every SiLU/matmul, and the wrapper slices the outputs back.
    """
    (ew1, eb1, ew2, eb2, cw1, cb1, cw2, cb2, nw1, nb1, nw2, nb2) = params
    d = dim
    dp = _round_up(d, lane)
    h1p = _round_up(ew1.shape[1], lane)
    mp = _round_up(m_dim, lane)
    hcp = _round_up(cw1.shape[1], lane)
    hnp = _round_up(nw1.shape[1], lane)

    padded = (
        _pad2(ew1[:d], dp, h1p, jnp.bfloat16),        # wi
        _pad2(ew1[d:2 * d], dp, h1p, jnp.bfloat16),   # wj
        _pad2(ew1[2 * d:], 1, h1p, elem_dtype),       # wd  (rel_dist row)
        _pad2(eb1, 1, h1p, jnp.float32),              # eb1 (folded into pi)
        _pad2(ew2, h1p, mp, jnp.bfloat16),            # ew2
        _pad2(eb2, 1, mp, jnp.float32),               # eb2
        _pad2(cw1, mp, hcp, jnp.bfloat16),            # cw1
        _pad2(cb1, 1, hcp, jnp.float32),              # cb1
        _pad2(cw2.T, 1, hcp, elem_dtype),             # cw2 as a row (VPU lane-reduce)
        cb2.astype(jnp.float32),                      # cb2 (1, 1)
        _pad2(nw1[:d], dp, hnp, jnp.bfloat16),        # nw1 (feats slice)
        _pad2(nw1[d:], mp, hnp, jnp.bfloat16),        # nw1 (m_i slice)
        _pad2(nb1, 1, hnp, jnp.float32),              # nb1
        _pad2(nw2, hnp, dp, jnp.bfloat16),            # nw2
        _pad2(nb2, 1, dp, jnp.float32),               # nb2
    )
    dims = dict(dp=dp, cp=coor_pad, h1p=h1p, mp=mp, hcp=hcp, hnp=hnp)
    return padded, dims


def _choose_tile(n, h1p, mp, hcp, elem_bytes, vmem_bytes):
    """VMEM-aware node tile (same for i and j blocks), multiple of 8."""
    if vmem_bytes <= 64 * 1024 * 1024:         # v7x-class: 64 MiB VMEM per core
        edge_budget = 16 * 1024 * 1024
    else:                                      # v5e/v6e: 128 MiB VMEM
        edge_budget = 28 * 1024 * 1024
    # Live per-edge bytes: pre1 + h (h1p, counted twice), m_ij (mp), ch (hcp)
    # in elem dtype, plus the f32 upcast of m_ij for the accumulator when bf16.
    per_edge = (2 * h1p + mp + hcp) * elem_bytes
    if elem_bytes == 2:
        per_edge += mp * 4
    max_edges = max(64, edge_budget // per_edge)
    t = int(max_edges ** 0.5)
    t = max(8, min(256, (t // 8) * 8))
    if n <= t:
        t = _round_up(max(n, 1), 8)
        n_pad = t
    else:
        n_pad = _round_up(n, t)
    return t, n_pad


# --------------------------------------------------------------------------- #
# Wrapper
# --------------------------------------------------------------------------- #
def egnn_layer(feats, coors, params, m_dim):
    B, N, D = feats.shape
    C = coors.shape[-1]
    elem_dtype = _elementwise_dtype()
    elem_bytes = jnp.dtype(elem_dtype).itemsize
    vmem_bytes = _vmem_capacity_bytes()

    padded, dims = prepare_padded_params(params, D, m_dim, elem_dtype)
    dp, cp = dims['dp'], dims['cp']
    h1p, mp, hcp, hnp = dims['h1p'], dims['mp'], dims['hcp'], dims['hnp']
    assert C <= cp

    T, Np = _choose_tile(N, h1p, mp, hcp, elem_bytes, vmem_bytes)
    n_blk = Np // T

    feats_p = jnp.zeros((B, Np, dp), jnp.float32).at[:, :N, :D].set(
        feats.astype(jnp.float32))
    coors_p = jnp.zeros((B, Np, cp), jnp.float32).at[:, :N, :C].set(
        coors.astype(jnp.float32))
    feats_pb = feats_p.astype(jnp.bfloat16)        # half-width j-side stream

    blk_i = lambda last: pl.BlockSpec((1, T, last), lambda b, i, j: (b, i, 0))
    blk_j = lambda last: pl.BlockSpec((1, T, last), lambda b, i, j: (b, j, 0))
    const = lambda p: pl.BlockSpec(p.shape, lambda b, i, j: (0, 0))

    in_specs = ([blk_i(dp), blk_i(cp), blk_j(dp), blk_j(cp)]
                + [const(p) for p in padded])
    out_specs = [blk_i(dp), blk_i(cp)]

    scratch = [pltpu.VMEM((T, h1p), elem_dtype),    # cached pi
               pltpu.VMEM((T, mp), jnp.float32),    # sum_j m_ij
               pltpu.VMEM((T, 1), jnp.float32),     # sum_j coor_w
               pltpu.VMEM((T, cp), jnp.float32)]    # coor_w @ coors_j

    kernel = _make_kernel(elem_dtype, N, Np)

    n_edges = B * Np * Np
    flops = (n_edges * 2 * (cp + h1p * mp + mp * hcp + hcp + cp)
             + B * n_blk * Np * 2 * dp * h1p        # pj, recomputed per i-block
             + B * Np * 2 * dp * h1p                # pi, cached
             + B * Np * (2 * (dp + mp) * hnp + 2 * hnp * dp))
    transcendentals = n_edges * (h1p + mp + hcp) + B * Np * hnp
    weight_bytes = sum(int(p.size) * p.dtype.itemsize for p in padded)
    bytes_accessed = (feats_p.size * 4 + coors_p.size * 4                       # i stream
                      + n_blk * (feats_pb.size * 2 + coors_p.size * 4)          # j stream
                      + feats_p.size * 4 + coors_p.size * 4                     # outputs
                      + weight_bytes)                                           # resident

    vmem_limit = (48 * 1024 * 1024 if vmem_bytes <= 64 * 1024 * 1024
                  else 100 * 1024 * 1024)

    feats_out, coors_out = pl.pallas_call(
        kernel,
        out_shape=(jax.ShapeDtypeStruct((B, Np, dp), jnp.float32),
                   jax.ShapeDtypeStruct((B, Np, cp), jnp.float32)),
        grid_spec=pltpu.PrefetchScalarGridSpec(
            num_scalar_prefetch=0,
            grid=(B, n_blk, n_blk),
            in_specs=in_specs,
            out_specs=out_specs,
            scratch_shapes=scratch,
        ),
        compiler_params=pltpu.CompilerParams(
            dimension_semantics=("parallel", "parallel", "arbitrary"),
            vmem_limit_bytes=vmem_limit),
        cost_estimate=pl.CostEstimate(flops=int(flops),
                                      transcendentals=int(transcendentals),
                                      bytes_accessed=int(bytes_accessed)),
    )(feats_p, coors_p, feats_pb, coors_p, *padded)

    return feats_out[:, :N, :D], coors_out[:, :N, :C]


def egnn_pass(x, params, m_dim):
    """Mirrors EGNNPass.forward: x is (coors, feats) or (coors, feats, mask)."""
    if len(x) == 2:
        coors, feats = x
        mask = None
    else:
        coors, feats, mask = x
    # TODO(synk): user mask (masked_fill of messages / coor weights) not implemented
    #             in-kernel; only the mask=None path is supported.
    feats, coors = egnn_layer(feats, coors, params, m_dim)
    return (coors, feats, mask)


# --------------------------------------------------------------------------- #
# Pure-JAX reference (for validation)
# --------------------------------------------------------------------------- #
def egnn_reference(feats, coors, params):
    (ew1, eb1, ew2, eb2, cw1, cb1, cw2, cb2, nw1, nb1, nw2, nb2) = params
    silu = jax.nn.silu
    B, N, D = feats.shape
    rel = coors[:, :, None, :] - coors[:, None, :, :]
    rel_dist = jnp.sum(rel * rel, axis=-1, keepdims=True)
    fi = jnp.broadcast_to(feats[:, :, None, :], (B, N, N, D))
    fj = jnp.broadcast_to(feats[:, None, :, :], (B, N, N, D))
    edge_in = jnp.concatenate([fi, fj, rel_dist], axis=-1)
    m_ij = silu(silu(edge_in @ ew1 + eb1) @ ew2 + eb2)
    w = (silu(m_ij @ cw1 + cb1) @ cw2 + cb2)[..., 0]
    coors_out = coors + jnp.einsum('bij,bijc->bic', w, rel)
    m_i = jnp.sum(m_ij, axis=2)
    node_in = jnp.concatenate([feats, m_i], axis=-1)
    feats_out = silu(node_in @ nw1 + nb1) @ nw2 + nb2 + feats
    return feats_out, coors_out


if __name__ == "__main__":
    B, N, D, M = 2, 8, 32, 16

    key = jax.random.PRNGKey(0)
    k_feats, k_coors, k_params = jax.random.split(key, 3)
    feats = jax.random.normal(k_feats, (B, N, D), jnp.float32)
    coors = jax.random.normal(k_coors, (B, N, 3), jnp.float32)
    params = make_egnn_params(k_params, D, M)

    coors_out, feats_out, mask_out = egnn_pass((coors, feats), params, M)
    jax.block_until_ready(coors_out)
    jax.block_until_ready(feats_out)

    assert coors_out.shape == (B, N, 3)
    assert feats_out.shape == (B, N, D)
    assert mask_out is None

    ref_feats, ref_coors = egnn_reference(feats, coors, params)
    err_f = float(jnp.max(jnp.abs(feats_out - ref_feats)))
    err_c = float(jnp.max(jnp.abs(coors_out - ref_coors)))
    assert err_f < 1e-1 and err_c < 1e-1, (err_f, err_c)

    print("KERNEL_OK")
</pallas_src>

<mosaic_0001>
module attributes {stable_mosaic.version = 11 : i64} {
  func.func @kernel(%arg0: i32, %arg1: i32, %arg2: i32, %arg3: memref<1x8x128xf32, #tpu.memory_space<vmem>>, %arg4: memref<1x8x8xf32, #tpu.memory_space<vmem>>, %arg5: memref<1x8x128xbf16, #tpu.memory_space<vmem>>, %arg6: memref<1x8x8xf32, #tpu.memory_space<vmem>>, %arg7: memref<128x256xbf16, #tpu.memory_space<vmem>>, %arg8: memref<128x256xbf16, #tpu.memory_space<vmem>>, %arg9: memref<1x256xbf16, #tpu.memory_space<vmem>>, %arg10: memref<1x256xf32, #tpu.memory_space<vmem>>, %arg11: memref<256x128xbf16, #tpu.memory_space<vmem>>, %arg12: memref<1x128xf32, #tpu.memory_space<vmem>>, %arg13: memref<128x128xbf16, #tpu.memory_space<vmem>>, %arg14: memref<1x128xf32, #tpu.memory_space<vmem>>, %arg15: memref<1x128xbf16, #tpu.memory_space<vmem>>, %arg16: memref<1x1xf32, #tpu.memory_space<vmem>>, %arg17: memref<128x128xbf16, #tpu.memory_space<vmem>>, %arg18: memref<128x128xbf16, #tpu.memory_space<vmem>>, %arg19: memref<1x128xf32, #tpu.memory_space<vmem>>, %arg20: memref<128x128xbf16, #tpu.memory_space<vmem>>, %arg21: memref<1x128xf32, #tpu.memory_space<vmem>>, %arg22: memref<1x8x128xf32, #tpu.memory_space<vmem>>, %arg23: memref<1x8x8xf32, #tpu.memory_space<vmem>>, %arg24: memref<8x256xbf16, #tpu.memory_space<vmem>>, %arg25: memref<8x128xf32, #tpu.memory_space<vmem>>, %arg26: memref<8x1xf32, #tpu.memory_space<vmem>>, %arg27: memref<8x8xf32, #tpu.memory_space<vmem>>) attributes {dimension_semantics = [#tpu.dimension_semantics<parallel>, #tpu.dimension_semantics<parallel>, #tpu.dimension_semantics<arbitrary>], iteration_bounds = array<i64: 2, 1, 1>, scalar_prefetch = 0 : i64, scratch_operands = 4 : i64, tpu.core_type = #tpu.core_type<tc>, window_params = [{transform_indices = @transform_0, window_bounds = array<i64: 1, 8, 128>}, {transform_indices = @transform_1, window_bounds = array<i64: 1, 8, 8>}, {transform_indices = @transform_2, window_bounds = array<i64: 1, 8, 128>}, {transform_indices = @transform_3, window_bounds = array<i64: 1, 8, 8>}, {pipeline_mode = #tpu.pipeline_mode<synchronous>, transform_indices = @transform_4, window_bounds = array<i64: 128, 256>}, {pipeline_mode = #tpu.pipeline_mode<synchronous>, transform_indices = @transform_5, window_bounds = array<i64: 128, 256>}, {pipeline_mode = #tpu.pipeline_mode<synchronous>, transform_indices = @transform_6, window_bounds = array<i64: 1, 256>}, {pipeline_mode = #tpu.pipeline_mode<synchronous>, transform_indices = @transform_7, window_bounds = array<i64: 1, 256>}, {pipeline_mode = #tpu.pipeline_mode<synchronous>, transform_indices = @transform_8, window_bounds = array<i64: 256, 128>}, {pipeline_mode = #tpu.pipeline_mode<synchronous>, transform_indices = @transform_9, window_bounds = array<i64: 1, 128>}, {pipeline_mode = #tpu.pipeline_mode<synchronous>, transform_indices = @transform_10, window_bounds = array<i64: 128, 128>}, {pipeline_mode = #tpu.pipeline_mode<synchronous>, transform_indices = @transform_11, window_bounds = array<i64: 1, 128>}, {pipeline_mode = #tpu.pipeline_mode<synchronous>, transform_indices = @transform_12, window_bounds = array<i64: 1, 128>}, {pipeline_mode = #tpu.pipeline_mode<synchronous>, transform_indices = @transform_13, window_bounds = array<i64: 1, 1>}, {pipeline_mode = #tpu.pipeline_mode<synchronous>, transform_indices = @transform_14, window_bounds = array<i64: 128, 128>}, {pipeline_mode = #tpu.pipeline_mode<synchronous>, transform_indices = @transform_15, window_bounds = array<i64: 128, 128>}, {pipeline_mode = #tpu.pipeline_mode<synchronous>, transform_indices = @transform_16, window_bounds = array<i64: 1, 128>}, {pipeline_mode = #tpu.pipeline_mode<synchronous>, transform_indices = @transform_17, window_bounds = array<i64: 128, 128>}, {pipeline_mode = #tpu.pipeline_mode<synchronous>, transform_indices = @transform_18, window_bounds = array<i64: 1, 128>}, {transform_indices = @transform_19, window_bounds = array<i64: 1, 8, 128>}, {transform_indices = @transform_20, window_bounds = array<i64: 1, 8, 8>}]} {
    %c0_i32 = arith.constant 0 : i32
    %0 = arith.cmpi eq, %arg2, %c0_i32 : i32
    %1 = arith.extui %0 : i1 to i32
    %c0_i32_0 = arith.constant 0 : i32
    %2 = arith.cmpi ne, %1, %c0_i32_0 : i32
    scf.if %2 {
      %c0_61 = arith.constant 0 : index
      %c0_62 = arith.constant 0 : index
      %c0_63 = arith.constant 0 : index
      %106 = vector.load %arg3[%c0_61, %c0_62, %c0_63] : memref<1x8x128xf32, #tpu.memory_space<vmem>>, vector<1x8x128xf32>
      %107 = vector.shape_cast %106 : vector<1x8x128xf32> to vector<8x128xf32>
      %108 = arith.truncf %107 : vector<8x128xf32> to vector<8x128xbf16>
      %c0_64 = arith.constant 0 : index
      %c0_65 = arith.constant 0 : index
      %109 = vector.load %arg7[%c0_64, %c0_65] : memref<128x256xbf16, #tpu.memory_space<vmem>>, vector<128x256xbf16>
      %cst_66 = arith.constant dense<0.000000e+00> : vector<8x256xf32>
      %110 = tpu.matmul %108, %109, %cst_66 {dimension_numbers = #tpu.dot_dimension_numbers<[1], [0], [0], [1], [0, 0, 1, 1], [], []>} : vector<8x128xbf16>, vector<128x256xbf16>, vector<8x256xf32> -> vector<8x256xf32>
      %c0_67 = arith.constant 0 : index
      %c0_68 = arith.constant 0 : index
      %111 = vector.load %arg10[%c0_67, %c0_68] : memref<1x256xf32, #tpu.memory_space<vmem>>, vector<1x256xf32>
      %112 = vector.broadcast %111 : vector<1x256xf32> to vector<8x256xf32>
      %113 = arith.addf %110, %112 : vector<8x256xf32>
      %114 = arith.truncf %113 : vector<8x256xf32> to vector<8x256xbf16>
      %c0_69 = arith.constant 0 : index
      %c0_70 = arith.constant 0 : index
      %115 = vector.load %arg24[%c0_69, %c0_70] : memref<8x256xbf16, #tpu.memory_space<vmem>>, vector<8x256xbf16>
      tpu.vector_store %arg24[%c0_69, %c0_70], %114 {strides = array<i32>} : memref<8x256xbf16, #tpu.memory_space<vmem>>, vector<8x256xbf16>,
      %cst_71 = arith.constant 0.000000e+00 : f32
      %116 = vector.broadcast %cst_71 : f32 to vector<8x128xf32>
      %c0_72 = arith.constant 0 : index
      %c0_73 = arith.constant 0 : index
      %117 = vector.load %arg25[%c0_72, %c0_73] : memref<8x128xf32, #tpu.memory_space<vmem>>, vector<8x128xf32>
      tpu.vector_store %arg25[%c0_72, %c0_73], %116 {strides = array<i32>} : memref<8x128xf32, #tpu.memory_space<vmem>>, vector<8x128xf32>,
      %cst_74 = arith.constant 0.000000e+00 : f32
      %118 = vector.broadcast %cst_74 : f32 to vector<8x1xf32>
      %c0_75 = arith.constant 0 : index
      %c0_76 = arith.constant 0 : index
      %119 = vector.load %arg26[%c0_75, %c0_76] : memref<8x1xf32, #tpu.memory_space<vmem>>, vector<8x1xf32>
      tpu.vector_store %arg26[%c0_75, %c0_76], %118 {strides = array<i32>} : memref<8x1xf32, #tpu.memory_space<vmem>>, vector<8x1xf32>,
      %cst_77 = arith.constant 0.000000e+00 : f32
      %120 = vector.broadcast %cst_77 : f32 to vector<8x8xf32>
      %c0_78 = arith.constant 0 : index
      %c0_79 = arith.constant 0 : index
      %121 = vector.load %arg27[%c0_78, %c0_79] : memref<8x8xf32, #tpu.memory_space<vmem>>, vector<8x8xf32>
      tpu.vector_store %arg27[%c0_78, %c0_79], %120 {strides = array<i32>} : memref<8x8xf32, #tpu.memory_space<vmem>>, vector<8x8xf32>,
    } else {
    }
    %c0 = arith.constant 0 : index
    %c0_1 = arith.constant 0 : index
    %c0_2 = arith.constant 0 : index
    %3 = vector.load %arg5[%c0, %c0_1, %c0_2] : memref<1x8x128xbf16, #tpu.memory_space<vmem>>, vector<1x8x128xbf16>
    %4 = vector.shape_cast %3 : vector<1x8x128xbf16> to vector<8x128xbf16>
    %c0_3 = arith.constant 0 : index
    %c0_4 = arith.constant 0 : index
    %c0_5 = arith.constant 0 : index
    %5 = vector.load %arg4[%c0_3, %c0_4, %c0_5] : memref<1x8x8xf32, #tpu.memory_space<vmem>>, vector<1x8x8xf32>
    %6 = vector.shape_cast %5 : vector<1x8x8xf32> to vector<8x8xf32>
    %c0_6 = arith.constant 0 : index
    %c0_7 = arith.constant 0 : index
    %c0_8 = arith.constant 0 : index
    %7 = vector.load %arg6[%c0_6, %c0_7, %c0_8] : memref<1x8x8xf32, #tpu.memory_space<vmem>>, vector<1x8x8xf32>
    %8 = vector.shape_cast %7 : vector<1x8x8xf32> to vector<8x8xf32>
    %c0_9 = arith.constant 0 : index
    %c0_10 = arith.constant 0 : index
    %9 = vector.load %arg8[%c0_9, %c0_10] : memref<128x256xbf16, #tpu.memory_space<vmem>>, vector<128x256xbf16>
    %cst = arith.constant dense<0.000000e+00> : vector<8x256xf32>
    %10 = tpu.matmul %4, %9, %cst {dimension_numbers = #tpu.dot_dimension_numbers<[1], [0], [0], [1], [0, 0, 1, 1], [], []>} : vector<8x128xbf16>, vector<128x256xbf16>, vector<8x256xf32> -> vector<8x256xf32>
    %11 = arith.truncf %10 : vector<8x256xf32> to vector<8x256xbf16>
    %12 = arith.mulf %6, %6 : vector<8x8xf32>
    %cst_11 = arith.constant dense<0.000000e+00> : vector<8xf32>
    %13 = vector.multi_reduction <add>, %12, %cst_11 [1] : vector<8x8xf32> to vector<8xf32>
    %14 = vector.shape_cast %13 : vector<8xf32> to vector<8x1xf32>
    %15 = arith.mulf %8, %8 : vector<8x8xf32>
    %cst_12 = arith.constant dense<0.000000e+00> : vector<8xf32>
    %16 = vector.multi_reduction <add>, %15, %cst_12 [1] : vector<8x8xf32> to vector<8xf32>
    %17 = vector.shape_cast %16 : vector<8xf32> to vector<8x1xf32>
    %cst_13 = arith.constant dense<0.000000e+00> : vector<8x8xf32>
    %18 = tpu.matmul %6, %8, %cst_13 {dimension_numbers = #tpu.dot_dimension_numbers<[1], [1], [0], [0], [0, 0, 1, 0], [], []>} : vector<8x8xf32>, vector<8x8xf32>, vector<8x8xf32> -> vector<8x8xf32>
    %19 = tpu.transpose %17, [1, 0] : vector<8x1xf32> -> vector<1x8xf32>
    %20 = vector.broadcast %14 : vector<8x1xf32> to vector<8x8xf32>
    %21 = vector.broadcast %19 : vector<1x8xf32> to vector<8x8xf32>
    %22 = arith.addf %20, %21 : vector<8x8xf32>
    %cst_14 = arith.constant 2.000000e+00 : f32
    %23 = vector.broadcast %cst_14 : f32 to vector<8x8xf32>
    %24 = arith.mulf %23, %18 : vector<8x8xf32>
    %25 = arith.subf %22, %24 : vector<8x8xf32>
    %cst_15 = arith.constant 0.000000e+00 : f32
    %26 = vector.broadcast %cst_15 : f32 to vector<8x8xf32>
    %27 = arith.maximumf %25, %26 : vector<8x8xf32>
    %28 = arith.truncf %27 : vector<8x8xf32> to vector<8x8xbf16>
    %c0_16 = arith.constant 0 : index
    %c0_17 = arith.constant 0 : index
    %29 = vector.load %arg24[%c0_16, %c0_17] : memref<8x256xbf16, #tpu.memory_space<vmem>>, vector<8x256xbf16>
    %30 = vector.shape_cast %29 : vector<8x256xbf16> to vector<8x1x256xbf16>
    %31 = vector.shape_cast %11 : vector<8x256xbf16> to vector<1x8x256xbf16>
    %32 = vector.broadcast %30 : vector<8x1x256xbf16> to vector<8x8x256xbf16>
    %33 = vector.broadcast %31 : vector<1x8x256xbf16> to vector<8x8x256xbf16>
    %34 = arith.addf %32, %33 : vector<8x8x256xbf16>
    %35 = vector.shape_cast %28 : vector<8x8xbf16> to vector<8x8x1xbf16>
    %c0_18 = arith.constant 0 : index
    %c0_19 = arith.constant 0 : index
    %36 = vector.load %arg9[%c0_18, %c0_19] : memref<1x256xbf16, #tpu.memory_space<vmem>>, vector<1x256xbf16>
    %37 = vector.shape_cast %36 : vector<1x256xbf16> to vector<1x1x256xbf16>
    %38 = vector.broadcast %35 : vector<8x8x1xbf16> to vector<8x8x256xbf16>
    %39 = vector.broadcast %37 : vector<1x1x256xbf16> to vector<8x8x256xbf16>
    %40 = arith.mulf %38, %39 : vector<8x8x256xbf16>
    %41 = arith.addf %34, %40 : vector<8x8x256xbf16>
    %cst_20 = arith.constant 5.000000e-01 : bf16
    %42 = vector.broadcast %cst_20 : bf16 to vector<8x8x256xbf16>
    %43 = arith.mulf %41, %42 : vector<8x8x256xbf16>
    %cst_21 = arith.constant 5.000000e-01 : bf16
    %44 = vector.broadcast %cst_21 : bf16 to vector<8x8x256xbf16>
    %45 = arith.mulf %41, %44 : vector<8x8x256xbf16>
    %46 = math.tanh %45 : vector<8x8x256xbf16>
    %cst_22 = arith.constant 1.000000e+00 : bf16
    %47 = vector.broadcast %cst_22 : bf16 to vector<8x8x256xbf16>
    %48 = arith.addf %46, %47 : vector<8x8x256xbf16>
    %49 = arith.mulf %43, %48 : vector<8x8x256xbf16>
    %50 = vector.shape_cast %49 : vector<8x8x256xbf16> to vector<64x256xbf16>
    %c0_23 = arith.constant 0 : index
    %c0_24 = arith.constant 0 : index
    %51 = vector.load %arg11[%c0_23, %c0_24] : memref<256x128xbf16, #tpu.memory_space<vmem>>, vector<256x128xbf16>
    %cst_25 = arith.constant dense<0.000000e+00> : vector<64x128xf32>
    %52 = tpu.matmul %50, %51, %cst_25 {dimension_numbers = #tpu.dot_dimension_numbers<[1], [0], [0], [1], [0, 0, 1, 1], [], []>} : vector<64x256xbf16>, vector<256x128xbf16>, vector<64x128xf32> -> vector<64x128xf32>
    %c0_26 = arith.constant 0 : index
    %c0_27 = arith.constant 0 : index
    %53 = vector.load %arg12[%c0_26, %c0_27] : memref<1x128xf32, #tpu.memory_space<vmem>>, vector<1x128xf32>
    %54 = vector.broadcast %53 : vector<1x128xf32> to vector<64x128xf32>
    %55 = arith.addf %52, %54 : vector<64x128xf32>
    %56 = arith.truncf %55 : vector<64x128xf32> to vector<64x128xbf16>
    %cst_28 = arith.constant 5.000000e-01 : bf16
    %57 = vector.broadcast %cst_28 : bf16 to vector<64x128xbf16>
    %58 = arith.mulf %56, %57 : vector<64x128xbf16>
    %cst_29 = arith.constant 5.000000e-01 : bf16
    %59 = vector.broadcast %cst_29 : bf16 to vector<64x128xbf16>
    %60 = arith.mulf %56, %59 : vector<64x128xbf16>
    %61 = math.tanh %60 : vector<64x128xbf16>
    %cst_30 = arith.constant 1.000000e+00 : bf16
    %62 = vector.broadcast %cst_30 : bf16 to vector<64x128xbf16>
    %63 = arith.addf %61, %62 : vector<64x128xbf16>
    %64 = arith.mulf %58, %63 : vector<64x128xbf16>
    %c0_31 = arith.constant 0 : index
    %c0_32 = arith.constant 0 : index
    %65 = vector.load %arg13[%c0_31, %c0_32] : memref<128x128xbf16, #tpu.memory_space<vmem>>, vector<128x128xbf16>
    %cst_33 = arith.constant dense<0.000000e+00> : vector<64x128xf32>
    %66 = tpu.matmul %64, %65, %cst_33 {dimension_numbers = #tpu.dot_dimension_numbers<[1], [0], [0], [1], [0, 0, 1, 1], [], []>} : vector<64x128xbf16>, vector<128x128xbf16>, vector<64x128xf32> -> vector<64x128xf32>
    %c0_34 = arith.constant 0 : index
    %c0_35 = arith.constant 0 : index
    %67 = vector.load %arg14[%c0_34, %c0_35] : memref<1x128xf32, #tpu.memory_space<vmem>>, vector<1x128xf32>
    %68 = vector.broadcast %67 : vector<1x128xf32> to vector<64x128xf32>
    %69 = arith.addf %66, %68 : vector<64x128xf32>
    %70 = arith.truncf %69 : vector<64x128xf32> to vector<64x128xbf16>
    %cst_36 = arith.constant 5.000000e-01 : bf16
    %71 = vector.broadcast %cst_36 : bf16 to vector<64x128xbf16>
    %72 = arith.mulf %70, %71 : vector<64x128xbf16>
    %cst_37 = arith.constant 5.000000e-01 : bf16
    %73 = vector.broadcast %cst_37 : bf16 to vector<64x128xbf16>
    %74 = arith.mulf %70, %73 : vector<64x128xbf16>
    %75 = math.tanh %74 : vector<64x128xbf16>
    %cst_38 = arith.constant 1.000000e+00 : bf16
    %76 = vector.broadcast %cst_38 : bf16 to vector<64x128xbf16>
    %77 = arith.addf %75, %76 : vector<64x128xbf16>
    %78 = arith.mulf %72, %77 : vector<64x128xbf16>
    %c0_39 = arith.constant 0 : index
    %c0_40 = arith.constant 0 : index
    %79 = vector.load %arg15[%c0_39, %c0_40] : memref<1x128xbf16, #tpu.memory_space<vmem>>, vector<1x128xbf16>
    %80 = vector.broadcast %79 : vector<1x128xbf16> to vector<64x128xbf16>
    %81 = arith.mulf %78, %80 : vector<64x128xbf16>
    %82 = arith.extf %81 : vector<64x128xbf16> to vector<64x128xf32>
    %cst_41 = arith.constant dense<0.000000e+00> : vector<64xf32>
    %83 = vector.multi_reduction <add>, %82, %cst_41 [1] : vector<64x128xf32> to vector<64xf32>
    %84 = vector.shape_cast %83 : vector<64xf32> to vector<8x8xf32>
    %c0_42 = arith.constant 0 : index
    %c0_43 = arith.constant 0 : index
    %85 = vector.load %arg16[%c0_42, %c0_43] : memref<1x1xf32, #tpu.memory_space<vmem>>, vector<1x1xf32>
    %86 = vector.broadcast %85 : vector<1x1xf32> to vector<8x8xf32>
    %87 = arith.addf %84, %86 : vector<8x8xf32>
    %88 = vector.shape_cast %64 : vector<64x128xbf16> to vector<8x8x128xbf16>
    %c0_44 = arith.constant 0 : index
    %c0_45 = arith.constant 0 : index
    %89 = vector.load %arg25[%c0_44, %c0_45] : memref<8x128xf32, #tpu.memory_space<vmem>>, vector<8x128xf32>
    %90 = arith.extf %88 : vector<8x8x128xbf16> to vector<8x8x128xf32>
    %cst_46 = arith.constant dense<0.000000e+00> : vector<8x128xf32>
    %91 = vector.multi_reduction <add>, %90, %cst_46 [1] : vector<8x8x128xf32> to vector<8x128xf32>
    %92 = arith.addf %89, %91 : vector<8x128xf32>
    %c0_47 = arith.constant 0 : index
    %c0_48 = arith.constant 0 : index
    %93 = vector.load %arg25[%c0_47, %c0_48] : memref<8x128xf32, #tpu.memory_space<vmem>>, vector<8x128xf32>
    tpu.vector_store %arg25[%c0_47, %c0_48], %92 {strides = array<i32>} : memref<8x128xf32, #tpu.memory_space<vmem>>, vector<8x128xf32>,
    %c0_49 = arith.constant 0 : index
    %c0_50 = arith.constant 0 : index
    %94 = vector.load %arg26[%c0_49, %c0_50] : memref<8x1xf32, #tpu.memory_space<vmem>>, vector<8x1xf32>
    %cst_51 = arith.constant dense<0.000000e+00> : vector<8xf32>
    %95 = vector.multi_reduction <add>, %87, %cst_51 [1] : vector<8x8xf32> to vector<8xf32>
    %96 = vector.shape_cast %95 : vector<8xf32> to vector<8x1xf32>
    %97 = arith.addf %94, %96 : vector<8x1xf32>
    %c0_52 = arith.constant 0 : index
    %c0_53 = arith.constant 0 : index
    %98 = vector.load %arg26[%c0_52, %c0_53] : memref<8x1xf32, #tpu.memory_space<vmem>>, vector<8x1xf32>
    tpu.vector_store %arg26[%c0_52, %c0_53], %97 {strides = array<i32>} : memref<8x1xf32, #tpu.memory_space<vmem>>, vector<8x1xf32>,
    %c0_54 = arith.constant 0 : index
    %c0_55 = arith.constant 0 : index
    %99 = vector.load %arg27[%c0_54, %c0_55] : memref<8x8xf32, #tpu.memory_space<vmem>>, vector<8x8xf32>
    %cst_56 = arith.constant dense<0.000000e+00> : vector<8x8xf32>
    %100 = tpu.matmul %87, %8, %cst_56 {dimension_numbers = #tpu.dot_dimension_numbers<[1], [0], [0], [1], [0, 0, 1, 1], [], []>} : vector<8x8xf32>, vector<8x8xf32>, vector<8x8xf32> -> vector<8x8xf32>
    %101 = arith.addf %99, %100 : vector<8x8xf32>
    %c0_57 = arith.constant 0 : index
    %c0_58 = arith.constant 0 : index
    %102 = vector.load %arg27[%c0_57, %c0_58] : memref<8x8xf32, #tpu.memory_space<vmem>>, vector<8x8xf32>
    tpu.vector_store %arg27[%c0_57, %c0_58], %101 {strides = array<i32>} : memref<8x8xf32, #tpu.memory_space<vmem>>, vector<8x8xf32>,
    %c0_i32_59 = arith.constant 0 : i32
    %103 = arith.cmpi eq, %arg2, %c0_i32_59 : i32
    %104 = arith.extui %103 : i1 to i32
    %c0_i32_60 = arith.constant 0 : i32
    %105 = arith.cmpi ne, %104, %c0_i32_60 : i32
    scf.if %105 {
      %c0_61 = arith.constant 0 : index
      %c0_62 = arith.constant 0 : index
      %c0_63 = arith.constant 0 : index
      %106 = vector.load %arg3[%c0_61, %c0_62, %c0_63] : memref<1x8x128xf32, #tpu.memory_space<vmem>>, vector<1x8x128xf32>
      %107 = vector.shape_cast %106 : vector<1x8x128xf32> to vector<8x128xf32>
      %c0_64 = arith.constant 0 : index
      %c0_65 = arith.constant 0 : index
      %108 = vector.load %arg26[%c0_64, %c0_65] : memref<8x1xf32, #tpu.memory_space<vmem>>, vector<8x1xf32>
      %109 = vector.broadcast %108 : vector<8x1xf32> to vector<8x8xf32>
      %110 = arith.mulf %109, %6 : vector<8x8xf32>
      %111 = arith.addf %6, %110 : vector<8x8xf32>
      %c0_66 = arith.constant 0 : index
      %c0_67 = arith.constant 0 : index
      %112 = vector.load %arg27[%c0_66, %c0_67] : memref<8x8xf32, #tpu.memory_space<vmem>>, vector<8x8xf32>
      %113 = arith.subf %111, %112 : vector<8x8xf32>
      %c0_68 = arith.constant 0 : index
      %c0_69 = arith.constant 0 : index
      %c0_70 = arith.constant 0 : index
      %114 = vector.load %arg23[%c0_68, %c0_69, %c0_70] : memref<1x8x8xf32, #tpu.memory_space<vmem>>, vector<1x8x8xf32>
      %115 = vector.shape_cast %114 : vector<1x8x8xf32> to vector<8x8xf32>
      %116 = vector.shape_cast %113 : vector<8x8xf32> to vector<1x8x8xf32>
      tpu.vector_store %arg23[%c0_68, %c0_69, %c0_70], %116 {strides = array<i32>} : memref<1x8x8xf32, #tpu.memory_space<vmem>>, vector<1x8x8xf32>,
      %117 = arith.truncf %107 : vector<8x128xf32> to vector<8x128xbf16>
      %c0_71 = arith.constant 0 : index
      %c0_72 = arith.constant 0 : index
      %118 = vector.load %arg17[%c0_71, %c0_72] : memref<128x128xbf16, #tpu.memory_space<vmem>>, vector<128x128xbf16>
      %cst_73 = arith.constant dense<0.000000e+00> : vector<8x128xf32>
      %119 = tpu.matmul %117, %118, %cst_73 {dimension_numbers = #tpu.dot_dimension_numbers<[1], [0], [0], [1], [0, 0, 1, 1], [], []>} : vector<8x128xbf16>, vector<128x128xbf16>, vector<8x128xf32> -> vector<8x128xf32>
      %c0_74 = arith.constant 0 : index
      %c0_75 = arith.constant 0 : index
      %120 = vector.load %arg25[%c0_74, %c0_75] : memref<8x128xf32, #tpu.memory_space<vmem>>, vector<8x128xf32>
      %121 = arith.truncf %120 : vector<8x128xf32> to vector<8x128xbf16>
      %c0_76 = arith.constant 0 : index
      %c0_77 = arith.constant 0 : index
      %122 = vector.load %arg18[%c0_76, %c0_77] : memref<128x128xbf16, #tpu.memory_space<vmem>>, vector<128x128xbf16>
      %cst_78 = arith.constant dense<0.000000e+00> : vector<8x128xf32>
      %123 = tpu.matmul %121, %122, %cst_78 {dimension_numbers = #tpu.dot_dimension_numbers<[1], [0], [0], [1], [0, 0, 1, 1], [], []>} : vector<8x128xbf16>, vector<128x128xbf16>, vector<8x128xf32> -> vector<8x128xf32>
      %124 = arith.addf %119, %123 : vector<8x128xf32>
      %c0_79 = arith.constant 0 : index
      %c0_80 = arith.constant 0 : index
      %125 = vector.load %arg19[%c0_79, %c0_80] : memref<1x128xf32, #tpu.memory_space<vmem>>, vector<1x128xf32>
      %126 = vector.broadcast %125 : vector<1x128xf32> to vector<8x128xf32>
      %127 = arith.addf %124, %126 : vector<8x128xf32>
      %cst_81 = arith.constant 5.000000e-01 : f32
      %128 = vector.broadcast %cst_81 : f32 to vector<8x128xf32>
      %129 = arith.mulf %127, %128 : vector<8x128xf32>
      %cst_82 = arith.constant 5.000000e-01 : f32
      %130 = vector.broadcast %cst_82 : f32 to vector<8x128xf32>
      %131 = arith.mulf %127, %130 : vector<8x128xf32>
      %132 = math.tanh %131 : vector<8x128xf32>
      %cst_83 = arith.constant 1.000000e+00 : f32
      %133 = vector.broadcast %cst_83 : f32 to vector<8x128xf32>
      %134 = arith.addf %132, %133 : vector<8x128xf32>
      %135 = arith.mulf %129, %134 : vector<8x128xf32>
      %136 = arith.truncf %135 : vector<8x128xf32> to vector<8x128xbf16>
      %c0_84 = arith.constant 0 : index
      %c0_85 = arith.constant 0 : index
      %137 = vector.load %arg20[%c0_84, %c0_85] : memref<128x128xbf16, #tpu.memory_space<vmem>>, vector<128x128xbf16>
      %cst_86 = arith.constant dense<0.000000e+00> : vector<8x128xf32>
      %138 = tpu.matmul %136, %137, %cst_86 {dimension_numbers = #tpu.dot_dimension_numbers<[1], [0], [0], [1], [0, 0, 1, 1], [], []>} : vector<8x128xbf16>, vector<128x128xbf16>, vector<8x128xf32> -> vector<8x128xf32>
      %c0_87 = arith.constant 0 : index
      %c0_88 = arith.constant 0 : index
      %139 = vector.load %arg21[%c0_87, %c0_88] : memref<1x128xf32, #tpu.memory_space<vmem>>, vector<1x128xf32>
      %140 = vector.broadcast %139 : vector<1x128xf32> to vector<8x128xf32>
      %141 = arith.addf %138, %140 : vector<8x128xf32>
      %142 = arith.addf %141, %107 : vector<8x128xf32>
      %c0_89 = arith.constant 0 : index
      %c0_90 = arith.constant 0 : index
      %c0_91 = arith.constant 0 : index
      %143 = vector.load %arg22[%c0_89, %c0_90, %c0_91] : memref<1x8x128xf32, #tpu.memory_space<vmem>>, vector<1x8x128xf32>
      %144 = vector.shape_cast %143 : vector<1x8x128xf32> to vector<8x128xf32>
      %145 = vector.shape_cast %142 : vector<8x128xf32> to vector<1x8x128xf32>
      tpu.vector_store %arg22[%c0_89, %c0_90, %c0_91], %145 {strides = array<i32>} : memref<1x8x128xf32, #tpu.memory_space<vmem>>, vector<1x8x128xf32>,
    } else {
    }
    return
  }
  func.func @transform_0(%arg0: i32, %arg1: i32, %arg2: i32) -> (i32, i32, i32) {
    %c0_i32 = arith.constant 0 : i32
    %c0_i32_0 = arith.constant 0 : i32
    return %arg0, %arg1, %c0_i32 : i32, i32, i32
  }
  func.func @transform_1(%arg0: i32, %arg1: i32, %arg2: i32) -> (i32, i32, i32) {
    %c0_i32 = arith.constant 0 : i32
    %c0_i32_0 = arith.constant 0 : i32
    return %arg0, %arg1, %c0_i32 : i32, i32, i32
  }
  func.func @transform_2(%arg0: i32, %arg1: i32, %arg2: i32) -> (i32, i32, i32) {
    %c0_i32 = arith.constant 0 : i32
    %c0_i32_0 = arith.constant 0 : i32
    return %arg0, %arg2, %c0_i32 : i32, i32, i32
  }
  func.func @transform_3(%arg0: i32, %arg1: i32, %arg2: i32) -> (i32, i32, i32) {
    %c0_i32 = arith.constant 0 : i32
    %c0_i32_0 = arith.constant 0 : i32
    return %arg0, %arg2, %c0_i32 : i32, i32, i32
  }
  func.func @transform_4(%arg0: i32, %arg1: i32, %arg2: i32) -> (i32, i32) {
    %c0_i32 = arith.constant 0 : i32
    %c0_i32_0 = arith.constant 0 : i32
    %c0_i32_1 = arith.constant 0 : i32
    return %c0_i32, %c0_i32_0 : i32, i32
  }
  func.func @transform_5(%arg0: i32, %arg1: i32, %arg2: i32) -> (i32, i32) {
    %c0_i32 = arith.constant 0 : i32
    %c0_i32_0 = arith.constant 0 : i32
    %c0_i32_1 = arith.constant 0 : i32
    return %c0_i32, %c0_i32_0 : i32, i32
  }
  func.func @transform_6(%arg0: i32, %arg1: i32, %arg2: i32) -> (i32, i32) {
    %c0_i32 = arith.constant 0 : i32
    %c0_i32_0 = arith.constant 0 : i32
    %c0_i32_1 = arith.constant 0 : i32
    return %c0_i32, %c0_i32_0 : i32, i32
  }
  func.func @transform_7(%arg0: i32, %arg1: i32, %arg2: i32) -> (i32, i32) {
    %c0_i32 = arith.constant 0 : i32
    %c0_i32_0 = arith.constant 0 : i32
    %c0_i32_1 = arith.constant 0 : i32
    return %c0_i32, %c0_i32_0 : i32, i32
  }
  func.func @transform_8(%arg0: i32, %arg1: i32, %arg2: i32) -> (i32, i32) {
    %c0_i32 = arith.constant 0 : i32
    %c0_i32_0 = arith.constant 0 : i32
    %c0_i32_1 = arith.constant 0 : i32
    return %c0_i32, %c0_i32_0 : i32, i32
  }
  func.func @transform_9(%arg0: i32, %arg1: i32, %arg2: i32) -> (i32, i32) {
    %c0_i32 = arith.constant 0 : i32
    %c0_i32_0 = arith.constant 0 : i32
    %c0_i32_1 = arith.constant 0 : i32
    return %c0_i32, %c0_i32_0 : i32, i32
  }
  func.func @transform_10(%arg0: i32, %arg1: i32, %arg2: i32) -> (i32, i32) {
    %c0_i32 = arith.constant 0 : i32
    %c0_i32_0 = arith.constant 0 : i32
    %c0_i32_1 = arith.constant 0 : i32
    return %c0_i32, %c0_i32_0 : i32, i32
  }
  func.func @transform_11(%arg0: i32, %arg1: i32, %arg2: i32) -> (i32, i32) {
    %c0_i32 = arith.constant 0 : i32
    %c0_i32_0 = arith.constant 0 : i32
    %c0_i32_1 = arith.constant 0 : i32
    return %c0_i32, %c0_i32_0 : i32, i32
  }
  func.func @transform_12(%arg0: i32, %arg1: i32, %arg2: i32) -> (i32, i32) {
    %c0_i32 = arith.constant 0 : i32
    %c0_i32_0 = arith.constant 0 : i32
    %c0_i32_1 = arith.constant 0 : i32
    return %c0_i32, %c0_i32_0 : i32, i32
  }
  func.func @transform_13(%arg0: i32, %arg1: i32, %arg2: i32) -> (i32, i32) {
    %c0_i32 = arith.constant 0 : i32
    %c0_i32_0 = arith.constant 0 : i32
    %c0_i32_1 = arith.constant 0 : i32
    return %c0_i32, %c0_i32_0 : i32, i32
  }
  func.func @transform_14(%arg0: i32, %arg1: i32, %arg2: i32) -> (i32, i32) {
    %c0_i32 = arith.constant 0 : i32
    %c0_i32_0 = arith.constant 0 : i32
    %c0_i32_1 = arith.constant 0 : i32
    return %c0_i32, %c0_i32_0 : i32, i32
  }
  func.func @transform_15(%arg0: i32, %arg1: i32, %arg2: i32) -> (i32, i32) {
    %c0_i32 = arith.constant 0 : i32
    %c0_i32_0 = arith.constant 0 : i32
    %c0_i32_1 = arith.constant 0 : i32
    return %c0_i32, %c0_i32_0 : i32, i32
  }
  func.func @transform_16(%arg0: i32, %arg1: i32, %arg2: i32) -> (i32, i32) {
    %c0_i32 = arith.constant 0 : i32
    %c0_i32_0 = arith.constant 0 : i32
    %c0_i32_1 = arith.constant 0 : i32
    return %c0_i32, %c0_i32_0 : i32, i32
  }
  func.func @transform_17(%arg0: i32, %arg1: i32, %arg2: i32) -> (i32, i32) {
    %c0_i32 = arith.constant 0 : i32
    %c0_i32_0 = arith.constant 0 : i32
    %c0_i32_1 = arith.constant 0 : i32
    return %c0_i32, %c0_i32_0 : i32, i32
  }
  func.func @transform_18(%arg0: i32, %arg1: i32, %arg2: i32) -> (i32, i32) {
    %c0_i32 = arith.constant 0 : i32
    %c0_i32_0 = arith.constant 0 : i32
    %c0_i32_1 = arith.constant 0 : i32
    return %c0_i32, %c0_i32_0 : i32, i32
  }
  func.func @transform_19(%arg0: i32, %arg1: i32, %arg2: i32) -> (i32, i32, i32) {
    %c0_i32 = arith.constant 0 : i32
    %c0_i32_0 = arith.constant 0 : i32
    return %arg0, %arg1, %c0_i32 : i32, i32, i32
  }
  func.func @transform_20(%arg0: i32, %arg1: i32, %arg2: i32) -> (i32, i32, i32) {
    %c0_i32 = arith.constant 0 : i32
    %c0_i32_0 = arith.constant 0 : i32
    return %arg0, %arg1, %c0_i32 : i32, i32, i32
  }
}

</mosaic_0001>

<llo_original>
// kernel: tpu_custom_call.1
$region0: #{tpu_custom_call.1}
  #allocation0 [shape = 'u32[]', space=smem, size = 0x4, offset = 0x4, fixed_abs, tag = 'smem constant byte address 0x4 - core index']
  #allocation1 [shape = 'u32[144,128]{1,0:T(1,128)}', space=vmem, size = 0x12000, scoped, tag = 'internal scratch']
  #allocation2 [shape = 'bf16[8,256]{1,0:T(8,128)(2,1)}', space=vmem, size = 0x1000, scoped, tag = 'scratch operand']
  #allocation3 [shape = 'f32[8,128]{1,0:T(8,128)}', space=vmem, size = 0x1000, scoped, tag = 'scratch operand']
  #allocation4 [shape = 'f32[8,1]{1,0:T(8,128)}', space=vmem, size = 0x1000, scoped, tag = 'scratch operand']
  #allocation5 [shape = 'f32[8,8]{1,0:T(8,128)}', space=vmem, size = 0x1000, scoped, tag = 'scratch operand']
  #allocation6 [shape = 'f32[1,1]{1,0:T(1,128)S(1)}', space=vmem, size = 0x200, scoped, tag = 'scoped memory for tpu_custom_call.1']
  %s0 = inlined_call_operand.hbm [shape: f32[2,8,128], index: 0, kind: input, shape index: {}]
  %s1 = inlined_call_operand.hbm [shape: f32[2,8,8], index: 1, kind: input, shape index: {}]
  %s2 = inlined_call_operand.hbm [shape: bf16[2,8,128], index: 2, kind: input, shape index: {}]
  %s3 = inlined_call_operand.hbm [shape: f32[2,8,8], index: 3, kind: input, shape index: {}]
  %s4 = inlined_call_operand.hbm [shape: bf16[128,256], index: 4, kind: input, shape index: {}]
  %s5 = inlined_call_operand.hbm [shape: bf16[128,256], index: 5, kind: input, shape index: {}]
  %s6 = inlined_call_operand.hbm [shape: bf16[1,256], index: 6, kind: input, shape index: {}]
  %s7 = inlined_call_operand.hbm [shape: f32[1,256], index: 7, kind: input, shape index: {}]
  %s8 = inlined_call_operand.hbm [shape: bf16[256,128], index: 8, kind: input, shape index: {}]
  %s9 = inlined_call_operand.hbm [shape: f32[1,128], index: 9, kind: input, shape index: {}]
  %s10 = inlined_call_operand.hbm [shape: bf16[128,128], index: 10, kind: input, shape index: {}]
  %s11 = inlined_call_operand.hbm [shape: f32[1,128], index: 11, kind: input, shape index: {}]
  %s12 = inlined_call_operand.hbm [shape: bf16[1,128], index: 12, kind: input, shape index: {}]
  %s13 = inlined_call_operand.<no memory space> [shape: f32[1,1], index: 13, kind: input, shape index: {}]
  %s14 = inlined_call_operand.hbm [shape: bf16[128,128], index: 14, kind: input, shape index: {}]
  %s15 = inlined_call_operand.hbm [shape: bf16[128,128], index: 15, kind: input, shape index: {}]
  %s16 = inlined_call_operand.hbm [shape: f32[1,128], index: 16, kind: input, shape index: {}]
  %s17 = inlined_call_operand.vmem [shape: bf16[128,128], index: 17, kind: input, shape index: {}]
  %s18 = inlined_call_operand.vmem [shape: f32[1,128], index: 18, kind: input, shape index: {}]
  %s19 = inlined_call_operand.hbm [shape: f32[2,8,128], index: 19, kind: output, shape index: {0}]
  %s20 = inlined_call_operand.hbm [shape: f32[2,8,8], index: 20, kind: output, shape index: {1}]
  %21 = xla_tuple %s19, %s20
  %s22 = sld [smem:[#allocation0]]
  $region189: #{tpu_custom_call.1} parent=0
    _
  %s24 = ssub.s32 1, %s22
  %s25 = scalar_select 0, %s24, %s22
  %v26 = vstv %s13
  %27 = vst [vmem:[#allocation6] sm:$0x1] %v26
  $region1: #{tpu_custom_call.1} parent=0
    #allocation7 [shape = 'u8[8192]{0}', space=vmem, size = 0x2000, scoped, tag = 'input window, operand 0']
    #allocation8 [shape = 's32[2]{0}', space=sflag, size = 0x8, scoped, tag = 'scoped memory for tpu_custom_call.1']
    #allocation9 [shape = 's32[2]{0}', space=sflag, size = 0x8, scoped, tag = 'scoped memory for tpu_custom_call.1']
    #allocation10 [shape = 'u8[8192]{0}', space=vmem, size = 0x2000, scoped, tag = 'input window, operand 1']
    #allocation11 [shape = 's32[2]{0}', space=sflag, size = 0x8, scoped, tag = 'scoped memory for tpu_custom_call.1']
    #allocation12 [shape = 'u8[4096]{0}', space=vmem, size = 0x1000, scoped, tag = 'input window, operand 2']
    #allocation13 [shape = 'u8[8192]{0}', space=vmem, size = 0x2000, scoped, tag = 'input window, operand 3']
    #allocation14 [shape = 's32[2]{0}', space=sflag, size = 0x8, scoped, tag = 'scoped memory for tpu_custom_call.1']
    #allocation15 [shape = 'u8[65536]{0}', space=vmem, size = 0x10000, scoped, tag = 'input window, operand 4, single buffered']
    #allocation16 [shape = 'u8[65536]{0}', space=vmem, size = 0x10000, scoped, tag = 'input window, operand 5, single buffered']
    #allocation17 [shape = 's32[1]{0}', space=sflag, size = 0x4, scoped, tag = 'scoped memory for tpu_custom_call.1']
    #allocation18 [shape = 'u8[1024]{0}', space=vmem, size = 0x400, scoped, tag = 'input window, operand 6, single buffered']
    #allocation19 [shape = 'u8[1024]{0}', space=vmem, size = 0x400, scoped, tag = 'input window, operand 7, single buffered']
    #allocation20 [shape = 's32[1]{0}', space=sflag, size = 0x4, scoped, tag = 'scoped memory for tpu_custom_call.1']
    #allocation21 [shape = 'u8[65536]{0}', space=vmem, size = 0x10000, scoped, tag = 'input window, operand 8, single buffered']
    #allocation22 [shape = 'u8[512]{0}', space=vmem, size = 0x400, scoped, tag = 'input window, operand 9, single buffered']
    #allocation23 [shape = 's32[1]{0}', space=sflag, size = 0x4, scoped, tag = 'scoped memory for tpu_custom_call.1']
    #allocation24 [shape = 'u8[32768]{0}', space=vmem, size = 0x8000, scoped, tag = 'input window, operand 10, single buffered']
    #allocation25 [shape = 'u8[512]{0}', space=vmem, size = 0x400, scoped, tag = 'input window, operand 11, single buffered']
    #allocation26 [shape = 's32[1]{0}', space=sflag, size = 0x4, scoped, tag = 'scoped memory for tpu_custom_call.1']
    #allocation27 [shape = 'u8[512]{0}', space=vmem, size = 0x400, scoped, tag = 'input window, operand 12, single buffered']
    #allocation28 [shape = 'u8[32768]{0}', space=vmem, size = 0x8000, scoped, tag = 'input window, operand 14, single buffered']
    #allocation29 [shape = 's32[1]{0}', space=sflag, size = 0x4, scoped, tag = 'scoped memory for tpu_custom_call.1']
    #allocation30 [shape = 'u8[32768]{0}', space=vmem, size = 0x8000, scoped, tag = 'input window, operand 15, single buffered']
    #allocation31 [shape = 'u8[512]{0}', space=vmem, size = 0x400, scoped, tag = 'input window, operand 16, single buffered']
    #allocation32 [shape = 's32[1]{0}', space=sflag, size = 0x4, scoped, tag = 'scoped memory for tpu_custom_call.1']
    #allocation33 [shape = 'u8[8192]{0}', space=vmem, size = 0x2000, scoped, tag = 'output window, operand 0']
    #allocation34 [shape = 'u8[8192]{0}', space=vmem, size = 0x2000, scoped, tag = 'output window, operand 1']
    #allocation35 [shape = 's32[2]{0}', space=sflag, size = 0x8, scoped, tag = 'scoped memory for tpu_custom_call.1']
    %28 = vsyncpa [#allocation8], 0
    %s29 = scalar_lea.sflag [#allocation8], 1
    %30 = vsyncpa %s29, 0
    %31 = vsyncpa [#allocation11], 0
    %s32 = scalar_lea.sflag [#allocation11], 1
    %33 = vsyncpa %s32, 0
    %34 = vsyncpa [#allocation14], 0
    %s35 = scalar_lea.sflag [#allocation14], 1
    %36 = vsyncpa %s35, 0
    %37 = vsyncpa [#allocation17], 0
    %38 = vsyncpa [#allocation20], 0
    %39 = vsyncpa [#allocation23], 0
    %40 = vsyncpa [#allocation26], 0
    %41 = vsyncpa [#allocation29], 0
    %42 = vsyncpa [#allocation32], 0
    %43 = vsyncpa [#allocation9], 0
    %s44 = scalar_lea.sflag [#allocation9], 1
    %45 = vsyncpa %s44, 0
    %46 = vsyncpa [#allocation35], 0
    %s47 = scalar_lea.sflag [#allocation35], 1
    %48 = vsyncpa %s47, 0
    loop: start=0, step=1, limit=4
    $region2: #{tpu_custom_call.1} parent=1 // loop_pre_header
      _
    $region3: #{tpu_custom_call.1} parent=1 // loop_header
      %s50 = sphi 0, %s54
      %p51 = scmp.ge.s32.totalorder %s50, 4
      %s57 = sphi 0, %s76
      %s58 = sphi 0, %s72
      %s59 = sphi 0, %s68
      %s60 = sphi 0, %s57
      %s61 = sphi 0, %s58
      %s62 = sphi 0, %s59
      %s63 = sphi 0, %s60
      %s64 = sphi 0, %s61
      %s65 = sphi 0, %s62
      %s81 = sphi 0, %s83
      %s84 = sphi 0, %s81
      %s85 = sphi 0, %s84
      %s101 = sphi 0, %s85
      %s109 = sphi 0, %s111
      %s112 = sphi 0, %s109
      %s113 = sphi 0, %s112
      %s129 = sphi 0, %s113
      %s137 = sphi 0, %s139
      %s140 = sphi 0, %s137
      %s141 = sphi 0, %s140
      %s157 = sphi 0, %s141
      %s165 = sphi 0, %s167
      %s168 = sphi 0, %s165
      %s169 = sphi 0, %s168
      %s185 = sphi 0, %s169
      %s189 = sphi 0, %s189
      %s191 = sphi 0, %s189
      %s192 = sphi 0, %s191
      %s206 = sphi 0, %s192
      %s210 = sphi 0, %s210
      %s212 = sphi 0, %s210
      %s213 = sphi 0, %s212
      %s227 = sphi 0, %s213
      %s231 = sphi 0, %s231
      %s233 = sphi 0, %s231
      %s234 = sphi 0, %s233
      %s248 = sphi 0, %s234
      %s252 = sphi 0, %s252
      %s254 = sphi 0, %s252
      %s255 = sphi 0, %s254
      %s269 = sphi 0, %s255
      %s273 = sphi 0, %s273
      %s275 = sphi 0, %s273
      %s276 = sphi 0, %s275
      %s290 = sphi 0, %s276
      %s294 = sphi 0, %s294
      %s296 = sphi 0, %s294
      %s297 = sphi 0, %s296
      %s311 = sphi 0, %s297
      %s315 = sphi 0, %s315
      %s317 = sphi 0, %s315
      %s318 = sphi 0, %s317
      %s332 = sphi 0, %s318
      %s336 = sphi 0, %s336
      %s338 = sphi 0, %s336
      %s339 = sphi 0, %s338
      %s353 = sphi 0, %s339
      %s357 = sphi 0, %s357
      %s359 = sphi 0, %s357
      %s360 = sphi 0, %s359
      %s374 = sphi 0, %s360
      %s378 = sphi 0, %s378
      %s380 = sphi 0, %s378
      %s381 = sphi 0, %s380
      %s395 = sphi 0, %s381
      %s399 = sphi 0, %s399
      %s401 = sphi 0, %s399
      %s402 = sphi 0, %s401
      %s416 = sphi 0, %s402
      %s420 = sphi 0, %s420
      %s422 = sphi 0, %s420
      %s423 = sphi 0, %s422
      %s437 = sphi 0, %s423
      %s441 = sphi 0, %s441
      %s443 = sphi 0, %s441
      %s444 = sphi 0, %s443
      %s458 = sphi 0, %s444
      %s462 = sphi 0, %s462
      %s464 = sphi 0, %s462
      %s465 = sphi 0, %s464
      %s479 = sphi 0, %s465
      %s483 = sphi 0, %s483
      %s485 = sphi 0, %s483
      %s486 = sphi 0, %s485
      %s500 = sphi 0, %s486
      %s508 = sphi 0, %s510
      %s511 = sphi 0, %s508
      %s512 = sphi 0, %s511
      %s528 = sphi 0, %s512
      %s536 = sphi 0, %s538
      %s539 = sphi 0, %s536
      %s540 = sphi 0, %s539
      %s556 = sphi 0, %s540
    $region4: #{tpu_custom_call.1} parent=1 // loop_header_branch
      %53 = sbr.rel (%p51) target = $region8
    $region5: #{tpu_custom_call.1} parent=1 // loop_body
      %s55 = ssub.s32 %s50, 1
      %s56 = ssub.s32 %s50, 2
      %s66 = sadd.s32 1, %s59
      %p67 = scmp.ge.s32.totalorder %s66, 1
      %s68 = scalar_select %p67, 0, %s66
      %s69 = sadd.s32 1, %s58
      %s70 = scalar_select %p67, %s69, %s58
      %p71 = scmp.ge.s32.totalorder %s70, 1
      %s72 = scalar_select %p71, 0, %s70
      %s73 = sadd.s32 1, %s57
      %s74 = scalar_select %p71, %s73, %s57
      %p75 = scmp.ge.s32.totalorder %s74, 2
      %s76 = scalar_select %p75, 0, %s74
      %s77 = ssub.s32 %s57, %s76
      %s78 = ssub.s32 %s58, %s72
      %s79 = sor.u32 %s77, %s78
      %p80 = scmp.eq.s32.totalorder %s79, 0
      %s82 = sadd.s32 %s81, 1
      %s83 = scalar_select %p80, %s81, %s82
      %p86 = pneg %p80
      %p87 = scmp.eq.s32.totalorder %s50, 1
      %p88 = por %p86, %p87
      %p89 = scmp.ne.s32.totalorder %s81, %s84
      %p90 = scmp.eq.s32.totalorder %s50, 0
      %p91 = por %p89, %p90
      %p92 = scmp.ne.s32.totalorder %s81, %s84
      %p93 = scmp.eq.s32.totalorder %s55, 1
      %p94 = por %p92, %p93
      %p95 = scmp.ne.s32.totalorder %s84, %s85
      %p96 = scmp.eq.s32.totalorder %s55, 0
      %p97 = por %p95, %p96
      %p98 = scmp.ne.s32.totalorder %s84, %s85
      %p99 = scmp.eq.s32.totalorder %s56, 1
      %p100 = por %p98, %p99
      %p102 = scmp.ne.s32.totalorder %s85, %s101
      %p103 = scmp.eq.s32.totalorder %s56, 0
      %p104 = por %p102, %p103
      %s105 = ssub.s32 %s57, %s76
      %s106 = ssub.s32 %s58, %s72
      %s107 = sor.u32 %s105, %s106
      %p108 = scmp.eq.s32.totalorder %s107, 0
      %s110 = sadd.s32 %s109, 1
      %s111 = scalar_select %p108, %s109, %s110
      %p114 = pneg %p108
      %p115 = scmp.eq.s32.totalorder %s50, 1
      %p116 = por %p114, %p115
      %p117 = scmp.ne.s32.totalorder %s109, %s112
      %p118 = scmp.eq.s32.totalorder %s50, 0
      %p119 = por %p117, %p118
      %p120 = scmp.ne.s32.totalorder %s109, %s112
      %p121 = scmp.eq.s32.totalorder %s55, 1
      %p122 = por %p120, %p121
      %p123 = scmp.ne.s32.totalorder %s112, %s113
      %p124 = scmp.eq.s32.totalorder %s55, 0
      %p125 = por %p123, %p124
      %p126 = scmp.ne.s32.totalorder %s112, %s113
      %p127 = scmp.eq.s32.totalorder %s56, 1
      %p128 = por %p126, %p127
      %p130 = scmp.ne.s32.totalorder %s113, %s129
      %p131 = scmp.eq.s32.totalorder %s56, 0
      %p132 = por %p130, %p131
      %s133 = ssub.s32 %s57, %s76
      %s134 = ssub.s32 %s59, %s68
      %s135 = sor.u32 %s133, %s134
      %p136 = scmp.eq.s32.totalorder %s135, 0
      %s138 = sadd.s32 %s137, 1
      %s139 = scalar_select %p136, %s137, %s138
      %p142 = pneg %p136
      %p143 = scmp.eq.s32.totalorder %s50, 1
      %p144 = por %p142, %p143
      %p145 = scmp.ne.s32.totalorder %s137, %s140
      %p146 = scmp.eq.s32.totalorder %s50, 0
      %p147 = por %p145, %p146
      %p148 = scmp.ne.s32.totalorder %s137, %s140
      %p149 = scmp.eq.s32.totalorder %s55, 1
      %p150 = por %p148, %p149
      %p151 = scmp.ne.s32.totalorder %s140, %s141
      %p152 = scmp.eq.s32.totalorder %s55, 0
      %p153 = por %p151, %p152
      %p154 = scmp.ne.s32.totalorder %s140, %s141
      %p155 = scmp.eq.s32.totalorder %s56, 1
      %p156 = por %p154, %p155
      %p158 = scmp.ne.s32.totalorder %s141, %s157
      %p159 = scmp.eq.s32.totalorder %s56, 0
      %p160 = por %p158, %p159
      %s161 = ssub.s32 %s57, %s76
      %s162 = ssub.s32 %s59, %s68
      %s163 = sor.u32 %s161, %s162
      %p164 = scmp.eq.s32.totalorder %s163, 0
      %s166 = sadd.s32 %s165, 1
      %s167 = scalar_select %p164, %s165, %s166
      %p170 = pneg %p164
      %p171 = scmp.eq.s32.totalorder %s50, 1
      %p172 = por %p170, %p171
      %p173 = scmp.ne.s32.totalorder %s165, %s168
      %p174 = scmp.eq.s32.totalorder %s50, 0
      %p175 = por %p173, %p174
      %p176 = scmp.ne.s32.totalorder %s165, %s168
      %p177 = scmp.eq.s32.totalorder %s55, 1
      %p178 = por %p176, %p177
      %p179 = scmp.ne.s32.totalorder %s168, %s169
      %p180 = scmp.eq.s32.totalorder %s55, 0
      %p181 = por %p179, %p180
      %p182 = scmp.ne.s32.totalorder %s168, %s169
      %p183 = scmp.eq.s32.totalorder %s56, 1
      %p184 = por %p182, %p183
      %p186 = scmp.ne.s32.totalorder %s169, %s185
      %p187 = scmp.eq.s32.totalorder %s56, 0
      %p188 = por %p186, %p187
      %s190 = sadd.s32 %s189, 1
      %p193 = scmp.eq.s32.totalorder %s50, 1
      %p194 = scmp.ne.s32.totalorder %s189, %s191
      %p195 = scmp.eq.s32.totalorder %s50, 0
      %p196 = por %p194, %p195
      %p197 = scmp.ne.s32.totalorder %s189, %s191
      %p198 = scmp.eq.s32.totalorder %s55, 1
      %p199 = por %p197, %p198
      %p200 = scmp.ne.s32.totalorder %s191, %s192
      %p201 = scmp.eq.s32.totalorder %s55, 0
      %p202 = por %p200, %p201
      %p203 = scmp.ne.s32.totalorder %s191, %s192
      %p204 = scmp.eq.s32.totalorder %s56, 1
      %p205 = por %p203, %p204
      %p207 = scmp.ne.s32.totalorder %s192, %s206
      %p208 = scmp.eq.s32.totalorder %s56, 0
      %p209 = por %p207, %p208
      %s211 = sadd.s32 %s210, 1
      %p214 = scmp.eq.s32.totalorder %s50, 1
      %p215 = scmp.ne.s32.totalorder %s210, %s212
      %p216 = scmp.eq.s32.totalorder %s50, 0
      %p217 = por %p215, %p216
      %p218 = scmp.ne.s32.totalorder %s210, %s212
      %p219 = scmp.eq.s32.totalorder %s55, 1
      %p220 = por %p218, %p219
      %p221 = scmp.ne.s32.totalorder %s212, %s213
      %p222 = scmp.eq.s32.totalorder %s55, 0
      %p223 = por %p221, %p222
      %p224 = scmp.ne.s32.totalorder %s212, %s213
      %p225 = scmp.eq.s32.totalorder %s56, 1
      %p226 = por %p224, %p225
      %p228 = scmp.ne.s32.totalorder %s213, %s227
      %p229 = scmp.eq.s32.totalorder %s56, 0
      %p230 = por %p228, %p229
      %s232 = sadd.s32 %s231, 1
      %p235 = scmp.eq.s32.totalorder %s50, 1
      %p236 = scmp.ne.s32.totalorder %s231, %s233
      %p237 = scmp.eq.s32.totalorder %s50, 0
      %p238 = por %p236, %p237
      %p239 = scmp.ne.s32.totalorder %s231, %s233
      %p240 = scmp.eq.s32.totalorder %s55, 1
      %p241 = por %p239, %p240
      %p242 = scmp.ne.s32.totalorder %s233, %s234
      %p243 = scmp.eq.s32.totalorder %s55, 0
      %p244 = por %p242, %p243
      %p245 = scmp.ne.s32.totalorder %s233, %s234
      %p246 = scmp.eq.s32.totalorder %s56, 1
      %p247 = por %p245, %p246
      %p249 = scmp.ne.s32.totalorder %s234, %s248
      %p250 = scmp.eq.s32.totalorder %s56, 0
      %p251 = por %p249, %p250
      %s253 = sadd.s32 %s252, 1
      %p256 = scmp.eq.s32.totalorder %s50, 1
      %p257 = scmp.ne.s32.totalorder %s252, %s254
      %p258 = scmp.eq.s32.totalorder %s50, 0
      %p259 = por %p257, %p258
      %p260 = scmp.ne.s32.totalorder %s252, %s254
      %p261 = scmp.eq.s32.totalorder %s55, 1
      %p262 = por %p260, %p261
      %p263 = scmp.ne.s32.totalorder %s254, %s255
      %p264 = scmp.eq.s32.totalorder %s55, 0
      %p265 = por %p263, %p264
      %p266 = scmp.ne.s32.totalorder %s254, %s255
      %p267 = scmp.eq.s32.totalorder %s56, 1
      %p268 = por %p266, %p267
      %p270 = scmp.ne.s32.totalorder %s255, %s269
      %p271 = scmp.eq.s32.totalorder %s56, 0
      %p272 = por %p270, %p271
      %s274 = sadd.s32 %s273, 1
      %p277 = scmp.eq.s32.totalorder %s50, 1
      %p278 = scmp.ne.s32.totalorder %s273, %s275
      %p279 = scmp.eq.s32.totalorder %s50, 0
      %p280 = por %p278, %p279
      %p281 = scmp.ne.s32.totalorder %s273, %s275
      %p282 = scmp.eq.s32.totalorder %s55, 1
      %p283 = por %p281, %p282
      %p284 = scmp.ne.s32.totalorder %s275, %s276
      %p285 = scmp.eq.s32.totalorder %s55, 0
      %p286 = por %p284, %p285
      %p287 = scmp.ne.s32.totalorder %s275, %s276
      %p288 = scmp.eq.s32.totalorder %s56, 1
      %p289 = por %p287, %p288
      %p291 = scmp.ne.s32.totalorder %s276, %s290
      %p292 = scmp.eq.s32.totalorder %s56, 0
      %p293 = por %p291, %p292
      %s295 = sadd.s32 %s294, 1
      %p298 = scmp.eq.s32.totalorder %s50, 1
      %p299 = scmp.ne.s32.totalorder %s294, %s296
      %p300 = scmp.eq.s32.totalorder %s50, 0
      %p301 = por %p299, %p300
      %p302 = scmp.ne.s32.totalorder %s294, %s296
      %p303 = scmp.eq.s32.totalorder %s55, 1
      %p304 = por %p302, %p303
      %p305 = scmp.ne.s32.totalorder %s296, %s297
      %p306 = scmp.eq.s32.totalorder %s55, 0
      %p307 = por %p305, %p306
      %p308 = scmp.ne.s32.totalorder %s296, %s297
      %p309 = scmp.eq.s32.totalorder %s56, 1
      %p310 = por %p308, %p309
      %p312 = scmp.ne.s32.totalorder %s297, %s311
      %p313 = scmp.eq.s32.totalorder %s56, 0
      %p314 = por %p312, %p313
      %s316 = sadd.s32 %s315, 1
      %p319 = scmp.eq.s32.totalorder %s50, 1
      %p320 = scmp.ne.s32.totalorder %s315, %s317
      %p321 = scmp.eq.s32.totalorder %s50, 0
      %p322 = por %p320, %p321
      %p323 = scmp.ne.s32.totalorder %s315, %s317
      %p324 = scmp.eq.s32.totalorder %s55, 1
      %p325 = por %p323, %p324
      %p326 = scmp.ne.s32.totalorder %s317, %s318
      %p327 = scmp.eq.s32.totalorder %s55, 0
      %p328 = por %p326, %p327
      %p329 = scmp.ne.s32.totalorder %s317, %s318
      %p330 = scmp.eq.s32.totalorder %s56, 1
      %p331 = por %p329, %p330
      %p333 = scmp.ne.s32.totalorder %s318, %s332
      %p334 = scmp.eq.s32.totalorder %s56, 0
      %p335 = por %p333, %p334
      %s337 = sadd.s32 %s336, 1
      %p340 = scmp.eq.s32.totalorder %s50, 1
      %p341 = scmp.ne.s32.totalorder %s336, %s338
      %p342 = scmp.eq.s32.totalorder %s50, 0
      %p343 = por %p341, %p342
      %p344 = scmp.ne.s32.totalorder %s336, %s338
      %p345 = scmp.eq.s32.totalorder %s55, 1
      %p346 = por %p344, %p345
      %p347 = scmp.ne.s32.totalorder %s338, %s339
      %p348 = scmp.eq.s32.totalorder %s55, 0
      %p349 = por %p347, %p348
      %p350 = scmp.ne.s32.totalorder %s338, %s339
      %p351 = scmp.eq.s32.totalorder %s56, 1
      %p352 = por %p350, %p351
      %p354 = scmp.ne.s32.totalorder %s339, %s353
      %p355 = scmp.eq.s32.totalorder %s56, 0
      %p356 = por %p354, %p355
      %s358 = sadd.s32 %s357, 1
      %p361 = scmp.eq.s32.totalorder %s50, 1
      %p362 = scmp.ne.s32.totalorder %s357, %s359
      %p363 = scmp.eq.s32.totalorder %s50, 0
      %p364 = por %p362, %p363
      %p365 = scmp.ne.s32.totalorder %s357, %s359
      %p366 = scmp.eq.s32.totalorder %s55, 1
      %p367 = por %p365, %p366
      %p368 = scmp.ne.s32.totalorder %s359, %s360
      %p369 = scmp.eq.s32.totalorder %s55, 0
      %p370 = por %p368, %p369
      %p371 = scmp.ne.s32.totalorder %s359, %s360
      %p372 = scmp.eq.s32.totalorder %s56, 1
      %p373 = por %p371, %p372
      %p375 = scmp.ne.s32.totalorder %s360, %s374
      %p376 = scmp.eq.s32.totalorder %s56, 0
      %p377 = por %p375, %p376
      %s379 = sadd.s32 %s378, 1
      %p382 = scmp.eq.s32.totalorder %s50, 1
      %p383 = scmp.ne.s32.totalorder %s378, %s380
      %p384 = scmp.eq.s32.totalorder %s50, 0
      %p385 = por %p383, %p384
      %p386 = scmp.ne.s32.totalorder %s378, %s380
      %p387 = scmp.eq.s32.totalorder %s55, 1
      %p388 = por %p386, %p387
      %p389 = scmp.ne.s32.totalorder %s380, %s381
      %p390 = scmp.eq.s32.totalorder %s55, 0
      %p391 = por %p389, %p390
      %p392 = scmp.ne.s32.totalorder %s380, %s381
      %p393 = scmp.eq.s32.totalorder %s56, 1
      %p394 = por %p392, %p393
      %p396 = scmp.ne.s32.totalorder %s381, %s395
      %p397 = scmp.eq.s32.totalorder %s56, 0
      %p398 = por %p396, %p397
      %s400 = sadd.s32 %s399, 1
      %p403 = scmp.eq.s32.totalorder %s50, 1
      %p404 = scmp.ne.s32.totalorder %s399, %s401
      %p405 = scmp.eq.s32.totalorder %s50, 0
      %p406 = por %p404, %p405
      %p407 = scmp.ne.s32.totalorder %s399, %s401
      %p408 = scmp.eq.s32.totalorder %s55, 1
      %p409 = por %p407, %p408
      %p410 = scmp.ne.s32.totalorder %s401, %s402
      %p411 = scmp.eq.s32.totalorder %s55, 0
      %p412 = por %p410, %p411
      %p413 = scmp.ne.s32.totalorder %s401, %s402
      %p414 = scmp.eq.s32.totalorder %s56, 1
      %p415 = por %p413, %p414
      %p417 = scmp.ne.s32.totalorder %s402, %s416
      %p418 = scmp.eq.s32.totalorder %s56, 0
      %p419 = por %p417, %p418
      %s421 = sadd.s32 %s420, 1
      %p424 = scmp.eq.s32.totalorder %s50, 1
      %p425 = scmp.ne.s32.totalorder %s420, %s422
      %p426 = scmp.eq.s32.totalorder %s50, 0
      %p427 = por %p425, %p426
      %p428 = scmp.ne.s32.totalorder %s420, %s422
      %p429 = scmp.eq.s32.totalorder %s55, 1
      %p430 = por %p428, %p429
      %p431 = scmp.ne.s32.totalorder %s422, %s423
      %p432 = scmp.eq.s32.totalorder %s55, 0
      %p433 = por %p431, %p432
      %p434 = scmp.ne.s32.totalorder %s422, %s423
      %p435 = scmp.eq.s32.totalorder %s56, 1
      %p436 = por %p434, %p435
      %p438 = scmp.ne.s32.totalorder %s423, %s437
      %p439 = scmp.eq.s32.totalorder %s56, 0
      %p440 = por %p438, %p439
      %s442 = sadd.s32 %s441, 1
      %p445 = scmp.eq.s32.totalorder %s50, 1
      %p446 = scmp.ne.s32.totalorder %s441, %s443
      %p447 = scmp.eq.s32.totalorder %s50, 0
      %p448 = por %p446, %p447
      %p449 = scmp.ne.s32.totalorder %s441, %s443
      %p450 = scmp.eq.s32.totalorder %s55, 1
      %p451 = por %p449, %p450
      %p452 = scmp.ne.s32.totalorder %s443, %s444
      %p453 = scmp.eq.s32.totalorder %s55, 0
      %p454 = por %p452, %p453
      %p455 = scmp.ne.s32.totalorder %s443, %s444
      %p456 = scmp.eq.s32.totalorder %s56, 1
      %p457 = por %p455, %p456
      %p459 = scmp.ne.s32.totalorder %s444, %s458
      %p460 = scmp.eq.s32.totalorder %s56, 0
      %p461 = por %p459, %p460
      %s463 = sadd.s32 %s462, 1
      %p466 = scmp.eq.s32.totalorder %s50, 1
      %p467 = scmp.ne.s32.totalorder %s462, %s464
      %p468 = scmp.eq.s32.totalorder %s50, 0
      %p469 = por %p467, %p468
      %p470 = scmp.ne.s32.totalorder %s462, %s464
      %p471 = scmp.eq.s32.totalorder %s55, 1
      %p472 = por %p470, %p471
      %p473 = scmp.ne.s32.totalorder %s464, %s465
      %p474 = scmp.eq.s32.totalorder %s55, 0
      %p475 = por %p473, %p474
      %p476 = scmp.ne.s32.totalorder %s464, %s465
      %p477 = scmp.eq.s32.totalorder %s56, 1
      %p478 = por %p476, %p477
      %p480 = scmp.ne.s32.totalorder %s465, %s479
      %p481 = scmp.eq.s32.totalorder %s56, 0
      %p482 = por %p480, %p481
      %s484 = sadd.s32 %s483, 1
      %p487 = scmp.eq.s32.totalorder %s50, 1
      %p488 = scmp.ne.s32.totalorder %s483, %s485
      %p489 = scmp.eq.s32.totalorder %s50, 0
      %p490 = por %p488, %p489
      %p491 = scmp.ne.s32.totalorder %s483, %s485
      %p492 = scmp.eq.s32.totalorder %s55, 1
      %p493 = por %p491, %p492
      %p494 = scmp.ne.s32.totalorder %s485, %s486
      %p495 = scmp.eq.s32.totalorder %s55, 0
      %p496 = por %p494, %p495
      %p497 = scmp.ne.s32.totalorder %s485, %s486
      %p498 = scmp.eq.s32.totalorder %s56, 1
      %p499 = por %p497, %p498
      %p501 = scmp.ne.s32.totalorder %s486, %s500
      %p502 = scmp.eq.s32.totalorder %s56, 0
      %p503 = por %p501, %p502
      %s504 = ssub.s32 %s57, %s76
      %s505 = ssub.s32 %s58, %s72
      %s506 = sor.u32 %s504, %s505
      %p507 = scmp.eq.s32.totalorder %s506, 0
      %s509 = sadd.s32 %s508, 1
      %s510 = scalar_select %p507, %s508, %s509
      %p513 = pneg %p507
      %p514 = scmp.eq.s32.totalorder %s50, 1
      %p515 = por %p513, %p514
      %p516 = scmp.ne.s32.totalorder %s508, %s511
      %p517 = scmp.eq.s32.totalorder %s50, 0
      %p518 = por %p516, %p517
      %p519 = scmp.ne.s32.totalorder %s508, %s511
      %p520 = scmp.eq.s32.totalorder %s55, 1
      %p521 = por %p519, %p520
      %p522 = scmp.ne.s32.totalorder %s511, %s512
      %p523 = scmp.eq.s32.totalorder %s55, 0
      %p524 = por %p522, %p523
      %p525 = scmp.ne.s32.totalorder %s511, %s512
      %p526 = scmp.eq.s32.totalorder %s56, 1
      %p527 = por %p525, %p526
      %p529 = scmp.ne.s32.totalorder %s512, %s528
      %p530 = scmp.eq.s32.totalorder %s56, 0
      %p531 = por %p529, %p530
      %s532 = ssub.s32 %s57, %s76
      %s533 = ssub.s32 %s58, %s72
      %s534 = sor.u32 %s532, %s533
      %p535 = scmp.eq.s32.totalorder %s534, 0
      %s537 = sadd.s32 %s536, 1
      %s538 = scalar_select %p535, %s536, %s537
      %p541 = pneg %p535
      %p542 = scmp.eq.s32.totalorder %s50, 1
      %p543 = por %p541, %p542
      %p544 = scmp.ne.s32.totalorder %s536, %s539
      %p545 = scmp.eq.s32.totalorder %s50, 0
      %p546 = por %p544, %p545
      %p547 = scmp.ne.s32.totalorder %s536, %s539
      %p548 = scmp.eq.s32.totalorder %s55, 1
      %p549 = por %p547, %p548
      %p550 = scmp.ne.s32.totalorder %s539, %s540
      %p551 = scmp.eq.s32.totalorder %s55, 0
      %p552 = por %p550, %p551
      %p553 = scmp.ne.s32.totalorder %s539, %s540
      %p554 = scmp.eq.s32.totalorder %s56, 1
      %p555 = por %p553, %p554
      %p557 = scmp.ne.s32.totalorder %s540, %s556
      %p558 = scmp.eq.s32.totalorder %s56, 0
      %p559 = por %p557, %p558
      %p560 = scmp.le.s32.totalorder 1, %s50
      %p561 = scmp.lt.s32.totalorder %s50, 3
      %p562 = pnand %p560, %p561
      %p563 = pneg %p562
      // Predicated region
      $region9: #{tpu_custom_call.1} parent=5 // pred_check
        _
      $region10: #{tpu_custom_call.1} parent=5 // pred_check_branch
        %565 = sbr.rel (%p562) target = $region12
      $region11: #{tpu_custom_call.1} parent=5 // pred_region
        %s566 = ssub.s32 %s50, 1
        // Predicated region
        $region13: #{tpu_custom_call.1} parent=11 // pred_check
          %p567 = pneg %p202
        $region14: #{tpu_custom_call.1} parent=11 // pred_check_branch
          %569 = sbr.rel (%p567) target = $region16
        $region15: #{tpu_custom_call.1} parent=11 // pred_region
          %s571 = ssub.s32 2048, 2048
          %572 = vsyncadd [#allocation14], %s571
          %s573 = sshll.u32 [#allocation15], 4
          %s574 = int_to_ptr.vmem [resolvable:$true] %s573
          %579 = dma.hbm_to_vmem [thread:$0]  %s4, 2048, %s574, [#allocation14], 128, 128, 8
        $region16: #{tpu_custom_call.1} parent=11 // pred_fallthru
          _
        // Predicated region
        $region17: #{tpu_custom_call.1} parent=11 // pred_check
          %p580 = pneg %p223
        $region18: #{tpu_custom_call.1} parent=11 // pred_check_branch
          %582 = sbr.rel (%p580) target = $region20
        $region19: #{tpu_custom_call.1} parent=11 // pred_region
          %s584 = ssub.s32 2048, 2048
          %585 = vsyncadd [#allocation17], %s584
          %s586 = sshll.u32 [#allocation16], 4
          %s587 = int_to_ptr.vmem [resolvable:$true] %s586
          %592 = dma.hbm_to_vmem [thread:$0]  %s5, 2048, %s587, [#allocation17], 128, 128, 8
        $region20: #{tpu_custom_call.1} parent=11 // pred_fallthru
          _
        // Predicated region
        $region21: #{tpu_custom_call.1} parent=11 // pred_check
          %p593 = pneg %p244
        $region22: #{tpu_custom_call.1} parent=11 // pred_check_branch
          %595 = sbr.rel (%p593) target = $region24
        $region23: #{tpu_custom_call.1} parent=11 // pred_region
          %s597 = ssub.s32 32, 32
          %598 = vsyncadd [#allocation17], %s597
          %s600 = sshll.u32 [#allocation18], 4
          %s601 = int_to_ptr.vmem [resolvable:$true] %s600
          %603 = dma.hbm_to_vmem [thread:$0]  %s6, 32, %s601, [#allocation17]
        $region24: #{tpu_custom_call.1} parent=11 // pred_fallthru
          _
        // Predicated region
        $region25: #{tpu_custom_call.1} parent=11 // pred_check
          %p604 = pneg %p265
        $region26: #{tpu_custom_call.1} parent=11 // pred_check_branch
          %606 = sbr.rel (%p604) target = $region28
        $region27: #{tpu_custom_call.1} parent=11 // pred_region
          %s608 = ssub.s32 32, 32
          %609 = vsyncadd [#allocation20], %s608
          %s611 = sshll.u32 [#allocation19], 4
          %s612 = int_to_ptr.vmem [resolvable:$true] %s611
          %614 = dma.hbm_to_vmem [thread:$0]  %s7, 32, %s612, [#allocation20]
        $region28: #{tpu_custom_call.1} parent=11 // pred_fallthru
          _
        // Predicated region
        $region29: #{tpu_custom_call.1} parent=11 // pred_check
          %p615 = pneg %p286
        $region30: #{tpu_custom_call.1} parent=11 // pred_check_branch
          %617 = sbr.rel (%p615) target = $region32
        $region31: #{tpu_custom_call.1} parent=11 // pred_region
          %s619 = ssub.s32 2048, 2048
          %620 = vsyncadd [#allocation20], %s619
          %s621 = sshll.u32 [#allocation21], 4
          %s622 = int_to_ptr.vmem [resolvable:$true] %s621
          %627 = dma.hbm_to_vmem [thread:$0]  %s8, 2048, %s622, [#allocation20], 64, 64, 4
        $region32: #{tpu_custom_call.1} parent=11 // pred_fallthru
          _
        // Predicated region
        $region33: #{tpu_custom_call.1} parent=11 // pred_check
          %p628 = pneg %p307
        $region34: #{tpu_custom_call.1} parent=11 // pred_check_branch
          %630 = sbr.rel (%p628) target = $region36
        $region35: #{tpu_custom_call.1} parent=11 // pred_region
          %s632 = ssub.s32 16, 16
          %633 = vsyncadd [#allocation23], %s632
          %s635 = sshll.u32 [#allocation22], 4
          %s636 = int_to_ptr.vmem [resolvable:$true] %s635
          %638 = dma.hbm_to_vmem [thread:$0]  %s9, 16, %s636, [#allocation23]
        $region36: #{tpu_custom_call.1} parent=11 // pred_fallthru
          _
        // Predicated region
        $region37: #{tpu_custom_call.1} parent=11 // pred_check
          %p639 = pneg %p328
        $region38: #{tpu_custom_call.1} parent=11 // pred_check_branch
          %641 = sbr.rel (%p639) target = $region40
        $region39: #{tpu_custom_call.1} parent=11 // pred_region
          %s643 = ssub.s32 1024, 1024
          %644 = vsyncadd [#allocation23], %s643
          %s645 = sshll.u32 [#allocation24], 4
          %s646 = int_to_ptr.vmem [resolvable:$true] %s645
          %651 = dma.hbm_to_vmem [thread:$0]  %s10, 1024, %s646, [#allocation23], 64, 64, 4
        $region40: #{tpu_custom_call.1} parent=11 // pred_fallthru
          _
        // Predicated region
        $region41: #{tpu_custom_call.1} parent=11 // pred_check
          %p652 = pneg %p349
        $region42: #{tpu_custom_call.1} parent=11 // pred_check_branch
          %654 = sbr.rel (%p652) target = $region44
        $region43: #{tpu_custom_call.1} parent=11 // pred_region
          %s656 = ssub.s32 16, 16
          %657 = vsyncadd [#allocation26], %s656
          %s659 = sshll.u32 [#allocation25], 4
          %s660 = int_to_ptr.vmem [resolvable:$true] %s659
          %662 = dma.hbm_to_vmem [thread:$0]  %s11, 16, %s660, [#allocation26]
        $region44: #{tpu_custom_call.1} parent=11 // pred_fallthru
          _
        // Predicated region
        $region45: #{tpu_custom_call.1} parent=11 // pred_check
          %p663 = pneg %p370
        $region46: #{tpu_custom_call.1} parent=11 // pred_check_branch
          %665 = sbr.rel (%p663) target = $region48
        $region47: #{tpu_custom_call.1} parent=11 // pred_region
          %s667 = ssub.s32 16, 16
          %668 = vsyncadd [#allocation26], %s667
          %s670 = sshll.u32 [#allocation27], 4
          %s671 = int_to_ptr.vmem [resolvable:$true] %s670
          %673 = dma.hbm_to_vmem [thread:$0]  %s12, 16, %s671, [#allocation26]
        $region48: #{tpu_custom_call.1} parent=11 // pred_fallthru
          _
        // Predicated region
        $region49: #{tpu_custom_call.1} parent=11 // pred_check
          %p674 = pneg %p391
        $region50: #{tpu_custom_call.1} parent=11 // pred_check_branch
          %676 = sbr.rel (%p674) target = $region52
        $region51: #{tpu_custom_call.1} parent=11 // pred_region
          _
        $region52: #{tpu_custom_call.1} parent=11 // pred_fallthru
          _
        // Predicated region
        $region53: #{tpu_custom_call.1} parent=11 // pred_check
          %p677 = pneg %p412
        $region54: #{tpu_custom_call.1} parent=11 // pred_check_branch
          %679 = sbr.rel (%p677) target = $region56
        $region55: #{tpu_custom_call.1} parent=11 // pred_region
          %s681 = ssub.s32 1024, 1024
          %682 = vsyncadd [#allocation29], %s681
          %s683 = sshll.u32 [#allocation28], 4
          %s684 = int_to_ptr.vmem [resolvable:$true] %s683
          %689 = dma.hbm_to_vmem [thread:$0]  %s14, 1024, %s684, [#allocation29], 64, 64, 4
        $region56: #{tpu_custom_call.1} parent=11 // pred_fallthru
          _
        // Predicated region
        $region57: #{tpu_custom_call.1} parent=11 // pred_check
          %p690 = pneg %p433
        $region58: #{tpu_custom_call.1} parent=11 // pred_check_branch
          %692 = sbr.rel (%p690) target = $region60
        $region59: #{tpu_custom_call.1} parent=11 // pred_region
          %s694 = ssub.s32 1024, 1024
          %695 = vsyncadd [#allocation29], %s694
          %s696 = sshll.u32 [#allocation30], 4
          %s697 = int_to_ptr.vmem [resolvable:$true] %s696
          %702 = dma.hbm_to_vmem [thread:$0]  %s15, 1024, %s697, [#allocation29], 64, 64, 4
        $region60: #{tpu_custom_call.1} parent=11 // pred_fallthru
          _
        // Predicated region
        $region61: #{tpu_custom_call.1} parent=11 // pred_check
          %p703 = pneg %p454
        $region62: #{tpu_custom_call.1} parent=11 // pred_check_branch
          %705 = sbr.rel (%p703) target = $region64
        $region63: #{tpu_custom_call.1} parent=11 // pred_region
          %s707 = ssub.s32 16, 16
          %708 = vsyncadd [#allocation32], %s707
          %s710 = sshll.u32 [#allocation31], 4
          %s711 = int_to_ptr.vmem [resolvable:$true] %s710
          %713 = dma.hbm_to_vmem [thread:$0]  %s16, 16, %s711, [#allocation32]
        $region64: #{tpu_custom_call.1} parent=11 // pred_fallthru
          _
        // Predicated region
        $region65: #{tpu_custom_call.1} parent=11 // pred_check
          %p714 = pneg %p475
        $region66: #{tpu_custom_call.1} parent=11 // pred_check_branch
          %716 = sbr.rel (%p714) target = $region68
        $region67: #{tpu_custom_call.1} parent=11 // pred_region
          _
        $region68: #{tpu_custom_call.1} parent=11 // pred_fallthru
          _
        // Predicated region
        $region69: #{tpu_custom_call.1} parent=11 // pred_check
          %p717 = pneg %p496
        $region70: #{tpu_custom_call.1} parent=11 // pred_check_branch
          %719 = sbr.rel (%p717) target = $region72
        $region71: #{tpu_custom_call.1} parent=11 // pred_region
          _
        $region72: #{tpu_custom_call.1} parent=11 // pred_fallthru
          _
      $region12: #{tpu_custom_call.1} parent=5 // pred_fallthru
        _
      %p720 = scmp.lt.s32.totalorder %s50, 2
      // Predicated region
      $region73: #{tpu_custom_call.1} parent=5 // pred_check
        %p721 = pneg %p720
      $region74: #{tpu_custom_call.1} parent=5 // pred_check_branch
        %723 = sbr.rel (%p721) target = $region76
      $region75: #{tpu_custom_call.1} parent=5 // pred_region
        // Predicated region
        $region77: #{tpu_custom_call.1} parent=75 // pred_check
          %p724 = pneg %p91
        $region78: #{tpu_custom_call.1} parent=75 // pred_check_branch
          %726 = sbr.rel (%p724) target = $region80
        $region79: #{tpu_custom_call.1} parent=75 // pred_region
          %s727 = sand.u32 %s81, 1
          %s728 = scalar_lea.sflag [#allocation8], %s727
          %s729 = sand.u32 %s81, 1
          %s730 = smul.addr %s729, 8
          %s731 = scalar_lea.vmem [#allocation7], %s730
          %s733 = ssub.s32 128, 128
          %734 = vsyncadd %s728, %s733
          %s735 = sadd.s32 %s58, %s57
          %s736 = smul.addr %s735, 128
          %s737 = scalar_lea.hbm %s0, %s736
          %s739 = sshll.u32 %s731, 4
          %s740 = int_to_ptr.vmem [resolvable:$true] %s739
          %742 = dma.hbm_to_vmem [thread:$0]  %s737, 128, %s740, %s728
        $region80: #{tpu_custom_call.1} parent=75 // pred_fallthru
          _
        // Predicated region
        $region81: #{tpu_custom_call.1} parent=75 // pred_check
          %p743 = pneg %p119
        $region82: #{tpu_custom_call.1} parent=75 // pred_check_branch
          %745 = sbr.rel (%p743) target = $region84
        $region83: #{tpu_custom_call.1} parent=75 // pred_region
          %s746 = sand.u32 %s50, 1
          %s747 = scalar_lea.sflag [#allocation11], %s746
          %s748 = sand.u32 %s109, 1
          %s749 = smul.addr %s748, 8
          %s750 = scalar_lea.vmem [#allocation10], %s749
          %s752 = ssub.s32 128, 128
          %753 = vsyncadd %s747, %s752
          %s754 = sadd.s32 %s58, %s57
          %s755 = smul.addr %s754, 128
          %s756 = scalar_lea.hbm %s1, %s755
          %s758 = sshll.u32 %s750, 4
          %s759 = int_to_ptr.vmem [resolvable:$true] %s758
          %761 = dma.hbm_to_vmem [thread:$0]  %s756, 128, %s759, %s747
        $region84: #{tpu_custom_call.1} parent=75 // pred_fallthru
          _
        // Predicated region
        $region85: #{tpu_custom_call.1} parent=75 // pred_check
          %p762 = pneg %p147
        $region86: #{tpu_custom_call.1} parent=75 // pred_check_branch
          %764 = sbr.rel (%p762) target = $region88
        $region87: #{tpu_custom_call.1} parent=75 // pred_region
          %s765 = sand.u32 %s50, 1
          %s766 = scalar_lea.sflag [#allocation11], %s765
          %s767 = sand.u32 %s137, 1
          %s768 = smul.addr %s767, 4
          %s769 = scalar_lea.vmem [#allocation12], %s768
          %s771 = ssub.s32 64, 64
          %772 = vsyncadd %s766, %s771
          %s773 = sadd.s32 %s59, %s57
          %s774 = smul.addr %s773, 64
          %s775 = scalar_lea.hbm %s2, %s774
          %s777 = sshll.u32 %s769, 4
          %s778 = int_to_ptr.vmem [resolvable:$true] %s777
          %780 = dma.hbm_to_vmem [thread:$0]  %s775, 64, %s778, %s766
        $region88: #{tpu_custom_call.1} parent=75 // pred_fallthru
          _
        // Predicated region
        $region89: #{tpu_custom_call.1} parent=75 // pred_check
          %p781 = pneg %p175
        $region90: #{tpu_custom_call.1} parent=75 // pred_check_branch
          %783 = sbr.rel (%p781) target = $region92
        $region91: #{tpu_custom_call.1} parent=75 // pred_region
          %s784 = sand.u32 %s50, 1
          %s785 = scalar_lea.sflag [#allocation14], %s784
          %s786 = sand.u32 %s165, 1
          %s787 = smul.addr %s786, 8
          %s788 = scalar_lea.vmem [#allocation13], %s787
          %s790 = ssub.s32 128, 128
          %791 = vsyncadd %s785, %s790
          %s792 = sadd.s32 %s59, %s57
          %s793 = smul.addr %s792, 128
          %s794 = scalar_lea.hbm %s3, %s793
          %s796 = sshll.u32 %s788, 4
          %s797 = int_to_ptr.vmem [resolvable:$true] %s796
          %799 = dma.hbm_to_vmem [thread:$0]  %s794, 128, %s797, %s785
        $region92: #{tpu_custom_call.1} parent=75 // pred_fallthru
          _
      $region76: #{tpu_custom_call.1} parent=5 // pred_fallthru
        _
      %p800 = scmp.le.s32.totalorder 1, %s50
      %p801 = scmp.lt.s32.totalorder %s50, 3
      %p802 = pnand %p800, %p801
      %p803 = pneg %p802
      // Predicated region
      $region93: #{tpu_custom_call.1} parent=5 // pred_check
        _
      $region94: #{tpu_custom_call.1} parent=5 // pred_check_branch
        %805 = sbr.rel (%p802) target = $region96
      $region95: #{tpu_custom_call.1} parent=5 // pred_region
        %s806 = ssub.s32 %s50, 1
        %s807 = sand.u32 %s84, 1
        %s808 = scalar_lea.sflag [#allocation8], %s807
        %s809 = sand.u32 %s84, 1
        %s810 = smul.addr %s809, 8
        %s811 = scalar_lea.vmem [#allocation7], %s810
        // Predicated region
        $region97: #{tpu_custom_call.1} parent=95 // pred_check
          %p812 = pneg %p97
        $region98: #{tpu_custom_call.1} parent=95 // pred_check_branch
          %814 = sbr.rel (%p812) target = $region100
        $region99: #{tpu_custom_call.1} parent=95 // pred_region
          %815 = dma.done %s808, 128
        $region100: #{tpu_custom_call.1} parent=95 // pred_fallthru
          _
        %s816 = sand.u32 %s55, 1
        %s817 = scalar_lea.sflag [#allocation11], %s816
        %s818 = sand.u32 %s112, 1
        %s819 = smul.addr %s818, 8
        %s820 = scalar_lea.vmem [#allocation10], %s819
        // Predicated region
        $region101: #{tpu_custom_call.1} parent=95 // pred_check
          %p821 = pneg %p125
        $region102: #{tpu_custom_call.1} parent=95 // pred_check_branch
          %823 = sbr.rel (%p821) target = $region104
        $region103: #{tpu_custom_call.1} parent=95 // pred_region
          %824 = dma.done %s817, 128
        $region104: #{tpu_custom_call.1} parent=95 // pred_fallthru
          _
        %s825 = sand.u32 %s55, 1
        %s826 = scalar_lea.sflag [#allocation11], %s825
        %s827 = sand.u32 %s140, 1
        %s828 = smul.addr %s827, 4
        %s829 = scalar_lea.vmem [#allocation12], %s828
        // Predicated region
        $region105: #{tpu_custom_call.1} parent=95 // pred_check
          %p830 = pneg %p153
        $region106: #{tpu_custom_call.1} parent=95 // pred_check_branch
          %832 = sbr.rel (%p830) target = $region108
        $region107: #{tpu_custom_call.1} parent=95 // pred_region
          %833 = dma.done %s826, 64
        $region108: #{tpu_custom_call.1} parent=95 // pred_fallthru
          _
        %s834 = sand.u32 %s55, 1
        %s835 = scalar_lea.sflag [#allocation14], %s834
        %s836 = sand.u32 %s168, 1
        %s837 = smul.addr %s836, 8
        %s838 = scalar_lea.vmem [#allocation13], %s837
        // Predicated region
        $region109: #{tpu_custom_call.1} parent=95 // pred_check
          %p839 = pneg %p181
        $region110: #{tpu_custom_call.1} parent=95 // pred_check_branch
          %841 = sbr.rel (%p839) target = $region112
        $region111: #{tpu_custom_call.1} parent=95 // pred_region
          %842 = dma.done %s835, 128
        $region112: #{tpu_custom_call.1} parent=95 // pred_fallthru
          _
        // Predicated region
        $region113: #{tpu_custom_call.1} parent=95 // pred_check
          %p843 = pneg %p202
        $region114: #{tpu_custom_call.1} parent=95 // pred_check_branch
          %845 = sbr.rel (%p843) target = $region116
        $region115: #{tpu_custom_call.1} parent=95 // pred_region
          %846 = dma.done [#allocation14], 2048
        $region116: #{tpu_custom_call.1} parent=95 // pred_fallthru
          _
        // Predicated region
        $region117: #{tpu_custom_call.1} parent=95 // pred_check
          %p847 = pneg %p223
        $region118: #{tpu_custom_call.1} parent=95 // pred_check_branch
          %849 = sbr.rel (%p847) target = $region120
        $region119: #{tpu_custom_call.1} parent=95 // pred_region
          %850 = dma.done [#allocation17], 2048
        $region120: #{tpu_custom_call.1} parent=95 // pred_fallthru
          _
        // Predicated region
        $region121: #{tpu_custom_call.1} parent=95 // pred_check
          %p851 = pneg %p244
        $region122: #{tpu_custom_call.1} parent=95 // pred_check_branch
          %853 = sbr.rel (%p851) target = $region124
        $region123: #{tpu_custom_call.1} parent=95 // pred_region
          %854 = dma.done [#allocation17], 32
        $region124: #{tpu_custom_call.1} parent=95 // pred_fallthru
          _
        // Predicated region
        $region125: #{tpu_custom_call.1} parent=95 // pred_check
          %p855 = pneg %p265
        $region126: #{tpu_custom_call.1} parent=95 // pred_check_branch
          %857 = sbr.rel (%p855) target = $region128
        $region127: #{tpu_custom_call.1} parent=95 // pred_region
          %858 = dma.done [#allocation20], 32
        $region128: #{tpu_custom_call.1} parent=95 // pred_fallthru
          _
        // Predicated region
        $region129: #{tpu_custom_call.1} parent=95 // pred_check
          %p859 = pneg %p286
        $region130: #{tpu_custom_call.1} parent=95 // pred_check_branch
          %861 = sbr.rel (%p859) target = $region132
        $region131: #{tpu_custom_call.1} parent=95 // pred_region
          %862 = dma.done [#allocation20], 2048
        $region132: #{tpu_custom_call.1} parent=95 // pred_fallthru
          _
        // Predicated region
        $region133: #{tpu_custom_call.1} parent=95 // pred_check
          %p863 = pneg %p307
        $region134: #{tpu_custom_call.1} parent=95 // pred_check_branch
          %865 = sbr.rel (%p863) target = $region136
        $region135: #{tpu_custom_call.1} parent=95 // pred_region
          %866 = dma.done [#allocation23], 16
        $region136: #{tpu_custom_call.1} parent=95 // pred_fallthru
          _
        // Predicated region
        $region137: #{tpu_custom_call.1} parent=95 // pred_check
          %p867 = pneg %p328
        $region138: #{tpu_custom_call.1} parent=95 // pred_check_branch
          %869 = sbr.rel (%p867) target = $region140
        $region139: #{tpu_custom_call.1} parent=95 // pred_region
          %870 = dma.done [#allocation23], 1024
        $region140: #{tpu_custom_call.1} parent=95 // pred_fallthru
          _
        // Predicated region
        $region141: #{tpu_custom_call.1} parent=95 // pred_check
          %p871 = pneg %p349
        $region142: #{tpu_custom_call.1} parent=95 // pred_check_branch
          %873 = sbr.rel (%p871) target = $region144
        $region143: #{tpu_custom_call.1} parent=95 // pred_region
          %874 = dma.done [#allocation26], 16
        $region144: #{tpu_custom_call.1} parent=95 // pred_fallthru
          _
        // Predicated region
        $region145: #{tpu_custom_call.1} parent=95 // pred_check
          %p875 = pneg %p370
        $region146: #{tpu_custom_call.1} parent=95 // pred_check_branch
          %877 = sbr.rel (%p875) target = $region148
        $region147: #{tpu_custom_call.1} parent=95 // pred_region
          %878 = dma.done [#allocation26], 16
        $region148: #{tpu_custom_call.1} parent=95 // pred_fallthru
          _
        // Predicated region
        $region149: #{tpu_custom_call.1} parent=95 // pred_check
          %p879 = pneg %p412
        $region150: #{tpu_custom_call.1} parent=95 // pred_check_branch
          %881 = sbr.rel (%p879) target = $region152
        $region151: #{tpu_custom_call.1} parent=95 // pred_region
          %882 = dma.done [#allocation29], 1024
        $region152: #{tpu_custom_call.1} parent=95 // pred_fallthru
          _
        // Predicated region
        $region153: #{tpu_custom_call.1} parent=95 // pred_check
          %p883 = pneg %p433
        $region154: #{tpu_custom_call.1} parent=95 // pred_check_branch
          %885 = sbr.rel (%p883) target = $region156
        $region155: #{tpu_custom_call.1} parent=95 // pred_region
          %886 = dma.done [#allocation29], 1024
        $region156: #{tpu_custom_call.1} parent=95 // pred_fallthru
          _
        // Predicated region
        $region157: #{tpu_custom_call.1} parent=95 // pred_check
          %p887 = pneg %p454
        $region158: #{tpu_custom_call.1} parent=95 // pred_check_branch
          %889 = sbr.rel (%p887) target = $region160
        $region159: #{tpu_custom_call.1} parent=95 // pred_region
          %890 = dma.done [#allocation32], 16
        $region160: #{tpu_custom_call.1} parent=95 // pred_fallthru
          _
        %s891 = sand.u32 %s84, 1
        %s892 = scalar_lea.sflag [#allocation8], %s891
        %s893 = sand.u32 %s84, 1
        %s894 = smul.addr %s893, 8
        %s895 = scalar_lea.vmem [#allocation7], %s894
        %p896 = pneg %p97
        %p897 = pneg %p94
        %s898 = sand.u32 %s55, 1
        %s899 = scalar_lea.sflag [#allocation11], %s898
        %s900 = sand.u32 %s112, 1
        %s901 = smul.addr %s900, 8
        %s902 = scalar_lea.vmem [#allocation10], %s901
        %p903 = pneg %p125
        %p904 = pneg %p122
        %s905 = sand.u32 %s55, 1
        %s906 = scalar_lea.sflag [#allocation11], %s905
        %s907 = sand.u32 %s140, 1
        %s908 = smul.addr %s907, 4
        %s909 = scalar_lea.vmem [#allocation12], %s908
        %p910 = pneg %p153
        %p911 = pneg %p150
        %s912 = sand.u32 %s55, 1
        %s913 = scalar_lea.sflag [#allocation14], %s912
        %s914 = sand.u32 %s168, 1
        %s915 = smul.addr %s914, 8
        %s916 = scalar_lea.vmem [#allocation13], %s915
        %p917 = pneg %p181
        %p918 = pneg %p178
        %p919 = pneg %p202
        %p920 = pneg %p199
        %p921 = pneg %p223
        %p922 = pneg %p220
        %p923 = pneg %p244
        %p924 = pneg %p241
        %p925 = pneg %p265
        %p926 = pneg %p262
        %p927 = pneg %p286
        %p928 = pneg %p283
        %p929 = pneg %p307
        %p930 = pneg %p304
        %p931 = pneg %p328
        %p932 = pneg %p325
        %p933 = pneg %p349
        %p934 = pneg %p346
        %p935 = pneg %p370
        %p936 = pneg %p367
        %p937 = pneg %p391
        %p938 = pneg %p388
        %p939 = pneg %p412
        %p940 = pneg %p409
        %p941 = pneg %p433
        %p942 = pneg %p430
        %p943 = pneg %p454
        %p944 = pneg %p451
        %p945 = pneg %p475
        %p946 = pneg %p472
        %p947 = pneg %p496
        %p948 = pneg %p493
        %p949 = pneg %p524
        %p950 = pneg %p521
        %s951 = sand.u32 %s511, 1
        %s952 = scalar_lea.sflag [#allocation9], %s951
        %s953 = sand.u32 %s511, 1
        %s954 = smul.addr %s953, 8
        %s955 = scalar_lea.vmem [#allocation33], %s954
        %p956 = pneg %p552
        %p957 = pneg %p549
        %s958 = sand.u32 %s539, 1
        %s959 = scalar_lea.sflag [#allocation35], %s958
        %s960 = sand.u32 %s539, 1
        %s961 = smul.addr %s960, 8
        %s962 = scalar_lea.vmem [#allocation34], %s961
        %p966 = scmp.eq.s32.totalorder %s62, 0
        // Predicated region
        $region161: #{tpu_custom_call.1} parent=95 // pred_check
          %p967 = pneg %p966
        $region162: #{tpu_custom_call.1} parent=95 // pred_check_branch
          %969 = sbr.rel (%p967) target = $region164
        $region163: #{tpu_custom_call.1} parent=95 // pred_region
          %v970 = vld [vmem:[%s811] sm:$0xff]
          %v971 = vpack.c.bf16 %v970, %v970
          %v972 = vld [vmem:[#allocation15] sm:$0xff]
          %v973 = vld [vmem:[#allocation15 + $0x8] sm:$0xff]
          %v974 = vld [vmem:[#allocation15 + $0x10] sm:$0xff]
          %v975 = vld [vmem:[#allocation15 + $0x18] sm:$0xff]
          %v976 = vld [vmem:[#allocation15 + $0x20] sm:$0xff]
          %v977 = vld [vmem:[#allocation15 + $0x28] sm:$0xff]
          %v978 = vld [vmem:[#allocation15 + $0x30] sm:$0xff]
          %v979 = vld [vmem:[#allocation15 + $0x38] sm:$0xff]
          %v980 = vld [vmem:[#allocation15 + $0x40] sm:$0xff]
          %v981 = vld [vmem:[#allocation15 + $0x48] sm:$0xff]
          %v982 = vld [vmem:[#allocation15 + $0x50] sm:$0xff]
          %v983 = vld [vmem:[#allocation15 + $0x58] sm:$0xff]
          %v984 = vld [vmem:[#allocation15 + $0x60] sm:$0xff]
          %v985 = vld [vmem:[#allocation15 + $0x68] sm:$0xff]
          %v986 = vld [vmem:[#allocation15 + $0x70] sm:$0xff]
          %v987 = vld [vmem:[#allocation15 + $0x78] sm:$0xff]
          %v988 = vld [vmem:[#allocation19] sm:$0x3]
          %v990 = vlaneseq
          %v991 = vshrl.u32 %v990, 7
          %v992 = vsub.s32 0, %v991
          %v993 = vrot.slane %v988, %v992
          %v994 = vlaneseq
          %v995 = vshrl.u32 %v994, 7
          %v996 = vsub.s32 1, %v995
          %v997 = vrot.slane %v988, %v996
          %v1016 = vunpack.c.l.b16 %v972
          %v1017 = vunpack.c.h.b16 %v972
          %v1018 = vunpack.c.l.b16 %v973
          %v1019 = vunpack.c.h.b16 %v973
          %v1020 = vunpack.c.l.b16 %v974
          %v1021 = vunpack.c.h.b16 %v974
          %v1022 = vunpack.c.l.b16 %v975
          %v1023 = vunpack.c.h.b16 %v975
          %v1024 = vunpack.c.l.b16 %v976
          %v1025 = vunpack.c.h.b16 %v976
          %v1026 = vunpack.c.l.b16 %v977
          %v1027 = vunpack.c.h.b16 %v977
          %v1028 = vunpack.c.l.b16 %v978
          %v1029 = vunpack.c.h.b16 %v978
          %v1030 = vunpack.c.l.b16 %v979
          %v1031 = vunpack.c.h.b16 %v979
          %v1032 = vunpack.c.l.b16 %v980
          %v1033 = vunpack.c.h.b16 %v980
          %v1034 = vunpack.c.l.b16 %v981
          %v1035 = vunpack.c.h.b16 %v981
          %v1036 = vunpack.c.l.b16 %v982
          %v1037 = vunpack.c.h.b16 %v982
          %v1038 = vunpack.c.l.b16 %v983
          %v1039 = vunpack.c.h.b16 %v983
          %v1040 = vunpack.c.l.b16 %v984
          %v1041 = vunpack.c.h.b16 %v984
          %v1042 = vunpack.c.l.b16 %v985
          %v1043 = vunpack.c.h.b16 %v985
          %v1044 = vunpack.c.l.b16 %v986
          %v1045 = vunpack.c.h.b16 %v986
          %v1046 = vunpack.c.l.b16 %v987
          %v1047 = vunpack.c.h.b16 %v987
          %v1048 = vpack.c.b16 %v1018, %v1016
          %v1049 = vpack.c.b16 %v1019, %v1017
          %v1050 = vpack.c.b16 %v1022, %v1020
          %v1051 = vpack.c.b16 %v1023, %v1021
          %v1052 = vpack.c.b16 %v1026, %v1024
          %v1053 = vpack.c.b16 %v1027, %v1025
          %v1054 = vpack.c.b16 %v1030, %v1028
          %v1055 = vpack.c.b16 %v1031, %v1029
          %v1056 = vpack.c.b16 %v1034, %v1032
          %v1057 = vpack.c.b16 %v1035, %v1033
          %v1058 = vpack.c.b16 %v1038, %v1036
          %v1059 = vpack.c.b16 %v1039, %v1037
          %v1060 = vpack.c.b16 %v1042, %v1040
          %v1061 = vpack.c.b16 %v1043, %v1041
          %v1062 = vpack.c.b16 %v1046, %v1044
          %v1063 = vpack.c.b16 %v1047, %v1045
          %1080 = vmatprep.subr.bf16.mxu0 %v1049
          %1081 = vmatpush1.bf16.msra.mxu0 %v1048
          %1082 = vmatprep.subr.bf16.mxu0 %v1051
          %1083 = vmatpush1.bf16.msra.mxu0 %v1050
          %1084 = vmatprep.subr.bf16.mxu0 %v1053
          %1085 = vmatpush1.bf16.msra.mxu0 %v1052
          %1086 = vmatprep.subr.bf16.mxu0 %v1055
          %1087 = vmatpush1.bf16.msra.mxu0 %v1054
          %1088 = vmatprep.subr.bf16.mxu0 %v1057
          %1089 = vmatpush1.bf16.msra.mxu0 %v1056
          %1090 = vmatprep.subr.bf16.mxu0 %v1059
          %1091 = vmatpush1.bf16.msra.mxu0 %v1058
          %1092 = vmatprep.subr.bf16.mxu0 %v1061
          %1093 = vmatpush1.bf16.msra.mxu0 %v1060
          %1094 = vmatprep.subr.bf16.mxu0 %v1063
          %1095 = vmatpush1.bf16.msra.mxu0 %v1062
          %1096 = vmatprep.subr.bf16.mxu0 0
          %1097 = vmatpush1.bf16.msra.mxu0 0
          %1098 = vmatprep.subr.bf16.mxu0 0
          %1099 = vmatpush1.bf16.msra.mxu0 0
          %1100 = vmatprep.subr.bf16.mxu0 0
          %1101 = vmatpush1.bf16.msra.mxu0 0
          %1102 = vmatprep.subr.bf16.mxu0 0
          %1103 = vmatpush1.bf16.msra.mxu0 0
          %1104 = vmatprep.subr.bf16.mxu0 0
          %1105 = vmatpush1.bf16.msra.mxu0 0
          %1106 = vmatprep.subr.bf16.mxu0 0
          %1107 = vmatpush1.bf16.msra.mxu0 0
          %1108 = vmatprep.subr.bf16.mxu0 0
          %1109 = vmatpush1.bf16.msra.mxu0 0
          %1110 = vmatprep.subr.bf16.mxu0 0
          %1111 = vmatpush1.bf16.msra.mxu0 0
          %1112 = vmatprep.mubr.bf16.mxu0 0
          %1113 = vmatmul.mubr.bf16.gmra.mrb[0].mxu0 %v971
          %v1114 = vpop.f32.mrb[0].mxu0
          %v1115 = vadd.f32 %v993, %v1114
          %v1116 = vpop.f32.mrb[0].mxu0
          %v1117 = vadd.f32 %v997, %v1116
          %v1118 = vpop.f32.mrb[0].mxu0
          %v1119 = vpop.f32.mrb[0].mxu0
          %1120 = vdwg.mxu0
          %v1121 = vpack.c.bf16 %v1115, %v1115
          %v1122 = vpack.c.bf16 %v1117, %v1117
          %v1125 = vunpack.c.l.b16 %v1121
          %v1126 = vunpack.c.l.b16 %v1122
          %v1127 = vpack.c.b16 %v1126, %v1125
          %1129 = vst [vmem:[#allocation2] sm:$0xff] %v1127
          %1130 = vst [vmem:[#allocation3] sm:$0xff] 0.0
          %vm1131 = vcmask 7168
          %1132 = vst.msk [vmem:[#allocation4] sm:$0xff] %vm1131, 0.0
          %vm1133 = vcmask 64512
          %1134 = vst.msk [vmem:[#allocation5] sm:$0xff] %vm1133, 0.0
        $region164: #{tpu_custom_call.1} parent=95 // pred_fallthru
          _
        %v1135 = vld [vmem:[%s829] sm:$0xf]
        %v1136 = vld [vmem:[%s820] sm:$0xff]
        %v1137 = vld [vmem:[%s838] sm:$0xff]
        %v1138 = vld [vmem:[#allocation16] sm:$0xff]
        %v1139 = vld [vmem:[#allocation16 + $0x8] sm:$0xff]
        %v1140 = vld [vmem:[#allocation16 + $0x10] sm:$0xff]
        %v1141 = vld [vmem:[#allocation16 + $0x18] sm:$0xff]
        %v1142 = vld [vmem:[#allocation16 + $0x20] sm:$0xff]
        %v1143 = vld [vmem:[#allocation16 + $0x28] sm:$0xff]
        %v1144 = vld [vmem:[#allocation16 + $0x30] sm:$0xff]
        %v1145 = vld [vmem:[#allocation16 + $0x38] sm:$0xff]
        %v1146 = vld [vmem:[#allocation16 + $0x40] sm:$0xff]
        %v1147 = vld [vmem:[#allocation16 + $0x48] sm:$0xff]
        %v1148 = vld [vmem:[#allocation16 + $0x50] sm:$0xff]
        %v1149 = vld [vmem:[#allocation16 + $0x58] sm:$0xff]
        %v1150 = vld [vmem:[#allocation16 + $0x60] sm:$0xff]
        %v1151 = vld [vmem:[#allocation16 + $0x68] sm:$0xff]
        %v1152 = vld [vmem:[#allocation16 + $0x70] sm:$0xff]
        %v1153 = vld [vmem:[#allocation16 + $0x78] sm:$0xff]
        %v1170 = vunpack.c.l.b16 %v1138
        %v1171 = vunpack.c.h.b16 %v1138
        %v1172 = vunpack.c.l.b16 %v1139
        %v1173 = vunpack.c.h.b16 %v1139
        %v1174 = vunpack.c.l.b16 %v1140
        %v1175 = vunpack.c.h.b16 %v1140
        %v1176 = vunpack.c.l.b16 %v1141
        %v1177 = vunpack.c.h.b16 %v1141
        %v1178 = vunpack.c.l.b16 %v1142
        %v1179 = vunpack.c.h.b16 %v1142
        %v1180 = vunpack.c.l.b16 %v1143
        %v1181 = vunpack.c.h.b16 %v1143
        %v1182 = vunpack.c.l.b16 %v1144
        %v1183 = vunpack.c.h.b16 %v1144
        %v1184 = vunpack.c.l.b16 %v1145
        %v1185 = vunpack.c.h.b16 %v1145
        %v1186 = vunpack.c.l.b16 %v1146
        %v1187 = vunpack.c.h.b16 %v1146
        %v1188 = vunpack.c.l.b16 %v1147
        %v1189 = vunpack.c.h.b16 %v1147
        %v1190 = vunpack.c.l.b16 %v1148
        %v1191 = vunpack.c.h.b16 %v1148
        %v1192 = vunpack.c.l.b16 %v1149
        %v1193 = vunpack.c.h.b16 %v1149
        %v1194 = vunpack.c.l.b16 %v1150
        %v1195 = vunpack.c.h.b16 %v1150
        %v1196 = vunpack.c.l.b16 %v1151
        %v1197 = vunpack.c.h.b16 %v1151
        %v1198 = vunpack.c.l.b16 %v1152
        %v1199 = vunpack.c.h.b16 %v1152
        %v1200 = vunpack.c.l.b16 %v1153
        %v1201 = vunpack.c.h.b16 %v1153
        %v1202 = vpack.c.b16 %v1172, %v1170
        %v1203 = vpack.c.b16 %v1173, %v1171
        %v1204 = vpack.c.b16 %v1176, %v1174
        %v1205 = vpack.c.b16 %v1177, %v1175
        %v1206 = vpack.c.b16 %v1180, %v1178
        %v1207 = vpack.c.b16 %v1181, %v1179
        %v1208 = vpack.c.b16 %v1184, %v1182
        %v1209 = vpack.c.b16 %v1185, %v1183
        %v1210 = vpack.c.b16 %v1188, %v1186
        %v1211 = vpack.c.b16 %v1189, %v1187
        %v1212 = vpack.c.b16 %v1192, %v1190
        %v1213 = vpack.c.b16 %v1193, %v1191
        %v1214 = vpack.c.b16 %v1196, %v1194
        %v1215 = vpack.c.b16 %v1197, %v1195
        %v1216 = vpack.c.b16 %v1200, %v1198
        %v1217 = vpack.c.b16 %v1201, %v1199
        %1234 = vmatprep.subr.bf16.mxu0 %v1203
        %1235 = vmatpush1.bf16.msra.mxu0 %v1202
        %1236 = vmatprep.subr.bf16.mxu0 %v1205
        %1237 = vmatpush1.bf16.msra.mxu0 %v1204
        %1238 = vmatprep.subr.bf16.mxu0 %v1207
        %1239 = vmatpush1.bf16.msra.mxu0 %v1206
        %1240 = vmatprep.subr.bf16.mxu0 %v1209
        %1241 = vmatpush1.bf16.msra.mxu0 %v1208
        %1242 = vmatprep.subr.bf16.mxu0 %v1211
        %1243 = vmatpush1.bf16.msra.mxu0 %v1210
        %1244 = vmatprep.subr.bf16.mxu0 %v1213
        %1245 = vmatpush1.bf16.msra.mxu0 %v1212
        %1246 = vmatprep.subr.bf16.mxu0 %v1215
        %1247 = vmatpush1.bf16.msra.mxu0 %v1214
        %1248 = vmatprep.subr.bf16.mxu0 %v1217
        %1249 = vmatpush1.bf16.msra.mxu0 %v1216
        %1250 = vmatprep.subr.bf16.mxu0 0
        %1251 = vmatpush1.bf16.msra.mxu0 0
        %1252 = vmatprep.subr.bf16.mxu0 0
        %1253 = vmatpush1.bf16.msra.mxu0 0
        %1254 = vmatprep.subr.bf16.mxu0 0
        %1255 = vmatpush1.bf16.msra.mxu0 0
        %1256 = vmatprep.subr.bf16.mxu0 0
        %1257 = vmatpush1.bf16.msra.mxu0 0
        %1258 = vmatprep.subr.bf16.mxu0 0
        %1259 = vmatpush1.bf16.msra.mxu0 0
        %1260 = vmatprep.subr.bf16.mxu0 0
        %1261 = vmatpush1.bf16.msra.mxu0 0
        %1262 = vmatprep.subr.bf16.mxu0 0
        %1263 = vmatpush1.bf16.msra.mxu0 0
        %1264 = vmatprep.subr.bf16.mxu0 0
        %1265 = vmatpush1.bf16.msra.mxu0 0
        %1266 = vmatprep.mubr.bf16.mxu0 0
        %1267 = vmatmul.mubr.bf16.gmra.mrb[0].mxu0 %v1135
        %v1268 = vpop.f32.mrb[0].mxu0
        %v1269 = vadd.f32 0.0, %v1268
        %v1270 = vpop.f32.mrb[0].mxu0
        %v1271 = vadd.f32 0.0, %v1270
        %v1272 = vpop.f32.mrb[0].mxu0
        %v1273 = vpop.f32.mrb[0].mxu0
        %1274 = vdwg.mxu0
        %v1275 = vpack.c.bf16 %v1269, %v1269
        %v1276 = vpack.c.bf16 %v1271, %v1271
        %v1277 = vmul.f32 %v1136, %v1136
        %vm1278 = vcmask 64512
        %v1279 = vsel %vm1278, %v1277, 0.0
        %1280 = vadd.xlane.f32.xlu0 %v1279
        %v1281 = vpop.xlane.xlu0 %1280
        %v1282 = vmul.f32 %v1137, %v1137
        %v1283 = vsel %vm1278, %v1282, 0.0
        %1284 = vadd.xlane.f32.xlu0 %v1283
        %v1285 = vpop.xlane.xlu0 %1284
        %v1287 = vsel %vm1278, %v1136, 0
        %v1290 = vsel %vm1278, %v1137, 0
        %1292 = vmatprep.subr.mxu0 0.0
        %1293 = vmatpush1.xpose.msra.mxu0 %v1290
        %1294 = vmatprep.subr.mxu0 0.0
        %1295 = vmatpush1.xpose.msra.mxu0 0.0
        %1296 = vmatprep.subr.mxu0 0.0
        %1297 = vmatpush1.xpose.msra.mxu0 0.0
        %1298 = vmatprep.subr.mxu0 0.0
        %1299 = vmatpush1.xpose.msra.mxu0 0.0
        %1300 = vmatprep.subr.mxu0 0.0
        %1301 = vmatpush1.xpose.msra.mxu0 0.0
        %1302 = vmatprep.subr.mxu0 0.0
        %1303 = vmatpush1.xpose.msra.mxu0 0.0
        %1304 = vmatprep.subr.mxu0 0.0
        %1305 = vmatpush1.xpose.msra.mxu0 0.0
        %1306 = vmatprep.subr.mxu0 0.0
        %1307 = vmatpush1.xpose.msra.mxu0 0.0
        %1308 = vmatprep.subr.mxu0 0.0
        %1309 = vmatpush1.xpose.msra.mxu0 0.0
        %1310 = vmatprep.subr.mxu0 0.0
        %1311 = vmatpush1.xpose.msra.mxu0 0.0
        %1312 = vmatprep.subr.mxu0 0.0
        %1313 = vmatpush1.xpose.msra.mxu0 0.0
        %1314 = vmatprep.subr.mxu0 0.0
        %1315 = vmatpush1.xpose.msra.mxu0 0.0
        %1316 = vmatprep.subr.mxu0 0.0
        %1317 = vmatpush1.xpose.msra.mxu0 0.0
        %1318 = vmatprep.subr.mxu0 0.0
        %1319 = vmatpush1.xpose.msra.mxu0 0.0
        %1320 = vmatprep.subr.mxu0 0.0
        %1321 = vmatpush1.xpose.msra.mxu0 0.0
        %1322 = vmatprep.subr.mxu0 0.0
        %1323 = vmatpush1.xpose.msra.mxu0 0.0
        %1324 = vmatprep.subr.mxu0 0.0
        %1325 = vmatpush1.xpose.msra.mxu0 0.0
        %1326 = vmatprep.subr.mxu0 0.0
        %1327 = vmatpush1.xpose.msra.mxu0 0.0
        %1328 = vmatprep.subr.mxu0 0.0
        %1329 = vmatpush1.xpose.msra.mxu0 0.0
        %1330 = vmatprep.subr.mxu0 0.0
        %1331 = vmatpush1.xpose.msra.mxu0 0.0
        %1332 = vmatprep.subr.mxu0 0.0
        %1333 = vmatpush1.xpose.msra.mxu0 0.0
        %1334 = vmatprep.subr.mxu0 0.0
        %1335 = vmatpush1.xpose.msra.mxu0 0.0
        %1336 = vmatprep.subr.mxu0 0.0
        %1337 = vmatpush1.xpose.msra.mxu0 0.0
        %1338 = vmatprep.subr.mxu0 0.0
        %1339 = vmatpush1.xpose.msra.mxu0 0.0
        %1340 = vmatprep.subr.mxu0 0.0
        %1341 = vmatpush1.xpose.msra.mxu0 0.0
        %1342 = vmatprep.subr.mxu0 0.0
        %1343 = vmatpush1.xpose.msra.mxu0 0.0
        %1344 = vmatprep.subr.mxu0 0.0
        %1345 = vmatpush1.xpose.msra.mxu0 0.0
        %1346 = vmatprep.subr.mxu0 0.0
        %1347 = vmatpush1.xpose.msra.mxu0 0.0
        %1348 = vmatprep.subr.mxu0 0.0
        %1349 = vmatpush1.xpose.msra.mxu0 0.0
        %1350 = vmatprep.subr.mxu0 0.0
        %1351 = vmatpush1.xpose.msra.mxu0 0.0
        %1352 = vmatprep.subr.mxu0 0.0
        %1353 = vmatpush1.xpose.msra.mxu0 0.0
        %1354 = vmatprep.subr.mxu0 0.0
        %1355 = vmatpush1.xpose.msra.mxu0 0.0
        %1356 = vmatprep.mubr.f32.mxu0 0.0
        %1357 = vmatmul.mubr.f32.gmra.mrb[0].mxu0 %v1287
        %v1358 = vpop.f32.mrb[0].mxu0
        %v1359 = vadd.f32 0.0, %v1358
        %v1360 = vpop.f32.mrb[0].mxu0
        %1361 = vdwg.mxu0
        %1362 = vxpose.xlu0.b32.start [1/16] %v1285, 128
        %1363 = vxpose.xlu0.b32.cont [2/16] 0.0, 128
        %1364 = vxpose.xlu0.b32.cont [3/16] 0.0, 128
        %1365 = vxpose.xlu0.b32.cont [4/16] 0.0, 128
        %1366 = vxpose.xlu0.b32.cont [5/16] 0.0, 128
        %1367 = vxpose.xlu0.b32.cont [6/16] 0.0, 128
        %1368 = vxpose.xlu0.b32.cont [7/16] 0.0, 128
        %1369 = vxpose.xlu0.b32.cont [8/16] 0.0, 128
        %1370 = vxpose.xlu0.b32.cont [9/16] 0.0, 128
        %1371 = vxpose.xlu0.b32.cont [10/16] 0.0, 128
        %1372 = vxpose.xlu0.b32.cont [11/16] 0.0, 128
        %1373 = vxpose.xlu0.b32.cont [12/16] 0.0, 128
        %1374 = vxpose.xlu0.b32.cont [13/16] 0.0, 128
        %1375 = vxpose.xlu0.b32.cont [14/16] 0.0, 128
        %1376 = vxpose.xlu0.b32.cont [15/16] 0.0, 128
        %1377 = vxpose.xlu0.b32.end [16/16] 0.0, 128
        %v1378 = vpop.trf.xlu0
        %v1379 = vpop.trf.xlu0
        %v1380 = vpop.trf.xlu0
        %v1381 = vpop.trf.xlu0
        %v1382 = vpop.trf.xlu0
        %v1383 = vpop.trf.xlu0
        %v1384 = vpop.trf.xlu0
        %v1385 = vpop.trf.xlu0
        %v1386 = vpop.trf.xlu0
        %v1387 = vpop.trf.xlu0
        %v1388 = vpop.trf.xlu0
        %v1389 = vpop.trf.xlu0
        %v1390 = vpop.trf.xlu0
        %v1391 = vpop.trf.xlu0
        %v1392 = vpop.trf.xlu0
        %v1393 = vpop.trf.xlu0
        %v1394 = vlaneseq
        %v1395 = vshrl.u32 %v1394, 7
        %v1396 = vsub.s32 0, %v1395
        %v1397 = vrot.slane %v1378, %v1396
        %v1398 = vadd.f32 %v1281, %v1397
        %v1399 = vmul.f32 %v1359, 2.0
        %v1400 = vsub.f32 %v1398, %v1399
        %v1401 = vmax.f32 %v1400, 0.0
        %v1402 = vpack.c.bf16 %v1401, %v1401
        %v1403 = vld [vmem:[#allocation2] sm:$0xff]
        %v1406 = vunpack.c.l.s4 1966171168
        %v1407 = vunpack.c.0.s8 %v1406
        %v1408 = vlaneseq
        %v1409 = vshrl.u32 %v1408, 7
        %v1410 = vsub.s32 %v1407, %v1409
        %v1411 = vrot.slane %v1403, %v1410
        %v1412 = vcombine.high %v1411, %v1411
        %v1414 = vunpack.c.l.s4 1966171168
        %v1415 = vunpack.c.0.s8 %v1414
        %v1416 = vlaneseq
        %v1417 = vshrl.u32 %v1416, 7
        %v1418 = vsub.s32 %v1415, %v1417
        %v1419 = vrot.slane %v1411, %v1418
        %v1421 = vunpack.c.l.s4 1966171168
        %v1422 = vunpack.c.0.s8 %v1421
        %v1423 = vlaneseq
        %v1424 = vshrl.u32 %v1423, 7
        %v1425 = vsub.s32 %v1422, %v1424
        %v1426 = vrot.slane %v1412, %v1425
        %v1427 = vcombine.high %v1419, %v1419
        %v1428 = vcombine.high %v1426, %v1426
        %v1429 = vunpack.i.l.s16 %v1419
        %v1430 = vunpack.i.h.s16 %v1419
        %v1431 = vunpack.i.l.s16 %v1426
        %v1432 = vunpack.i.h.s16 %v1426
        %v1433 = vunpack.i.l.s16 %v1427
        %v1434 = vunpack.i.h.s16 %v1427
        %v1435 = vunpack.i.l.s16 %v1428
        %v1436 = vunpack.i.h.s16 %v1428
        %v1437 = vpack.i.b16 %v1429, %v1429
        %v1438 = vpack.i.b16 %v1430, %v1430
        %v1439 = vpack.i.b16 %v1431, %v1431
        %v1440 = vpack.i.b16 %v1432, %v1432
        %v1441 = vpack.i.b16 %v1433, %v1433
        %v1442 = vpack.i.b16 %v1434, %v1434
        %v1443 = vpack.i.b16 %v1435, %v1435
        %v1444 = vpack.i.b16 %v1436, %v1436
        %v1445 = vlaneseq
        %v1446 = vshrl.u32 %v1445, 7
        %v1447 = vsub.s32 0, %v1446
        %v1448 = vrot.slane %v1437, %v1447
        %v1449 = vlaneseq
        %v1450 = vshrl.u32 %v1449, 7
        %v1451 = vsub.s32 1, %v1450
        %v1452 = vrot.slane %v1437, %v1451
        %v1453 = vlaneseq
        %v1454 = vshrl.u32 %v1453, 7
        %v1455 = vsub.s32 0, %v1454
        %v1456 = vrot.slane %v1438, %v1455
        %v1457 = vlaneseq
        %v1458 = vshrl.u32 %v1457, 7
        %v1459 = vsub.s32 1, %v1458
        %v1460 = vrot.slane %v1438, %v1459
        %v1461 = vlaneseq
        %v1462 = vshrl.u32 %v1461, 7
        %v1463 = vsub.s32 0, %v1462
        %v1464 = vrot.slane %v1439, %v1463
        %v1465 = vlaneseq
        %v1466 = vshrl.u32 %v1465, 7
        %v1467 = vsub.s32 1, %v1466
        %v1468 = vrot.slane %v1439, %v1467
        %v1469 = vlaneseq
        %v1470 = vshrl.u32 %v1469, 7
        %v1471 = vsub.s32 0, %v1470
        %v1472 = vrot.slane %v1440, %v1471
        %v1473 = vlaneseq
        %v1474 = vshrl.u32 %v1473, 7
        %v1475 = vsub.s32 1, %v1474
        %v1476 = vrot.slane %v1440, %v1475
        %v1477 = vlaneseq
        %v1478 = vshrl.u32 %v1477, 7
        %v1479 = vsub.s32 0, %v1478
        %v1480 = vrot.slane %v1441, %v1479
        %v1481 = vlaneseq
        %v1482 = vshrl.u32 %v1481, 7
        %v1483 = vsub.s32 1, %v1482
        %v1484 = vrot.slane %v1441, %v1483
        %v1485 = vlaneseq
        %v1486 = vshrl.u32 %v1485, 7
        %v1487 = vsub.s32 0, %v1486
        %v1488 = vrot.slane %v1442, %v1487
        %v1489 = vlaneseq
        %v1490 = vshrl.u32 %v1489, 7
        %v1491 = vsub.s32 1, %v1490
        %v1492 = vrot.slane %v1442, %v1491
        %v1493 = vlaneseq
        %v1494 = vshrl.u32 %v1493, 7
        %v1495 = vsub.s32 0, %v1494
        %v1496 = vrot.slane %v1443, %v1495
        %v1497 = vlaneseq
        %v1498 = vshrl.u32 %v1497, 7
        %v1499 = vsub.s32 1, %v1498
        %v1500 = vrot.slane %v1443, %v1499
        %v1501 = vlaneseq
        %v1502 = vshrl.u32 %v1501, 7
        %v1503 = vsub.s32 0, %v1502
        %v1504 = vrot.slane %v1444, %v1503
        %v1505 = vlaneseq
        %v1506 = vshrl.u32 %v1505, 7
        %v1507 = vsub.s32 1, %v1506
        %v1508 = vrot.slane %v1444, %v1507
        %v1510 = vpack.i.b16 %v1448, %v1448
        %v1512 = vlaneseq
        %v1513 = vshrl.u32 %v1512, 7
        %v1514 = vsub.s32 0, %v1513
        %v1515 = vrot.slane %v1510, %v1514
        %v1517 = vpack.i.b16 %v1452, %v1452
        %v1519 = vlaneseq
        %v1520 = vshrl.u32 %v1519, 7
        %v1521 = vsub.s32 0, %v1520
        %v1522 = vrot.slane %v1517, %v1521
        %v1524 = vpack.i.b16 %v1456, %v1456
        %v1526 = vlaneseq
        %v1527 = vshrl.u32 %v1526, 7
        %v1528 = vsub.s32 0, %v1527
        %v1529 = vrot.slane %v1524, %v1528
        %v1531 = vpack.i.b16 %v1460, %v1460
        %v1533 = vlaneseq
        %v1534 = vshrl.u32 %v1533, 7
        %v1535 = vsub.s32 0, %v1534
        %v1536 = vrot.slane %v1531, %v1535
        %v1538 = vpack.i.b16 %v1464, %v1464
        %v1540 = vlaneseq
        %v1541 = vshrl.u32 %v1540, 7
        %v1542 = vsub.s32 0, %v1541
        %v1543 = vrot.slane %v1538, %v1542
        %v1545 = vpack.i.b16 %v1468, %v1468
        %v1547 = vlaneseq
        %v1548 = vshrl.u32 %v1547, 7
        %v1549 = vsub.s32 0, %v1548
        %v1550 = vrot.slane %v1545, %v1549
        %v1552 = vpack.i.b16 %v1472, %v1472
        %v1554 = vlaneseq
        %v1555 = vshrl.u32 %v1554, 7
        %v1556 = vsub.s32 0, %v1555
        %v1557 = vrot.slane %v1552, %v1556
        %v1559 = vpack.i.b16 %v1476, %v1476
        %v1561 = vlaneseq
        %v1562 = vshrl.u32 %v1561, 7
        %v1563 = vsub.s32 0, %v1562
        %v1564 = vrot.slane %v1559, %v1563
        %v1566 = vpack.i.b16 %v1480, %v1480
        %v1568 = vlaneseq
        %v1569 = vshrl.u32 %v1568, 7
        %v1570 = vsub.s32 0, %v1569
        %v1571 = vrot.slane %v1566, %v1570
        %v1573 = vpack.i.b16 %v1484, %v1484
        %v1575 = vlaneseq
        %v1576 = vshrl.u32 %v1575, 7
        %v1577 = vsub.s32 0, %v1576
        %v1578 = vrot.slane %v1573, %v1577
        %v1580 = vpack.i.b16 %v1488, %v1488
        %v1582 = vlaneseq
        %v1583 = vshrl.u32 %v1582, 7
        %v1584 = vsub.s32 0, %v1583
        %v1585 = vrot.slane %v1580, %v1584
        %v1587 = vpack.i.b16 %v1492, %v1492
        %v1589 = vlaneseq
        %v1590 = vshrl.u32 %v1589, 7
        %v1591 = vsub.s32 0, %v1590
        %v1592 = vrot.slane %v1587, %v1591
        %v1594 = vpack.i.b16 %v1496, %v1496
        %v1596 = vlaneseq
        %v1597 = vshrl.u32 %v1596, 7
        %v1598 = vsub.s32 0, %v1597
        %v1599 = vrot.slane %v1594, %v1598
        %v1601 = vpack.i.b16 %v1500, %v1500
        %v1603 = vlaneseq
        %v1604 = vshrl.u32 %v1603, 7
        %v1605 = vsub.s32 0, %v1604
        %v1606 = vrot.slane %v1601, %v1605
        %v1608 = vpack.i.b16 %v1504, %v1504
        %v1610 = vlaneseq
        %v1611 = vshrl.u32 %v1610, 7
        %v1612 = vsub.s32 0, %v1611
        %v1613 = vrot.slane %v1608, %v1612
        %v1615 = vpack.i.b16 %v1508, %v1508
        %v1617 = vlaneseq
        %v1618 = vshrl.u32 %v1617, 7
        %v1619 = vsub.s32 0, %v1618
        %v1620 = vrot.slane %v1615, %v1619
        %v1621 = vadd.bf16 %v1515, %v1275
        %v1622 = vadd.bf16 %v1522, %v1276
        %v1623 = vadd.bf16 %v1529, %v1275
        %v1624 = vadd.bf16 %v1536, %v1276
        %v1625 = vadd.bf16 %v1543, %v1275
        %v1626 = vadd.bf16 %v1550, %v1276
        %v1627 = vadd.bf16 %v1557, %v1275
        %v1628 = vadd.bf16 %v1564, %v1276
        %v1629 = vadd.bf16 %v1571, %v1275
        %v1630 = vadd.bf16 %v1578, %v1276
        %v1631 = vadd.bf16 %v1585, %v1275
        %v1632 = vadd.bf16 %v1592, %v1276
        %v1633 = vadd.bf16 %v1599, %v1275
        %v1634 = vadd.bf16 %v1606, %v1276
        %v1635 = vadd.bf16 %v1613, %v1275
        %v1636 = vadd.bf16 %v1620, %v1276
        %v1638 = vpack.i.b16 %v1402, %v1402
        %v1640 = vlaneseq
        %v1641 = vshrl.u32 %v1640, 7
        %v1642 = vsub.s32 0, %v1641
        %v1643 = vrot.slane %v1638, %v1642
        %1645 = vbcast.lane.c.b16.xlu0 %v1643, 256
        %v1646 = vpop.permute.xlu0 %1645
        %v1647 = vshrl.u32 %v1402, 16
        %v1648 = vpack.i.b16 %v1647, %v1647
        %v1650 = vlaneseq
        %v1651 = vshrl.u32 %v1650, 7
        %v1652 = vsub.s32 0, %v1651
        %v1653 = vrot.slane %v1648, %v1652
        %1655 = vbcast.lane.c.b16.xlu0 %v1653, 256
        %v1656 = vpop.permute.xlu0 %1655
        %v1657 = vlaneseq
        %v1658 = vshrl.u32 %v1657, 7
        %v1659 = vsub.s32 1, %v1658
        %v1660 = vrot.slane %v1638, %v1659
        %1662 = vbcast.lane.c.b16.xlu0 %v1660, 256
        %v1663 = vpop.permute.xlu0 %1662
        %v1664 = vlaneseq
        %v1665 = vshrl.u32 %v1664, 7
        %v1666 = vsub.s32 1, %v1665
        %v1667 = vrot.slane %v1648, %v1666
        %1669 = vbcast.lane.c.b16.xlu0 %v1667, 256
        %v1670 = vpop.permute.xlu0 %1669
        %v1671 = vlaneseq
        %v1672 = vshrl.u32 %v1671, 7
        %v1673 = vsub.s32 2, %v1672
        %v1674 = vrot.slane %v1638, %v1673
        %1676 = vbcast.lane.c.b16.xlu0 %v1674, 256
        %v1677 = vpop.permute.xlu0 %1676
        %v1678 = vlaneseq
        %v1679 = vshrl.u32 %v1678, 7
        %v1680 = vsub.s32 2, %v1679
        %v1681 = vrot.slane %v1648, %v1680
        %1683 = vbcast.lane.c.b16.xlu0 %v1681, 256
        %v1684 = vpop.permute.xlu0 %1683
        %v1685 = vlaneseq
        %v1686 = vshrl.u32 %v1685, 7
        %v1687 = vsub.s32 3, %v1686
        %v1688 = vrot.slane %v1638, %v1687
        %1690 = vbcast.lane.c.b16.xlu0 %v1688, 256
        %v1691 = vpop.permute.xlu0 %1690
        %v1692 = vlaneseq
        %v1693 = vshrl.u32 %v1692, 7
        %v1694 = vsub.s32 3, %v1693
        %v1695 = vrot.slane %v1648, %v1694
        %1697 = vbcast.lane.c.b16.xlu0 %v1695, 256
        %v1698 = vpop.permute.xlu0 %1697
        %v1699 = vld [vmem:[#allocation18] sm:$0x3]
        %v1702 = vunpack.c.l.s4 1966171168
        %v1703 = vunpack.c.0.s8 %v1702
        %v1704 = vlaneseq
        %v1705 = vshrl.u32 %v1704, 7
        %v1706 = vsub.s32 %v1703, %v1705
        %v1707 = vrot.slane %v1699, %v1706
        %v1708 = vcombine.high %v1707, %v1707
        %v1710 = vunpack.c.l.s4 1966171168
        %v1711 = vunpack.c.0.s8 %v1710
        %v1712 = vlaneseq
        %v1713 = vshrl.u32 %v1712, 7
        %v1714 = vsub.s32 %v1711, %v1713
        %v1715 = vrot.slane %v1707, %v1714
        %v1717 = vunpack.c.l.s4 1966171168
        %v1718 = vunpack.c.0.s8 %v1717
        %v1719 = vlaneseq
        %v1720 = vshrl.u32 %v1719, 7
        %v1721 = vsub.s32 %v1718, %v1720
        %v1722 = vrot.slane %v1708, %v1721
        %v1724 = vpack.i.b16 %v1715, %v1715
        %v1726 = vlaneseq
        %v1727 = vshrl.u32 %v1726, 7
        %v1728 = vsub.s32 0, %v1727
        %v1729 = vrot.slane %v1724, %v1728
        %v1731 = vpack.i.b16 %v1722, %v1722
        %v1733 = vlaneseq
        %v1734 = vshrl.u32 %v1733, 7
        %v1735 = vsub.s32 0, %v1734
        %v1736 = vrot.slane %v1731, %v1735
        %v1737 = vmul.bf16 %v1646, %v1729
        %v1738 = vmul.bf16 %v1646, %v1736
        %v1739 = vmul.bf16 %v1656, %v1729
        %v1740 = vmul.bf16 %v1656, %v1736
        %v1741 = vmul.bf16 %v1663, %v1729
        %v1742 = vmul.bf16 %v1663, %v1736
        %v1743 = vmul.bf16 %v1670, %v1729
        %v1744 = vmul.bf16 %v1670, %v1736
        %v1745 = vmul.bf16 %v1677, %v1729
        %v1746 = vmul.bf16 %v1677, %v1736
        %v1747 = vmul.bf16 %v1684, %v1729
        %v1748 = vmul.bf16 %v1684, %v1736
        %v1749 = vmul.bf16 %v1691, %v1729
        %v1750 = vmul.bf16 %v1691, %v1736
        %v1751 = vmul.bf16 %v1698, %v1729
        %v1752 = vmul.bf16 %v1698, %v1736
        %v1753 = vadd.bf16 %v1621, %v1737
        %v1754 = vadd.bf16 %v1622, %v1738
        %v1755 = vadd.bf16 %v1623, %v1739
        %v1756 = vadd.bf16 %v1624, %v1740
        %v1757 = vadd.bf16 %v1625, %v1741
        %v1758 = vadd.bf16 %v1626, %v1742
        %v1759 = vadd.bf16 %v1627, %v1743
        %v1760 = vadd.bf16 %v1628, %v1744
        %v1761 = vadd.bf16 %v1629, %v1745
        %v1762 = vadd.bf16 %v1630, %v1746
        %v1763 = vadd.bf16 %v1631, %v1747
        %v1764 = vadd.bf16 %v1632, %v1748
        %v1765 = vadd.bf16 %v1633, %v1749
        %v1766 = vadd.bf16 %v1634, %v1750
        %v1767 = vadd.bf16 %v1635, %v1751
        %v1768 = vadd.bf16 %v1636, %v1752
        %v1769 = vmul.bf16 %v1753, 1056980736
        %v1770 = vmul.bf16 %v1754, 1056980736
        %v1771 = vmul.bf16 %v1755, 1056980736
        %v1772 = vmul.bf16 %v1756, 1056980736
        %v1773 = vmul.bf16 %v1757, 1056980736
        %v1774 = vmul.bf16 %v1758, 1056980736
        %v1775 = vmul.bf16 %v1759, 1056980736
        %v1776 = vmul.bf16 %v1760, 1056980736
        %v1777 = vmul.bf16 %v1761, 1056980736
        %v1778 = vmul.bf16 %v1762, 1056980736
        %v1779 = vmul.bf16 %v1763, 1056980736
        %v1780 = vmul.bf16 %v1764, 1056980736
        %v1781 = vmul.bf16 %v1765, 1056980736
        %v1782 = vmul.bf16 %v1766, 1056980736
        %v1783 = vmul.bf16 %v1767, 1056980736
        %v1784 = vmul.bf16 %v1768, 1056980736
        %v1785 = vtanh.bf16.pop %v1769
        %v1786 = vtanh.bf16.pop %v1770
        %v1787 = vtanh.bf16.pop %v1771
        %v1788 = vtanh.bf16.pop %v1772
        %v1789 = vtanh.bf16.pop %v1773
        %v1790 = vtanh.bf16.pop %v1774
        %v1791 = vtanh.bf16.pop %v1775
        %v1792 = vtanh.bf16.pop %v1776
        %v1793 = vtanh.bf16.pop %v1777
        %v1794 = vtanh.bf16.pop %v1778
        %v1795 = vtanh.bf16.pop %v1779
        %v1796 = vtanh.bf16.pop %v1780
        %v1797 = vtanh.bf16.pop %v1781
        %v1798 = vtanh.bf16.pop %v1782
        %v1799 = vtanh.bf16.pop %v1783
        %v1800 = vtanh.bf16.pop %v1784
        %v1801 = vadd.bf16 %v1785, 1065369472
        %v1802 = vadd.bf16 %v1786, 1065369472
        %v1803 = vadd.bf16 %v1787, 1065369472
        %v1804 = vadd.bf16 %v1788, 1065369472
        %v1805 = vadd.bf16 %v1789, 1065369472
        %v1806 = vadd.bf16 %v1790, 1065369472
        %v1807 = vadd.bf16 %v1791, 1065369472
        %v1808 = vadd.bf16 %v1792, 1065369472
        %v1809 = vadd.bf16 %v1793, 1065369472
        %v1810 = vadd.bf16 %v1794, 1065369472
        %v1811 = vadd.bf16 %v1795, 1065369472
        %v1812 = vadd.bf16 %v1796, 1065369472
        %v1813 = vadd.bf16 %v1797, 1065369472
        %v1814 = vadd.bf16 %v1798, 1065369472
        %v1815 = vadd.bf16 %v1799, 1065369472
        %v1816 = vadd.bf16 %v1800, 1065369472
        %v1817 = vmul.bf16 %v1769, %v1801
        %v1818 = vmul.bf16 %v1770, %v1802
        %v1819 = vmul.bf16 %v1771, %v1803
        %v1820 = vmul.bf16 %v1772, %v1804
        %v1821 = vmul.bf16 %v1773, %v1805
        %v1822 = vmul.bf16 %v1774, %v1806
        %v1823 = vmul.bf16 %v1775, %v1807
        %v1824 = vmul.bf16 %v1776, %v1808
        %v1825 = vmul.bf16 %v1777, %v1809
        %v1826 = vmul.bf16 %v1778, %v1810
        %v1827 = vmul.bf16 %v1779, %v1811
        %v1828 = vmul.bf16 %v1780, %v1812
        %v1829 = vmul.bf16 %v1781, %v1813
        %v1830 = vmul.bf16 %v1782, %v1814
        %v1831 = vmul.bf16 %v1783, %v1815
        %v1832 = vmul.bf16 %v1784, %v1816
        %v1849 = vunpack.c.l.b16 %v1817
        %v1850 = vunpack.c.l.b16 %v1818
        %v1851 = vunpack.c.l.b16 %v1819
        %v1852 = vunpack.c.l.b16 %v1820
        %v1853 = vunpack.c.l.b16 %v1821
        %v1854 = vunpack.c.l.b16 %v1822
        %v1855 = vunpack.c.l.b16 %v1823
        %v1856 = vunpack.c.l.b16 %v1824
        %v1857 = vunpack.c.l.b16 %v1825
        %v1858 = vunpack.c.l.b16 %v1826
        %v1859 = vunpack.c.l.b16 %v1827
        %v1860 = vunpack.c.l.b16 %v1828
        %v1861 = vunpack.c.l.b16 %v1829
        %v1862 = vunpack.c.l.b16 %v1830
        %v1863 = vunpack.c.l.b16 %v1831
        %v1864 = vunpack.c.l.b16 %v1832
        %v1865 = vld [vmem:[#allocation21] sm:$0xf]
        %v1866 = vld [vmem:[#allocation21 + $0x4] sm:$0xf]
        %v1867 = vld [vmem:[#allocation21 + $0x8] sm:$0xf]
        %v1868 = vld [vmem:[#allocation21 + $0xc] sm:$0xf]
        %v1869 = vld [vmem:[#allocation21 + $0x10] sm:$0xf]
        %v1870 = vld [vmem:[#allocation21 + $0x14] sm:$0xf]
        %v1871 = vld [vmem:[#allocation21 + $0x18] sm:$0xf]
        %v1872 = vld [vmem:[#allocation21 + $0x1c] sm:$0xf]
        %v1873 = vld [vmem:[#allocation21 + $0x20] sm:$0xf]
        %v1874 = vld [vmem:[#allocation21 + $0x24] sm:$0xf]
        %v1875 = vld [vmem:[#allocation21 + $0x28] sm:$0xf]
        %v1876 = vld [vmem:[#allocation21 + $0x2c] sm:$0xf]
        %v1877 = vld [vmem:[#allocation21 + $0x30] sm:$0xf]
        %v1878 = vld [vmem:[#allocation21 + $0x34] sm:$0xf]
        %v1879 = vld [vmem:[#allocation21 + $0x38] sm:$0xf]
        %v1880 = vld [vmem:[#allocation21 + $0x3c] sm:$0xf]
        %v1881 = vld [vmem:[#allocation21 + $0x40] sm:$0xf]
        %v1882 = vld [vmem:[#allocation21 + $0x44] sm:$0xf]
        %v1883 = vld [vmem:[#allocation21 + $0x48] sm:$0xf]
        %v1884 = vld [vmem:[#allocation21 + $0x4c] sm:$0xf]
        %v1885 = vld [vmem:[#allocation21 + $0x50] sm:$0xf]
        %v1886 = vld [vmem:[#allocation21 + $0x54] sm:$0xf]
        %v1887 = vld [vmem:[#allocation21 + $0x58] sm:$0xf]
        %v1888 = vld [vmem:[#allocation21 + $0x5c] sm:$0xf]
        %v1889 = vld [vmem:[#allocation21 + $0x60] sm:$0xf]
        %v1890 = vld [vmem:[#allocation21 + $0x64] sm:$0xf]
        %v1891 = vld [vmem:[#allocation21 + $0x68] sm:$0xf]
        %v1892 = vld [vmem:[#allocation21 + $0x6c] sm:$0xf]
        %v1893 = vld [vmem:[#allocation21 + $0x70] sm:$0xf]
        %v1894 = vld [vmem:[#allocation21 + $0x74] sm:$0xf]
        %v1895 = vld [vmem:[#allocation21 + $0x78] sm:$0xf]
        %v1896 = vld [vmem:[#allocation21 + $0x7c] sm:$0xf]
        %v1897 = vld [vmem:[#allocation22] sm:$0x1]
        %v1899 = vlaneseq
        %v1900 = vshrl.u32 %v1899, 7
        %v1901 = vsub.s32 0, %v1900
        %v1902 = vrot.slane %v1897, %v1901
        %v1904 = vpack.c.b16 %v1851, %v1849
        %v1905 = vpack.c.b16 %v1852, %v1850
        %v1906 = vpack.c.b16 %v1855, %v1853
        %v1907 = vpack.c.b16 %v1856, %v1854
        %v1908 = vpack.c.b16 %v1859, %v1857
        %v1909 = vpack.c.b16 %v1860, %v1858
        %v1910 = vpack.c.b16 %v1863, %v1861
        %v1911 = vpack.c.b16 %v1864, %v1862
        %v1952 = vunpack.c.l.b16 %v1865
        %v1953 = vunpack.c.l.b16 %v1866
        %v1954 = vunpack.c.l.b16 %v1867
        %v1955 = vunpack.c.l.b16 %v1868
        %v1956 = vunpack.c.l.b16 %v1869
        %v1957 = vunpack.c.l.b16 %v1870
        %v1958 = vunpack.c.l.b16 %v1871
        %v1959 = vunpack.c.l.b16 %v1872
        %v1960 = vunpack.c.l.b16 %v1873
        %v1961 = vunpack.c.l.b16 %v1874
        %v1962 = vunpack.c.l.b16 %v1875
        %v1963 = vunpack.c.l.b16 %v1876
        %v1964 = vunpack.c.l.b16 %v1877
        %v1965 = vunpack.c.l.b16 %v1878
        %v1966 = vunpack.c.l.b16 %v1879
        %v1967 = vunpack.c.l.b16 %v1880
        %v1968 = vunpack.c.l.b16 %v1881
        %v1969 = vunpack.c.l.b16 %v1882
        %v1970 = vunpack.c.l.b16 %v1883
        %v1971 = vunpack.c.l.b16 %v1884
        %v1972 = vunpack.c.l.b16 %v1885
        %v1973 = vunpack.c.l.b16 %v1886
        %v1974 = vunpack.c.l.b16 %v1887
        %v1975 = vunpack.c.l.b16 %v1888
        %v1976 = vunpack.c.l.b16 %v1889
        %v1977 = vunpack.c.l.b16 %v1890
        %v1978 = vunpack.c.l.b16 %v1891
        %v1979 = vunpack.c.l.b16 %v1892
        %v1980 = vunpack.c.l.b16 %v1893
        %v1981 = vunpack.c.l.b16 %v1894
        %v1982 = vunpack.c.l.b16 %v1895
        %v1983 = vunpack.c.l.b16 %v1896
        %v1984 = vpack.c.b16 %v1953, %v1952
        %v1985 = vpack.c.b16 %v1955, %v1954
        %v1986 = vpack.c.b16 %v1957, %v1956
        %v1987 = vpack.c.b16 %v1959, %v1958
        %v1988 = vpack.c.b16 %v1961, %v1960
        %v1989 = vpack.c.b16 %v1963, %v1962
        %v1990 = vpack.c.b16 %v1965, %v1964
        %v1991 = vpack.c.b16 %v1967, %v1966
        %v1992 = vpack.c.b16 %v1969, %v1968
        %v1993 = vpack.c.b16 %v1971, %v1970
        %v1994 = vpack.c.b16 %v1973, %v1972
        %v1995 = vpack.c.b16 %v1975, %v1974
        %v1996 = vpack.c.b16 %v1977, %v1976
        %v1997 = vpack.c.b16 %v1979, %v1978
        %v1998 = vpack.c.b16 %v1981, %v1980
        %v1999 = vpack.c.b16 %v1983, %v1982
        %2016 = vmatprep.subr.bf16.mxu0 0
        %2017 = vmatpush1.bf16.msra.mxu0 %v1984
        %2018 = vmatprep.subr.bf16.mxu0 0
        %2019 = vmatpush1.bf16.msra.mxu0 %v1985
        %2020 = vmatprep.subr.bf16.mxu0 0
        %2021 = vmatpush1.bf16.msra.mxu0 %v1986
        %2022 = vmatprep.subr.bf16.mxu0 0
        %2023 = vmatpush1.bf16.msra.mxu0 %v1987
        %2024 = vmatprep.subr.bf16.mxu0 0
        %2025 = vmatpush1.bf16.msra.mxu0 %v1988
        %2026 = vmatprep.subr.bf16.mxu0 0
        %2027 = vmatpush1.bf16.msra.mxu0 %v1989
        %2028 = vmatprep.subr.bf16.mxu0 0
        %2029 = vmatpush1.bf16.msra.mxu0 %v1990
        %2030 = vmatprep.subr.bf16.mxu0 0
        %2031 = vmatpush1.bf16.msra.mxu0 %v1991
        %2032 = vmatprep.subr.bf16.mxu0 0
        %2033 = vmatpush1.bf16.msra.mxu0 %v1992
        %2034 = vmatprep.subr.bf16.mxu0 0
        %2035 = vmatpush1.bf16.msra.mxu0 %v1993
        %2036 = vmatprep.subr.bf16.mxu0 0
        %2037 = vmatpush1.bf16.msra.mxu0 %v1994
        %2038 = vmatprep.subr.bf16.mxu0 0
        %2039 = vmatpush1.bf16.msra.mxu0 %v1995
        %2040 = vmatprep.subr.bf16.mxu0 0
        %2041 = vmatpush1.bf16.msra.mxu0 %v1996
        %2042 = vmatprep.subr.bf16.mxu0 0
        %2043 = vmatpush1.bf16.msra.mxu0 %v1997
        %2044 = vmatprep.subr.bf16.mxu0 0
        %2045 = vmatpush1.bf16.msra.mxu0 %v1998
        %2046 = vmatprep.subr.bf16.mxu0 0
        %2047 = vmatpush1.bf16.msra.mxu0 %v1999
        %2048 = vmatprep.mubr.bf16.mxu0 %v1905
        %2049 = vmatmul.mubr.bf16.gmra.mrb[0].mxu0 %v1904
        %v2050 = vpop.f32.mrb[0].mxu0
        %v2051 = vadd.f32 %v1902, %v2050
        %v2052 = vpop.f32.mrb[0].mxu0
        %v2053 = vpop.f32.mrb[0].mxu0
        %v2054 = vadd.f32 %v1902, %v2053
        %v2055 = vpop.f32.mrb[0].mxu0
        %2056 = vmatprep.mubr.bf16.mxu0 %v1907
        %2057 = vmatmul.mubr.bf16.gmra.mrb[0].mxu0 %v1906
        %v2058 = vpop.f32.mrb[0].mxu0
        %v2059 = vadd.f32 %v1902, %v2058
        %v2060 = vpop.f32.mrb[0].mxu0
        %v2061 = vpop.f32.mrb[0].mxu0
        %v2062 = vadd.f32 %v1902, %v2061
        %v2063 = vpop.f32.mrb[0].mxu0
        %2064 = vmatprep.mubr.bf16.mxu0 %v1909
        %2065 = vmatmul.mubr.bf16.gmra.mrb[0].mxu0 %v1908
        %v2066 = vpop.f32.mrb[0].mxu0
        %v2067 = vadd.f32 %v1902, %v2066
        %v2068 = vpop.f32.mrb[0].mxu0
        %v2069 = vpop.f32.mrb[0].mxu0
        %v2070 = vadd.f32 %v1902, %v2069
        %v2071 = vpop.f32.mrb[0].mxu0
        %2072 = vmatprep.mubr.bf16.mxu0 %v1911
        %2073 = vmatmul.mubr.bf16.gmra.mrb[0].mxu0 %v1910
        %v2074 = vpop.f32.mrb[0].mxu0
        %v2075 = vadd.f32 %v1902, %v2074
        %v2076 = vpop.f32.mrb[0].mxu0
        %v2077 = vpop.f32.mrb[0].mxu0
        %v2078 = vadd.f32 %v1902, %v2077
        %v2079 = vpop.f32.mrb[0].mxu0
        %2080 = vdwg.mxu0
        %v2081 = vpack.c.bf16 %v2054, %v2051
        %v2082 = vpack.c.bf16 %v2062, %v2059
        %v2083 = vpack.c.bf16 %v2070, %v2067
        %v2084 = vpack.c.bf16 %v2078, %v2075
        %v2085 = vmul.bf16 %v2081, 1056980736
        %v2086 = vmul.bf16 %v2082, 1056980736
        %v2087 = vmul.bf16 %v2083, 1056980736
        %v2088 = vmul.bf16 %v2084, 1056980736
        %v2089 = vtanh.bf16.pop %v2085
        %v2090 = vtanh.bf16.pop %v2086
        %v2091 = vtanh.bf16.pop %v2087
        %v2092 = vtanh.bf16.pop %v2088
        %v2093 = vadd.bf16 %v2089, 1065369472
        %v2094 = vadd.bf16 %v2090, 1065369472
        %v2095 = vadd.bf16 %v2091, 1065369472
        %v2096 = vadd.bf16 %v2092, 1065369472
        %v2097 = vmul.bf16 %v2085, %v2093
        %v2098 = vmul.bf16 %v2086, %v2094
        %v2099 = vmul.bf16 %v2087, %v2095
        %v2100 = vmul.bf16 %v2088, %v2096
        %v2101 = vld [vmem:[#allocation24] sm:$0xf]
        %v2102 = vld [vmem:[#allocation24 + $0x4] sm:$0xf]
        %v2103 = vld [vmem:[#allocation24 + $0x8] sm:$0xf]
        %v2104 = vld [vmem:[#allocation24 + $0xc] sm:$0xf]
        %v2105 = vld [vmem:[#allocation24 + $0x10] sm:$0xf]
        %v2106 = vld [vmem:[#allocation24 + $0x14] sm:$0xf]
        %v2107 = vld [vmem:[#allocation24 + $0x18] sm:$0xf]
        %v2108 = vld [vmem:[#allocation24 + $0x1c] sm:$0xf]
        %v2109 = vld [vmem:[#allocation24 + $0x20] sm:$0xf]
        %v2110 = vld [vmem:[#allocation24 + $0x24] sm:$0xf]
        %v2111 = vld [vmem:[#allocation24 + $0x28] sm:$0xf]
        %v2112 = vld [vmem:[#allocation24 + $0x2c] sm:$0xf]
        %v2113 = vld [vmem:[#allocation24 + $0x30] sm:$0xf]
        %v2114 = vld [vmem:[#allocation24 + $0x34] sm:$0xf]
        %v2115 = vld [vmem:[#allocation24 + $0x38] sm:$0xf]
        %v2116 = vld [vmem:[#allocation24 + $0x3c] sm:$0xf]
        %v2117 = vld [vmem:[#allocation25] sm:$0x1]
        %v2119 = vlaneseq
        %v2120 = vshrl.u32 %v2119, 7
        %v2121 = vsub.s32 0, %v2120
        %v2122 = vrot.slane %v2117, %v2121
        %v2140 = vunpack.c.l.b16 %v2101
        %v2141 = vunpack.c.l.b16 %v2102
        %v2142 = vunpack.c.l.b16 %v2103
        %v2143 = vunpack.c.l.b16 %v2104
        %v2144 = vunpack.c.l.b16 %v2105
        %v2145 = vunpack.c.l.b16 %v2106
        %v2146 = vunpack.c.l.b16 %v2107
        %v2147 = vunpack.c.l.b16 %v2108
        %v2148 = vunpack.c.l.b16 %v2109
        %v2149 = vunpack.c.l.b16 %v2110
        %v2150 = vunpack.c.l.b16 %v2111
        %v2151 = vunpack.c.l.b16 %v2112
        %v2152 = vunpack.c.l.b16 %v2113
        %v2153 = vunpack.c.l.b16 %v2114
        %v2154 = vunpack.c.l.b16 %v2115
        %v2155 = vunpack.c.l.b16 %v2116
        %v2156 = vpack.c.b16 %v2141, %v2140
        %v2157 = vpack.c.b16 %v2143, %v2142
        %v2158 = vpack.c.b16 %v2145, %v2144
        %v2159 = vpack.c.b16 %v2147, %v2146
        %v2160 = vpack.c.b16 %v2149, %v2148
        %v2161 = vpack.c.b16 %v2151, %v2150
        %v2162 = vpack.c.b16 %v2153, %v2152
        %v2163 = vpack.c.b16 %v2155, %v2154
        %2172 = vmatprep.subr.bf16.mxu0 0
        %2173 = vmatpush1.bf16.msra.mxu0 %v2156
        %2174 = vmatprep.subr.bf16.mxu0 0
        %2175 = vmatpush1.bf16.msra.mxu0 %v2157
        %2176 = vmatprep.subr.bf16.mxu0 0
        %2177 = vmatpush1.bf16.msra.mxu0 %v2158
        %2178 = vmatprep.subr.bf16.mxu0 0
        %2179 = vmatpush1.bf16.msra.mxu0 %v2159
        %2180 = vmatprep.subr.bf16.mxu0 0
        %2181 = vmatpush1.bf16.msra.mxu0 %v2160
        %2182 = vmatprep.subr.bf16.mxu0 0
        %2183 = vmatpush1.bf16.msra.mxu0 %v2161
        %2184 = vmatprep.subr.bf16.mxu0 0
        %2185 = vmatpush1.bf16.msra.mxu0 %v2162
        %2186 = vmatprep.subr.bf16.mxu0 0
        %2187 = vmatpush1.bf16.msra.mxu0 %v2163
        %2188 = vmatprep.subr.bf16.mxu0 0
        %2189 = vmatpush1.bf16.msra.mxu0 0
        %2190 = vmatprep.subr.bf16.mxu0 0
        %2191 = vmatpush1.bf16.msra.mxu0 0
        %2192 = vmatprep.subr.bf16.mxu0 0
        %2193 = vmatpush1.bf16.msra.mxu0 0
        %2194 = vmatprep.subr.bf16.mxu0 0
        %2195 = vmatpush1.bf16.msra.mxu0 0
        %2196 = vmatprep.subr.bf16.mxu0 0
        %2197 = vmatpush1.bf16.msra.mxu0 0
        %2198 = vmatprep.subr.bf16.mxu0 0
        %2199 = vmatpush1.bf16.msra.mxu0 0
        %2200 = vmatprep.subr.bf16.mxu0 0
        %2201 = vmatpush1.bf16.msra.mxu0 0
        %2202 = vmatprep.subr.bf16.mxu0 0
        %2203 = vmatpush1.bf16.msra.mxu0 0
        %2204 = vmatprep.mubr.bf16.mxu0 0
        %2205 = vmatmul.mubr.bf16.gmra.mrb[0].mxu0 %v2097
        %v2206 = vpop.f32.mrb[0].mxu0
        %v2207 = vadd.f32 %v2122, %v2206
        %v2208 = vpop.f32.mrb[0].mxu0
        %v2209 = vpop.f32.mrb[0].mxu0
        %v2210 = vadd.f32 %v2122, %v2209
        %v2211 = vpop.f32.mrb[0].mxu0
        %2212 = vmatprep.mubr.bf16.mxu0 0
        %2213 = vmatmul.mubr.bf16.gmra.mrb[0].mxu0 %v2098
        %v2214 = vpop.f32.mrb[0].mxu0
        %v2215 = vadd.f32 %v2122, %v2214
        %v2216 = vpop.f32.mrb[0].mxu0
        %v2217 = vpop.f32.mrb[0].mxu0
        %v2218 = vadd.f32 %v2122, %v2217
        %v2219 = vpop.f32.mrb[0].mxu0
        %2220 = vmatprep.mubr.bf16.mxu0 0
        %2221 = vmatmul.mubr.bf16.gmra.mrb[0].mxu0 %v2099
        %v2222 = vpop.f32.mrb[0].mxu0
        %v2223 = vadd.f32 %v2122, %v2222
        %v2224 = vpop.f32.mrb[0].mxu0
        %v2225 = vpop.f32.mrb[0].mxu0
        %v2226 = vadd.f32 %v2122, %v2225
        %v2227 = vpop.f32.mrb[0].mxu0
        %2228 = vmatprep.mubr.bf16.mxu0 0
        %2229 = vmatmul.mubr.bf16.gmra.mrb[0].mxu0 %v2100
        %v2230 = vpop.f32.mrb[0].mxu0
        %v2231 = vadd.f32 %v2122, %v2230
        %v2232 = vpop.f32.mrb[0].mxu0
        %v2233 = vpop.f32.mrb[0].mxu0
        %v2234 = vadd.f32 %v2122, %v2233
        %v2235 = vpop.f32.mrb[0].mxu0
        %2236 = vdwg.mxu0
        %v2237 = vpack.c.bf16 %v2210, %v2207
        %v2238 = vpack.c.bf16 %v2218, %v2215
        %v2239 = vpack.c.bf16 %v2226, %v2223
        %v2240 = vpack.c.bf16 %v2234, %v2231
        %v2241 = vmul.bf16 %v2237, 1056980736
        %v2242 = vmul.bf16 %v2238, 1056980736
        %v2243 = vmul.bf16 %v2239, 1056980736
        %v2244 = vmul.bf16 %v2240, 1056980736
        %v2245 = vtanh.bf16.pop %v2241
        %v2246 = vtanh.bf16.pop %v2242
        %v2247 = vtanh.bf16.pop %v2243
        %v2248 = vtanh.bf16.pop %v2244
        %v2249 = vadd.bf16 %v2245, 1065369472
        %v2250 = vadd.bf16 %v2246, 1065369472
        %v2251 = vadd.bf16 %v2247, 1065369472
        %v2252 = vadd.bf16 %v2248, 1065369472
        %v2253 = vmul.bf16 %v2241, %v2249
        %v2254 = vmul.bf16 %v2242, %v2250
        %v2255 = vmul.bf16 %v2243, %v2251
        %v2256 = vmul.bf16 %v2244, %v2252
        %v2257 = vld [vmem:[#allocation27] sm:$0x1]
        %v2259 = vpack.i.b16 %v2257, %v2257
        %v2261 = vlaneseq
        %v2262 = vshrl.u32 %v2261, 7
        %v2263 = vsub.s32 0, %v2262
        %v2264 = vrot.slane %v2259, %v2263
        %v2265 = vmul.bf16 %v2253, %v2264
        %v2266 = vmul.bf16 %v2254, %v2264
        %v2267 = vmul.bf16 %v2255, %v2264
        %v2268 = vmul.bf16 %v2256, %v2264
        %v2269 = vunpack.c.l.bf16 %v2265
        %v2270 = vunpack.c.h.bf16 %v2265
        %v2271 = vunpack.c.l.bf16 %v2266
        %v2272 = vunpack.c.h.bf16 %v2266
        %v2273 = vunpack.c.l.bf16 %v2267
        %v2274 = vunpack.c.h.bf16 %v2267
        %v2275 = vunpack.c.l.bf16 %v2268
        %v2276 = vunpack.c.h.bf16 %v2268
        %2277 = vadd.xlane.f32.xlu0 %v2269
        %v2278 = vpop.xlane.xlu0 %2277
        %2279 = vadd.xlane.f32.xlu0 %v2270
        %v2280 = vpop.xlane.xlu0 %2279
        %2281 = vadd.xlane.f32.xlu0 %v2271
        %v2282 = vpop.xlane.xlu0 %2281
        %2283 = vadd.xlane.f32.xlu0 %v2272
        %v2284 = vpop.xlane.xlu0 %2283
        %2285 = vadd.xlane.f32.xlu0 %v2273
        %v2286 = vpop.xlane.xlu0 %2285
        %2287 = vadd.xlane.f32.xlu0 %v2274
        %v2288 = vpop.xlane.xlu0 %2287
        %2289 = vadd.xlane.f32.xlu0 %v2275
        %v2290 = vpop.xlane.xlu0 %2289
        %2291 = vadd.xlane.f32.xlu0 %v2276
        %v2292 = vpop.xlane.xlu0 %2291
        %v2293 = vld [vmem:[#allocation6] sm:$0x1]
        %v2295 = vlaneseq
        %v2296 = vshrl.u32 %v2295, 7
        %v2297 = vsub.s32 0, %v2296
        %v2298 = vrot.slane %v2293, %v2297
        %2299 = vset.pattern.permute.xlu0 0
        %2300 = vperm.xlu0 %2299, %v2298
        %v2301 = vpop.permute.xlu0 %2300
        %v2303 = vadd.f32 %v2278, %v2301
        %v2304 = vadd.f32 %v2280, %v2301
        %v2305 = vadd.f32 %v2282, %v2301
        %v2306 = vadd.f32 %v2284, %v2301
        %v2307 = vadd.f32 %v2286, %v2301
        %v2308 = vadd.f32 %v2288, %v2301
        %v2309 = vadd.f32 %v2290, %v2301
        %v2310 = vadd.f32 %v2292, %v2301
        %v2315 = vunpack.c.l.b16 %v2097
        %v2316 = vunpack.c.h.b16 %v2097
        %v2317 = vunpack.c.l.b16 %v2098
        %v2318 = vunpack.c.h.b16 %v2098
        %v2319 = vunpack.c.l.b16 %v2099
        %v2320 = vunpack.c.h.b16 %v2099
        %v2321 = vunpack.c.l.b16 %v2100
        %v2322 = vunpack.c.h.b16 %v2100
        %v2323 = vpack.c.b16 %v2315, %v2315
        %v2324 = vpack.c.b16 %v2316, %v2316
        %v2325 = vpack.c.b16 %v2317, %v2317
        %v2326 = vpack.c.b16 %v2318, %v2318
        %v2327 = vpack.c.b16 %v2319, %v2319
        %v2328 = vpack.c.b16 %v2320, %v2320
        %v2329 = vpack.c.b16 %v2321, %v2321
        %v2330 = vpack.c.b16 %v2322, %v2322
        %v2339 = vld [vmem:[#allocation3] sm:$0xff]
        %v2340 = vunpack.c.l.bf16 %v2323
        %v2341 = vunpack.c.l.bf16 %v2324
        %v2342 = vunpack.c.l.bf16 %v2325
        %v2343 = vunpack.c.l.bf16 %v2326
        %v2344 = vunpack.c.l.bf16 %v2327
        %v2345 = vunpack.c.l.bf16 %v2328
        %v2346 = vunpack.c.l.bf16 %v2329
        %v2347 = vunpack.c.l.bf16 %v2330
        %v2348 = vrot.slane %v2340, 4
        %v2349 = vadd.f32 %v2340, %v2348
        %v2350 = vrot.slane %v2349, 2
        %v2351 = vadd.f32 %v2349, %v2350
        %v2352 = vrot.slane %v2351, 1
        %v2353 = vadd.f32 %v2351, %v2352
        %v2354 = vrot.slane %v2341, 4
        %v2355 = vadd.f32 %v2341, %v2354
        %v2356 = vrot.slane %v2355, 2
        %v2357 = vadd.f32 %v2355, %v2356
        %v2358 = vrot.slane %v2357, 1
        %v2359 = vadd.f32 %v2357, %v2358
        %v2360 = vrot.slane %v2342, 4
        %v2361 = vadd.f32 %v2342, %v2360
        %v2362 = vrot.slane %v2361, 2
        %v2363 = vadd.f32 %v2361, %v2362
        %v2364 = vrot.slane %v2363, 1
        %v2365 = vadd.f32 %v2363, %v2364
        %v2366 = vrot.slane %v2343, 4
        %v2367 = vadd.f32 %v2343, %v2366
        %v2368 = vrot.slane %v2367, 2
        %v2369 = vadd.f32 %v2367, %v2368
        %v2370 = vrot.slane %v2369, 1
        %v2371 = vadd.f32 %v2369, %v2370
        %v2372 = vrot.slane %v2344, 4
        %v2373 = vadd.f32 %v2344, %v2372
        %v2374 = vrot.slane %v2373, 2
        %v2375 = vadd.f32 %v2373, %v2374
        %v2376 = vrot.slane %v2375, 1
        %v2377 = vadd.f32 %v2375, %v2376
        %v2378 = vrot.slane %v2345, 4
        %v2379 = vadd.f32 %v2345, %v2378
        %v2380 = vrot.slane %v2379, 2
        %v2381 = vadd.f32 %v2379, %v2380
        %v2382 = vrot.slane %v2381, 1
        %v2383 = vadd.f32 %v2381, %v2382
        %v2384 = vrot.slane %v2346, 4
        %v2385 = vadd.f32 %v2346, %v2384
        %v2386 = vrot.slane %v2385, 2
        %v2387 = vadd.f32 %v2385, %v2386
        %v2388 = vrot.slane %v2387, 1
        %v2389 = vadd.f32 %v2387, %v2388
        %v2390 = vrot.slane %v2347, 4
        %v2391 = vadd.f32 %v2347, %v2390
        %v2392 = vrot.slane %v2391, 2
        %v2393 = vadd.f32 %v2391, %v2392
        %v2394 = vrot.slane %v2393, 1
        %v2395 = vadd.f32 %v2393, %v2394
        %vm2404 = vcmask 1041409
        %v2405 = vsel %vm2404, %v2359, %v2353
        %vm2406 = vcmask 1042434
        %v2407 = vsel %vm2406, %v2365, %v2405
        %vm2408 = vcmask 1043459
        %v2409 = vsel %vm2408, %v2371, %v2407
        %vm2410 = vcmask 1044484
        %v2411 = vsel %vm2410, %v2377, %v2409
        %vm2412 = vcmask 1045509
        %v2413 = vsel %vm2412, %v2383, %v2411
        %vm2414 = vcmask 1046534
        %v2415 = vsel %vm2414, %v2389, %v2413
        %vm2416 = vcmask 1047559
        %v2417 = vsel %vm2416, %v2395, %v2415
        %v2419 = vadd.f32 %v2339, %v2417
        %2420 = vst [vmem:[#allocation3] sm:$0xff] %v2419
        %v2421 = vld [vmem:[#allocation4] sm:$0xff]
        %v2430 = vlaneseq
        %v2431 = vand.u32 %v2430, 127
        %v2432 = vlaneseq
        %v2433 = vshrl.u32 %v2432, 7
        %v2434 = vsub.s32 %v2431, %v2433
        %v2435 = vrot.slane %v2303, %v2434
        %v2436 = vlaneseq
        %v2437 = vshrl.u32 %v2436, 7
        %v2438 = vsub.s32 %v2431, %v2437
        %v2439 = vrot.slane %v2304, %v2438
        %v2440 = vlaneseq
        %v2441 = vshrl.u32 %v2440, 7
        %v2442 = vsub.s32 %v2431, %v2441
        %v2443 = vrot.slane %v2305, %v2442
        %v2444 = vlaneseq
        %v2445 = vshrl.u32 %v2444, 7
        %v2446 = vsub.s32 %v2431, %v2445
        %v2447 = vrot.slane %v2306, %v2446
        %v2448 = vlaneseq
        %v2449 = vshrl.u32 %v2448, 7
        %v2450 = vsub.s32 %v2431, %v2449
        %v2451 = vrot.slane %v2307, %v2450
        %v2452 = vlaneseq
        %v2453 = vshrl.u32 %v2452, 7
        %v2454 = vsub.s32 %v2431, %v2453
        %v2455 = vrot.slane %v2308, %v2454
        %v2456 = vlaneseq
        %v2457 = vshrl.u32 %v2456, 7
        %v2458 = vsub.s32 %v2431, %v2457
        %v2459 = vrot.slane %v2309, %v2458
        %v2460 = vlaneseq
        %v2461 = vshrl.u32 %v2460, 7
        %v2462 = vsub.s32 %v2431, %v2461
        %v2463 = vrot.slane %v2310, %v2462
        %v2464 = vsel %vm2404, %v2439, %v2435
        %v2465 = vsel %vm2406, %v2443, %v2464
        %v2466 = vsel %vm2408, %v2447, %v2465
        %v2467 = vsel %vm2410, %v2451, %v2466
        %v2468 = vsel %vm2412, %v2455, %v2467
        %v2469 = vsel %vm2414, %v2459, %v2468
        %v2470 = vsel %vm2416, %v2463, %v2469
        %v2472 = vsel %vm1278, %v2470, 0.0
        %2473 = vadd.xlane.f32.xlu0 %v2472
        %v2474 = vpop.xlane.xlu0 %2473
        %v2475 = vadd.f32 %v2421, %v2474
        %vm2476 = vcmask 7168
        %2477 = vst.msk [vmem:[#allocation4] sm:$0xff] %vm2476, %v2475
        %v2478 = vld [vmem:[#allocation5] sm:$0xff]
        %v2479 = vsel %vm1278, %v2470, 0
        %2481 = vmatprep.subr.mxu0 0.0
        %2482 = vmatpush1.msra.mxu0 %v1137
        %2483 = vmatprep.subr.mxu0 0.0
        %2484 = vmatpush1.msra.mxu0 0.0
        %2485 = vmatprep.subr.mxu0 0.0
        %2486 = vmatpush1.msra.mxu0 0.0
        %2487 = vmatprep.subr.mxu0 0.0
        %2488 = vmatpush1.msra.mxu0 0.0
        %2489 = vmatprep.subr.mxu0 0.0
        %2490 = vmatpush1.msra.mxu0 0.0
        %2491 = vmatprep.subr.mxu0 0.0
        %2492 = vmatpush1.msra.mxu0 0.0
        %2493 = vmatprep.subr.mxu0 0.0
        %2494 = vmatpush1.msra.mxu0 0.0
        %2495 = vmatprep.subr.mxu0 0.0
        %2496 = vmatpush1.msra.mxu0 0.0
        %2497 = vmatprep.subr.mxu0 0.0
        %2498 = vmatpush1.msra.mxu0 0.0
        %2499 = vmatprep.subr.mxu0 0.0
        %2500 = vmatpush1.msra.mxu0 0.0
        %2501 = vmatprep.subr.mxu0 0.0
        %2502 = vmatpush1.msra.mxu0 0.0
        %2503 = vmatprep.subr.mxu0 0.0
        %2504 = vmatpush1.msra.mxu0 0.0
        %2505 = vmatprep.subr.mxu0 0.0
        %2506 = vmatpush1.msra.mxu0 0.0
        %2507 = vmatprep.subr.mxu0 0.0
        %2508 = vmatpush1.msra.mxu0 0.0
        %2509 = vmatprep.subr.mxu0 0.0
        %2510 = vmatpush1.msra.mxu0 0.0
        %2511 = vmatprep.subr.mxu0 0.0
        %2512 = vmatpush1.msra.mxu0 0.0
        %2513 = vmatprep.subr.mxu0 0.0
        %2514 = vmatpush1.msra.mxu0 0.0
        %2515 = vmatprep.subr.mxu0 0.0
        %2516 = vmatpush1.msra.mxu0 0.0
        %2517 = vmatprep.subr.mxu0 0.0
        %2518 = vmatpush1.msra.mxu0 0.0
        %2519 = vmatprep.subr.mxu0 0.0
        %2520 = vmatpush1.msra.mxu0 0.0
        %2521 = vmatprep.subr.mxu0 0.0
        %2522 = vmatpush1.msra.mxu0 0.0
        %2523 = vmatprep.subr.mxu0 0.0
        %2524 = vmatpush1.msra.mxu0 0.0
        %2525 = vmatprep.subr.mxu0 0.0
        %2526 = vmatpush1.msra.mxu0 0.0
        %2527 = vmatprep.subr.mxu0 0.0
        %2528 = vmatpush1.msra.mxu0 0.0
        %2529 = vmatprep.subr.mxu0 0.0
        %2530 = vmatpush1.msra.mxu0 0.0
        %2531 = vmatprep.subr.mxu0 0.0
        %2532 = vmatpush1.msra.mxu0 0.0
        %2533 = vmatprep.subr.mxu0 0.0
        %2534 = vmatpush1.msra.mxu0 0.0
        %2535 = vmatprep.subr.mxu0 0.0
        %2536 = vmatpush1.msra.mxu0 0.0
        %2537 = vmatprep.subr.mxu0 0.0
        %2538 = vmatpush1.msra.mxu0 0.0
        %2539 = vmatprep.subr.mxu0 0.0
        %2540 = vmatpush1.msra.mxu0 0.0
        %2541 = vmatprep.subr.mxu0 0.0
        %2542 = vmatpush1.msra.mxu0 0.0
        %2543 = vmatprep.subr.mxu0 0.0
        %2544 = vmatpush1.msra.mxu0 0.0
        %2545 = vmatprep.mubr.f32.mxu0 0.0
        %2546 = vmatmul.mubr.f32.gmra.mrb[0].mxu0 %v2479
        %v2547 = vpop.f32.mrb[0].mxu0
        %v2548 = vadd.f32 0.0, %v2547
        %v2549 = vpop.f32.mrb[0].mxu0
        %2550 = vdwg.mxu0
        %v2551 = vadd.f32 %v2478, %v2548
        %2552 = vst.msk [vmem:[#allocation5] sm:$0xff] %vm1278, %v2551
        // Predicated region
        $region165: #{tpu_custom_call.1} parent=95 // pred_check
          %p2553 = pneg %p966
        $region166: #{tpu_custom_call.1} parent=95 // pred_check_branch
          %2555 = sbr.rel (%p2553) target = $region168
        $region167: #{tpu_custom_call.1} parent=95 // pred_region
          %v2556 = vld [vmem:[%s811] sm:$0xff]
          %v2557 = vld [vmem:[#allocation4] sm:$0xff]
          %2559 = vset.pattern.permute.xlu0 0
          %2560 = vperm.xlu0 %2559, %v2557
          %v2561 = vpop.permute.xlu0 %2560
          %v2563 = vmul.f32 %v2561, %v1136
          %v2564 = vadd.f32 %v1136, %v2563
          %v2565 = vld [vmem:[#allocation5] sm:$0xff]
          %v2566 = vsub.f32 %v2564, %v2565
          %2567 = vst.msk [vmem:[%s962] sm:$0xff] %vm1278, %v2566
          %v2568 = vpack.c.bf16 %v2556, %v2556
          %v2569 = vld [vmem:[#allocation28] sm:$0xf]
          %v2570 = vld [vmem:[#allocation28 + $0x4] sm:$0xf]
          %v2571 = vld [vmem:[#allocation28 + $0x8] sm:$0xf]
          %v2572 = vld [vmem:[#allocation28 + $0xc] sm:$0xf]
          %v2573 = vld [vmem:[#allocation28 + $0x10] sm:$0xf]
          %v2574 = vld [vmem:[#allocation28 + $0x14] sm:$0xf]
          %v2575 = vld [vmem:[#allocation28 + $0x18] sm:$0xf]
          %v2576 = vld [vmem:[#allocation28 + $0x1c] sm:$0xf]
          %v2577 = vld [vmem:[#allocation28 + $0x20] sm:$0xf]
          %v2578 = vld [vmem:[#allocation28 + $0x24] sm:$0xf]
          %v2579 = vld [vmem:[#allocation28 + $0x28] sm:$0xf]
          %v2580 = vld [vmem:[#allocation28 + $0x2c] sm:$0xf]
          %v2581 = vld [vmem:[#allocation28 + $0x30] sm:$0xf]
          %v2582 = vld [vmem:[#allocation28 + $0x34] sm:$0xf]
          %v2583 = vld [vmem:[#allocation28 + $0x38] sm:$0xf]
          %v2584 = vld [vmem:[#allocation28 + $0x3c] sm:$0xf]
          %v2585 = vld [vmem:[#allocation3] sm:$0xff]
          %v2586 = vpack.c.bf16 %v2585, %v2585
          %v2587 = vld [vmem:[#allocation30] sm:$0xf]
          %v2588 = vld [vmem:[#allocation30 + $0x4] sm:$0xf]
          %v2589 = vld [vmem:[#allocation30 + $0x8] sm:$0xf]
          %v2590 = vld [vmem:[#allocation30 + $0xc] sm:$0xf]
          %v2591 = vld [vmem:[#allocation30 + $0x10] sm:$0xf]
          %v2592 = vld [vmem:[#allocation30 + $0x14] sm:$0xf]
          %v2593 = vld [vmem:[#allocation30 + $0x18] sm:$0xf]
          %v2594 = vld [vmem:[#allocation30 + $0x1c] sm:$0xf]
          %v2595 = vld [vmem:[#allocation30 + $0x20] sm:$0xf]
          %v2596 = vld [vmem:[#allocation30 + $0x24] sm:$0xf]
          %v2597 = vld [vmem:[#allocation30 + $0x28] sm:$0xf]
          %v2598 = vld [vmem:[#allocation30 + $0x2c] sm:$0xf]
          %v2599 = vld [vmem:[#allocation30 + $0x30] sm:$0xf]
          %v2600 = vld [vmem:[#allocation30 + $0x34] sm:$0xf]
          %v2601 = vld [vmem:[#allocation30 + $0x38] sm:$0xf]
          %v2602 = vld [vmem:[#allocation30 + $0x3c] sm:$0xf]
          %v2619 = vunpack.c.l.b16 %v2587
          %v2620 = vunpack.c.l.b16 %v2588
          %v2621 = vunpack.c.l.b16 %v2589
          %v2622 = vunpack.c.l.b16 %v2590
          %v2623 = vunpack.c.l.b16 %v2591
          %v2624 = vunpack.c.l.b16 %v2592
          %v2625 = vunpack.c.l.b16 %v2593
          %v2626 = vunpack.c.l.b16 %v2594
          %v2627 = vunpack.c.l.b16 %v2595
          %v2628 = vunpack.c.l.b16 %v2596
          %v2629 = vunpack.c.l.b16 %v2597
          %v2630 = vunpack.c.l.b16 %v2598
          %v2631 = vunpack.c.l.b16 %v2599
          %v2632 = vunpack.c.l.b16 %v2600
          %v2633 = vunpack.c.l.b16 %v2601
          %v2634 = vunpack.c.l.b16 %v2602
          %v2635 = vpack.c.b16 %v2620, %v2619
          %v2636 = vpack.c.b16 %v2622, %v2621
          %v2637 = vpack.c.b16 %v2624, %v2623
          %v2638 = vpack.c.b16 %v2626, %v2625
          %v2639 = vpack.c.b16 %v2628, %v2627
          %v2640 = vpack.c.b16 %v2630, %v2629
          %v2641 = vpack.c.b16 %v2632, %v2631
          %v2642 = vpack.c.b16 %v2634, %v2633
          %2651 = vmatprep.subr.bf16.mxu0 0
          %2652 = vmatpush1.bf16.msra.mxu0 %v2635
          %2653 = vmatprep.subr.bf16.mxu0 0
          %2654 = vmatpush1.bf16.msra.mxu0 %v2636
          %2655 = vmatprep.subr.bf16.mxu0 0
          %2656 = vmatpush1.bf16.msra.mxu0 %v2637
          %2657 = vmatprep.subr.bf16.mxu0 0
          %2658 = vmatpush1.bf16.msra.mxu0 %v2638
          %2659 = vmatprep.subr.bf16.mxu0 0
          %2660 = vmatpush1.bf16.msra.mxu0 %v2639
          %2661 = vmatprep.subr.bf16.mxu0 0
          %2662 = vmatpush1.bf16.msra.mxu0 %v2640
          %2663 = vmatprep.subr.bf16.mxu0 0
          %2664 = vmatpush1.bf16.msra.mxu0 %v2641
          %2665 = vmatprep.subr.bf16.mxu0 0
          %2666 = vmatpush1.bf16.msra.mxu0 %v2642
          %2667 = vmatprep.subr.bf16.mxu0 0
          %2668 = vmatpush1.bf16.msra.mxu0 0
          %2669 = vmatprep.subr.bf16.mxu0 0
          %2670 = vmatpush1.bf16.msra.mxu0 0
          %2671 = vmatprep.subr.bf16.mxu0 0
          %2672 = vmatpush1.bf16.msra.mxu0 0
          %2673 = vmatprep.subr.bf16.mxu0 0
          %2674 = vmatpush1.bf16.msra.mxu0 0
          %2675 = vmatprep.subr.bf16.mxu0 0
          %2676 = vmatpush1.bf16.msra.mxu0 0
          %2677 = vmatprep.subr.bf16.mxu0 0
          %2678 = vmatpush1.bf16.msra.mxu0 0
          %2679 = vmatprep.subr.bf16.mxu0 0
          %2680 = vmatpush1.bf16.msra.mxu0 0
          %2681 = vmatprep.subr.bf16.mxu0 0
          %2682 = vmatpush1.bf16.msra.mxu0 0
          %2683 = vmatprep.mubr.bf16.mxu0 0
          %2684 = vmatmul.mubr.bf16.gmra.mrb[0].mxu0 %v2586
          %v2685 = vpop.f32.mrb[0].mxu0
          %v2686 = vadd.f32 0.0, %v2685
          %v2687 = vpop.f32.mrb[0].mxu0
          %v2688 = vpop.f32.mrb[0].mxu0
          %v2689 = vpop.f32.mrb[0].mxu0
          %2690 = vdwg.mxu0
          %v2707 = vunpack.c.l.b16 %v2569
          %v2708 = vunpack.c.l.b16 %v2570
          %v2709 = vunpack.c.l.b16 %v2571
          %v2710 = vunpack.c.l.b16 %v2572
          %v2711 = vunpack.c.l.b16 %v2573
          %v2712 = vunpack.c.l.b16 %v2574
          %v2713 = vunpack.c.l.b16 %v2575
          %v2714 = vunpack.c.l.b16 %v2576
          %v2715 = vunpack.c.l.b16 %v2577
          %v2716 = vunpack.c.l.b16 %v2578
          %v2717 = vunpack.c.l.b16 %v2579
          %v2718 = vunpack.c.l.b16 %v2580
          %v2719 = vunpack.c.l.b16 %v2581
          %v2720 = vunpack.c.l.b16 %v2582
          %v2721 = vunpack.c.l.b16 %v2583
          %v2722 = vunpack.c.l.b16 %v2584
          %v2723 = vpack.c.b16 %v2708, %v2707
          %v2724 = vpack.c.b16 %v2710, %v2709
          %v2725 = vpack.c.b16 %v2712, %v2711
          %v2726 = vpack.c.b16 %v2714, %v2713
          %v2727 = vpack.c.b16 %v2716, %v2715
          %v2728 = vpack.c.b16 %v2718, %v2717
          %v2729 = vpack.c.b16 %v2720, %v2719
          %v2730 = vpack.c.b16 %v2722, %v2721
          %2739 = vmatprep.subr.bf16.mxu0 0
          %2740 = vmatpush1.bf16.msra.mxu0 %v2723
          %2741 = vmatprep.subr.bf16.mxu0 0
          %2742 = vmatpush1.bf16.msra.mxu0 %v2724
          %2743 = vmatprep.subr.bf16.mxu0 0
          %2744 = vmatpush1.bf16.msra.mxu0 %v2725
          %2745 = vmatprep.subr.bf16.mxu0 0
          %2746 = vmatpush1.bf16.msra.mxu0 %v2726
          %2747 = vmatprep.subr.bf16.mxu0 0
          %2748 = vmatpush1.bf16.msra.mxu0 %v2727
          %2749 = vmatprep.subr.bf16.mxu0 0
          %2750 = vmatpush1.bf16.msra.mxu0 %v2728
          %2751 = vmatprep.subr.bf16.mxu0 0
          %2752 = vmatpush1.bf16.msra.mxu0 %v2729
          %2753 = vmatprep.subr.bf16.mxu0 0
          %2754 = vmatpush1.bf16.msra.mxu0 %v2730
          %2755 = vmatprep.subr.bf16.mxu0 0
          %2756 = vmatpush1.bf16.msra.mxu0 0
          %2757 = vmatprep.subr.bf16.mxu0 0
          %2758 = vmatpush1.bf16.msra.mxu0 0
          %2759 = vmatprep.subr.bf16.mxu0 0
          %2760 = vmatpush1.bf16.msra.mxu0 0
          %2761 = vmatprep.subr.bf16.mxu0 0
          %2762 = vmatpush1.bf16.msra.mxu0 0
          %2763 = vmatprep.subr.bf16.mxu0 0
          %2764 = vmatpush1.bf16.msra.mxu0 0
          %2765 = vmatprep.subr.bf16.mxu0 0
          %2766 = vmatpush1.bf16.msra.mxu0 0
          %2767 = vmatprep.subr.bf16.mxu0 0
          %2768 = vmatpush1.bf16.msra.mxu0 0
          %2769 = vmatprep.subr.bf16.mxu0 0
          %2770 = vmatpush1.bf16.msra.mxu0 0
          %2771 = vmatprep.mubr.bf16.mxu0 0
          %2772 = vmatmul.mubr.bf16.gmra.mrb[0].mxu0 %v2568
          %v2773 = vpop.f32.mrb[0].mxu0
          %v2774 = vadd.f32 %v2686, %v2773
          %v2775 = vpop.f32.mrb[0].mxu0
          %v2776 = vpop.f32.mrb[0].mxu0
          %v2777 = vpop.f32.mrb[0].mxu0
          %2778 = vdwg.mxu0
          %v2779 = vld [vmem:[#allocation31] sm:$0x1]
          %v2781 = vlaneseq
          %v2782 = vshrl.u32 %v2781, 7
          %v2783 = vsub.s32 0, %v2782
          %v2784 = vrot.slane %v2779, %v2783
          %v2786 = vadd.f32 %v2774, %v2784
          %v2787 = vmul.f32 %v2786, 0.5
          %v2788 = vtanh.pop %v2787
          %v2789 = vadd.f32 %v2788, 1.0
          %v2790 = vmul.f32 %v2787, %v2789
          %v2791 = vpack.c.bf16 %v2790, %v2790
          %v2792 = vld [vmem:[%s17] sm:$0xf]
          %v2793 = vld [vmem:[%s17 + $0x4] sm:$0xf]
          %v2794 = vld [vmem:[%s17 + $0x8] sm:$0xf]
          %v2795 = vld [vmem:[%s17 + $0xc] sm:$0xf]
          %v2796 = vld [vmem:[%s17 + $0x10] sm:$0xf]
          %v2797 = vld [vmem:[%s17 + $0x14] sm:$0xf]
          %v2798 = vld [vmem:[%s17 + $0x18] sm:$0xf]
          %v2799 = vld [vmem:[%s17 + $0x1c] sm:$0xf]
          %v2800 = vld [vmem:[%s17 + $0x20] sm:$0xf]
          %v2801 = vld [vmem:[%s17 + $0x24] sm:$0xf]
          %v2802 = vld [vmem:[%s17 + $0x28] sm:$0xf]
          %v2803 = vld [vmem:[%s17 + $0x2c] sm:$0xf]
          %v2804 = vld [vmem:[%s17 + $0x30] sm:$0xf]
          %v2805 = vld [vmem:[%s17 + $0x34] sm:$0xf]
          %v2806 = vld [vmem:[%s17 + $0x38] sm:$0xf]
          %v2807 = vld [vmem:[%s17 + $0x3c] sm:$0xf]
          %v2808 = vld [vmem:[%s18] sm:$0x1]
          %v2810 = vlaneseq
          %v2811 = vshrl.u32 %v2810, 7
          %v2812 = vsub.s32 0, %v2811
          %v2813 = vrot.slane %v2808, %v2812
          %v2831 = vunpack.c.l.b16 %v2792
          %v2832 = vunpack.c.l.b16 %v2793
          %v2833 = vunpack.c.l.b16 %v2794
          %v2834 = vunpack.c.l.b16 %v2795
          %v2835 = vunpack.c.l.b16 %v2796
          %v2836 = vunpack.c.l.b16 %v2797
          %v2837 = vunpack.c.l.b16 %v2798
          %v2838 = vunpack.c.l.b16 %v2799
          %v2839 = vunpack.c.l.b16 %v2800
          %v2840 = vunpack.c.l.b16 %v2801
          %v2841 = vunpack.c.l.b16 %v2802
          %v2842 = vunpack.c.l.b16 %v2803
          %v2843 = vunpack.c.l.b16 %v2804
          %v2844 = vunpack.c.l.b16 %v2805
          %v2845 = vunpack.c.l.b16 %v2806
          %v2846 = vunpack.c.l.b16 %v2807
          %v2847 = vpack.c.b16 %v2832, %v2831
          %v2848 = vpack.c.b16 %v2834, %v2833
          %v2849 = vpack.c.b16 %v2836, %v2835
          %v2850 = vpack.c.b16 %v2838, %v2837
          %v2851 = vpack.c.b16 %v2840, %v2839
          %v2852 = vpack.c.b16 %v2842, %v2841
          %v2853 = vpack.c.b16 %v2844, %v2843
          %v2854 = vpack.c.b16 %v2846, %v2845
          %2863 = vmatprep.subr.bf16.mxu0 0
          %2864 = vmatpush1.bf16.msra.mxu0 %v2847
          %2865 = vmatprep.subr.bf16.mxu0 0
          %2866 = vmatpush1.bf16.msra.mxu0 %v2848
          %2867 = vmatprep.subr.bf16.mxu0 0
          %2868 = vmatpush1.bf16.msra.mxu0 %v2849
          %2869 = vmatprep.subr.bf16.mxu0 0
          %2870 = vmatpush1.bf16.msra.mxu0 %v2850
          %2871 = vmatprep.subr.bf16.mxu0 0
          %2872 = vmatpush1.bf16.msra.mxu0 %v2851
          %2873 = vmatprep.subr.bf16.mxu0 0
          %2874 = vmatpush1.bf16.msra.mxu0 %v2852
          %2875 = vmatprep.subr.bf16.mxu0 0
          %2876 = vmatpush1.bf16.msra.mxu0 %v2853
          %2877 = vmatprep.subr.bf16.mxu0 0
          %2878 = vmatpush1.bf16.msra.mxu0 %v2854
          %2879 = vmatprep.subr.bf16.mxu0 0
          %2880 = vmatpush1.bf16.msra.mxu0 0
          %2881 = vmatprep.subr.bf16.mxu0 0
          %2882 = vmatpush1.bf16.msra.mxu0 0
          %2883 = vmatprep.subr.bf16.mxu0 0
          %2884 = vmatpush1.bf16.msra.mxu0 0
          %2885 = vmatprep.subr.bf16.mxu0 0
          %2886 = vmatpush1.bf16.msra.mxu0 0
          %2887 = vmatprep.subr.bf16.mxu0 0
          %2888 = vmatpush1.bf16.msra.mxu0 0
          %2889 = vmatprep.subr.bf16.mxu0 0
          %2890 = vmatpush1.bf16.msra.mxu0 0
          %2891 = vmatprep.subr.bf16.mxu0 0
          %2892 = vmatpush1.bf16.msra.mxu0 0
          %2893 = vmatprep.subr.bf16.mxu0 0
          %2894 = vmatpush1.bf16.msra.mxu0 0
          %2895 = vmatprep.mubr.bf16.mxu0 0
          %2896 = vmatmul.mubr.bf16.gmra.mrb[0].mxu0 %v2791
          %v2897 = vpop.f32.mrb[0].mxu0
          %v2898 = vadd.f32 %v2813, %v2897
          %v2899 = vpop.f32.mrb[0].mxu0
          %v2900 = vpop.f32.mrb[0].mxu0
          %v2901 = vpop.f32.mrb[0].mxu0
          %2902 = vdwg.mxu0
          %v2903 = vadd.f32 %v2898, %v2556
          %2904 = vst [vmem:[%s955] sm:$0xff] %v2903
        $region168: #{tpu_custom_call.1} parent=95 // pred_fallthru
          _
        %s2905 = sand.u32 %s511, 1
        %s2906 = scalar_lea.sflag [#allocation9], %s2905
        %s2907 = sand.u32 %s511, 1
        %s2908 = smul.addr %s2907, 8
        %s2909 = scalar_lea.vmem [#allocation33], %s2908
        %s2910 = sand.u32 %s539, 1
        %s2911 = scalar_lea.sflag [#allocation35], %s2910
        %s2912 = sand.u32 %s539, 1
        %s2913 = smul.addr %s2912, 8
        %s2914 = scalar_lea.vmem [#allocation34], %s2913
        // Predicated region
        $region169: #{tpu_custom_call.1} parent=95 // pred_check
          %p2915 = pneg %p521
        $region170: #{tpu_custom_call.1} parent=95 // pred_check_branch
          %2917 = sbr.rel (%p2915) target = $region172
        $region171: #{tpu_custom_call.1} parent=95 // pred_region
          %s2919 = ssub.s32 128, 128
          %2920 = vsyncadd %s2906, %s2919
          %s2921 = sadd.s32 %s61, %s60
          %s2922 = smul.addr %s2921, 128
          %s2923 = scalar_lea.hbm %s19, %s2922
          %s2925 = sshll.u32 %s2909, 4
          %s2926 = int_to_ptr.vmem [resolvable:$true] %s2925
          %2928 = dma.vmem_to_hbm [thread:$0]  %s2926, 128, %s2923, %s2906
        $region172: #{tpu_custom_call.1} parent=95 // pred_fallthru
          _
        // Predicated region
        $region173: #{tpu_custom_call.1} parent=95 // pred_check
          %p2929 = pneg %p549
        $region174: #{tpu_custom_call.1} parent=95 // pred_check_branch
          %2931 = sbr.rel (%p2929) target = $region176
        $region175: #{tpu_custom_call.1} parent=95 // pred_region
          %s2933 = ssub.s32 128, 128
          %2934 = vsyncadd %s2911, %s2933
          %s2935 = sadd.s32 %s61, %s60
          %s2936 = smul.addr %s2935, 128
          %s2937 = scalar_lea.hbm %s20, %s2936
          %s2939 = sshll.u32 %s2914, 4
          %s2940 = int_to_ptr.vmem [resolvable:$true] %s2939
          %2942 = dma.vmem_to_hbm [thread:$0]  %s2940, 128, %s2937, %s2911
        $region176: #{tpu_custom_call.1} parent=95 // pred_fallthru
          _
      $region96: #{tpu_custom_call.1} parent=5 // pred_fallthru
        _
      %p2943 = scmp.le.s32.totalorder 2, %s50
      // Predicated region
      $region177: #{tpu_custom_call.1} parent=5 // pred_check
        %p2944 = pneg %p2943
      $region178: #{tpu_custom_call.1} parent=5 // pred_check_branch
        %2946 = sbr.rel (%p2944) target = $region180
      $region179: #{tpu_custom_call.1} parent=5 // pred_region
        %s2947 = ssub.s32 %s50, 2
        // Predicated region
        $region181: #{tpu_custom_call.1} parent=179 // pred_check
          %p2948 = pneg %p527
        $region182: #{tpu_custom_call.1} parent=179 // pred_check_branch
          %2950 = sbr.rel (%p2948) target = $region184
        $region183: #{tpu_custom_call.1} parent=179 // pred_region
          %s2951 = sand.u32 %s512, 1
          %s2952 = scalar_lea.sflag [#allocation9], %s2951
          %s2953 = sand.u32 %s512, 1
          %s2954 = smul.addr %s2953, 8
          %s2955 = scalar_lea.vmem [#allocation33], %s2954
          %2956 = dma.done %s2952, 128
        $region184: #{tpu_custom_call.1} parent=179 // pred_fallthru
          _
        // Predicated region
        $region185: #{tpu_custom_call.1} parent=179 // pred_check
          %p2957 = pneg %p555
        $region186: #{tpu_custom_call.1} parent=179 // pred_check_branch
          %2959 = sbr.rel (%p2957) target = $region188
        $region187: #{tpu_custom_call.1} parent=179 // pred_region
          %s2960 = sand.u32 %s540, 1
          %s2961 = scalar_lea.sflag [#allocation35], %s2960
          %s2962 = sand.u32 %s540, 1
          %s2963 = smul.addr %s2962, 8
          %s2964 = scalar_lea.vmem [#allocation34], %s2963
          %2965 = dma.done %s2961, 128
        $region188: #{tpu_custom_call.1} parent=179 // pred_fallthru
          _
      $region180: #{tpu_custom_call.1} parent=5 // pred_fallthru
        _
    $region6: #{tpu_custom_call.1} parent=1 // loop_footer
      %s54 = sadd.s32 1, %s50
    $region7: #{tpu_custom_call.1} parent=1 // loop_footer_branch
      %49 = sbr.rel target = $region3
    $region8: #{tpu_custom_call.1} parent=1 // loop_exit
      _
    %2966 = vsyncpa [#allocation8], 1
    %s2967 = scalar_lea.sflag [#allocation8], 1
    %2968 = vsyncpa %s2967, 1
    %2969 = vsyncpa [#allocation11], 1
    %s2970 = scalar_lea.sflag [#allocation11], 1
    %2971 = vsyncpa %s2970, 1
    %2972 = vsyncpa [#allocation14], 1
    %s2973 = scalar_lea.sflag [#allocation14], 1
    %2974 = vsyncpa %s2973, 1
    %2975 = vsyncpa [#allocation17], 1
    %2976 = vsyncpa [#allocation20], 1
    %2977 = vsyncpa [#allocation23], 1
    %2978 = vsyncpa [#allocation26], 1
    %2979 = vsyncpa [#allocation29], 1
    %2980 = vsyncpa [#allocation32], 1
    %2981 = vsyncpa [#allocation9], 1
    %s2982 = scalar_lea.sflag [#allocation9], 1
    %2983 = vsyncpa %s2982, 1
    %2984 = vsyncpa [#allocation35], 1
    %s2985 = scalar_lea.sflag [#allocation35], 1
    %2986 = vsyncpa %s2985, 1

</llo_original>
